<compile_context>
chip_gen: v5e
topology: v5e:2x2
jax: 0.10.0
libtpu: 0.0.40
codegen_flags: <defaults>
</compile_context>

<pallas_src>
import numpy as np
import jax
import jax.numpy as jnp
from jax import lax
from jax.experimental import pallas as pl
from jax.experimental.pallas import tpu as pltpu

EPS = 1e-5
LANE = 128
VMEM_LIMIT = 32 * 1024 * 1024  # re-derive per generation / tile size if enlarged


def _round_up(x, m):
    return (x + m - 1) // m * m


# --------------------------- stage 1: conv1 + BN1 partial stats ---------------------------
def _conv1_kernel(xc_ref, xt_ref, xb_ref, w_ref, h_ref, s_ref, q_ref,
                  win_ref, p_ref):
    # xc_ref: (1, tile_h, W+2, Cin)   centre rows (input pre-padded along W)
    # xt/xb : (1, 1, W+2, Cin)        row halo (clamped index, masked at edges)
    # w_ref : (9*Cin, C1p)            im2col-folded conv1 weights
    # h_ref : (1, tile_h, W, C1p)     raw conv1 output (pre-BN)
    # s_ref/q_ref: (1, 1, 1, C1p)     per-tile sum / sum-of-squares
    i = pl.program_id(1)
    n_h = pl.num_programs(1)
    thp2, wp2, cin = win_ref.shape
    tile_h, w = thp2 - 2, wp2 - 2
    c1p = w_ref.shape[1]

    mtop = (i > 0).astype(jnp.float32)
    mbot = (i < n_h - 1).astype(jnp.float32)

    # assemble (tile_h+2, W+2, Cin) halo window; halo rows zeroed at image edges
    win_ref[0:1] = xt_ref[0] * mtop
    win_ref[1:1 + tile_h] = xc_ref[0]
    win_ref[1 + tile_h:2 + tile_h] = xb_ref[0] * mbot

    # im2col once per tile, then a single MXU contraction with K = 9*Cin
    for dh in range(3):
        for dw in range(3):
            t = dh * 3 + dw
            p_ref[:, :, t * cin:(t + 1) * cin] = win_ref[dh:dh + tile_h,
                                                         dw:dw + w, :]
    patches = p_ref[...].reshape(tile_h * w, 9 * cin)
    acc = jnp.dot(patches, w_ref[...], preferred_element_type=jnp.float32)

    h_ref[...] = acc.reshape(1, tile_h, w, c1p)
    s_ref[...] = jnp.sum(acc, axis=0, keepdims=True).reshape(1, 1, 1, c1p)
    q_ref[...] = jnp.sum(acc * acc, axis=0, keepdims=True).reshape(1, 1, 1, c1p)


# ---------------- stage 2: BN1(apply)+ReLU -> conv2 + BN2 partial stats -------------------
def _bn_relu_conv2_kernel(hc_ref, ht_ref, hb_ref, sc_ref, sh_ref, w_ref,
                          o_ref, s_ref, q_ref, win_ref, p_ref):
    i = pl.program_id(1)
    n_h = pl.num_programs(1)
    thp2, wp2, c1p = win_ref.shape
    tile_h, w = thp2 - 2, wp2 - 2
    c2p = w_ref.shape[1]

    mtop = (i > 0).astype(jnp.float32)
    mbot = (i < n_h - 1).astype(jnp.float32)
    scale = sc_ref[...]          # (1, C1p): gamma * rsqrt(var + eps), pre-folded
    shift = sh_ref[...]          # (1, C1p): beta - mean * scale

    def bn_relu(v):
        return jnp.maximum(v * scale + shift, 0.0)

    # zero only the 1-pixel left/right border; fill interior with BN1+ReLU data.
    zcol = jnp.zeros((thp2, 1, c1p), jnp.float32)
    win_ref[:, 0:1, :] = zcol
    win_ref[:, wp2 - 1:wp2, :] = zcol
    win_ref[0:1, 1:1 + w, :] = bn_relu(ht_ref[0]) * mtop          # mask AFTER BN
    win_ref[1:1 + tile_h, 1:1 + w, :] = bn_relu(hc_ref[0])
    win_ref[1 + tile_h:2 + tile_h, 1:1 + w, :] = bn_relu(hb_ref[0]) * mbot

    # im2col + single MXU contraction with K = 9*C1p (lane-aligned 128 blocks)
    for dh in range(3):
        for dw in range(3):
            t = dh * 3 + dw
            p_ref[:, :, t * c1p:(t + 1) * c1p] = win_ref[dh:dh + tile_h,
                                                         dw:dw + w, :]
    patches = p_ref[...].reshape(tile_h * w, 9 * c1p)
    acc = jnp.dot(patches, w_ref[...], preferred_element_type=jnp.float32)

    o_ref[...] = acc.reshape(1, tile_h, w, c2p)
    s_ref[...] = jnp.sum(acc, axis=0, keepdims=True).reshape(1, 1, 1, c2p)
    q_ref[...] = jnp.sum(acc * acc, axis=0, keepdims=True).reshape(1, 1, 1, c2p)


# --------------------------- stage 3: BN2(apply) + ReLU -----------------------------------
def _bn_relu_kernel(y_ref, sc_ref, sh_ref, o_ref):
    o_ref[...] = jnp.maximum(y_ref[...] * sc_ref[...] + sh_ref[...], 0.0)


def double_conv(x_nchw, w1, g1, b1, w2, g2, b2, *, tile_h=8):
    """x_nchw: (N, Cin, H, W). w*: PyTorch-layout (Cout, Cin, 3, 3), bias=False."""
    N, Cin, H, W = x_nchw.shape
    C1 = w1.shape[0]
    C2 = w2.shape[0]
    C1p = _round_up(C1, LANE)
    C2p = _round_up(C2, LANE)
    tile_h = min(tile_h, H)
    assert H % tile_h == 0, "H must be divisible by tile_h"  # TODO(synk): ragged last tile
    n_h = H // tile_h
    nhw = N * H * W
    f32 = jnp.float32

    # ---- layout glue: NCHW->NHWC, pad W by 1, fold weights for im2col, pad channels ----
    x_nhwc = jnp.transpose(x_nchw, (0, 2, 3, 1)).astype(f32)
    x_pad = jnp.pad(x_nhwc, ((0, 0), (0, 0), (1, 1), (0, 0)))        # (N, H, W+2, Cin)

    w1_k = jnp.transpose(w1, (2, 3, 1, 0)).astype(f32)               # (3,3,Cin,C1)
    w1_k = jnp.pad(w1_k, ((0, 0), (0, 0), (0, 0), (0, C1p - C1)))
    w1_mat = w1_k.reshape(9 * Cin, C1p)

    w2_k = jnp.transpose(w2, (2, 3, 1, 0)).astype(f32)               # (3,3,C1,C2)
    w2_k = jnp.pad(w2_k, ((0, 0), (0, 0), (0, C1p - C1), (0, C2p - C2)))
    w2_mat = w2_k.reshape(9 * C1p, C2p)

    g1p = jnp.pad(g1.astype(f32), (0, C1p - C1), constant_values=1.0)
    b1p = jnp.pad(b1.astype(f32), (0, C1p - C1))
    g2p = jnp.pad(g2.astype(f32), (0, C2p - C2), constant_values=1.0)
    b2p = jnp.pad(b2.astype(f32), (0, C2p - C2))

    cparams = pltpu.CompilerParams(
        dimension_semantics=("parallel", "parallel"),
        vmem_limit_bytes=VMEM_LIMIT)

    # halo-row index maps (block size 1 on the row dim => block index == row index)
    row_t = lambda n, i: (n, jnp.maximum(i * tile_h - 1, 0), 0, 0)
    row_b = lambda n, i: (n, jnp.minimum((i + 1) * tile_h, H - 1), 0, 0)

    # ------------------------------- stage 1 -------------------------------
    h1, s1, q1 = pl.pallas_call(
        _conv1_kernel,
        grid=(N, n_h),
        in_specs=[
            pl.BlockSpec((1, tile_h, W + 2, Cin), lambda n, i: (n, i, 0, 0)),
            pl.BlockSpec((1, 1, W + 2, Cin), row_t),
            pl.BlockSpec((1, 1, W + 2, Cin), row_b),
            pl.BlockSpec((9 * Cin, C1p), lambda n, i: (0, 0)),
        ],
        out_specs=[
            pl.BlockSpec((1, tile_h, W, C1p), lambda n, i: (n, i, 0, 0)),
            pl.BlockSpec((1, 1, 1, C1p), lambda n, i: (n, i, 0, 0)),
            pl.BlockSpec((1, 1, 1, C1p), lambda n, i: (n, i, 0, 0)),
        ],
        out_shape=[
            jax.ShapeDtypeStruct((N, H, W, C1p), f32),
            jax.ShapeDtypeStruct((N, n_h, 1, C1p), f32),
            jax.ShapeDtypeStruct((N, n_h, 1, C1p), f32),
        ],
        scratch_shapes=[
            pltpu.VMEM((tile_h + 2, W + 2, Cin), f32),
            pltpu.VMEM((tile_h, W, 9 * Cin), f32),
        ],
        compiler_params=cparams,
    )(x_pad, x_pad, x_pad, w1_mat)

    # fold BN1 (training-mode batch stats, single-pass sum/sumsq) into scale/shift
    mean1 = jnp.sum(s1, axis=(0, 1, 2)) / nhw
    var1 = jnp.maximum(jnp.sum(q1, axis=(0, 1, 2)) / nhw - mean1 * mean1, 0.0)
    scale1 = g1p * lax.rsqrt(var1 + EPS)
    shift1 = b1p - mean1 * scale1
    scale1 = scale1.reshape(1, C1p)
    shift1 = shift1.reshape(1, C1p)

    # ------------------------------- stage 2 -------------------------------
    h2, s2, q2 = pl.pallas_call(
        _bn_relu_conv2_kernel,
        grid=(N, n_h),
        in_specs=[
            pl.BlockSpec((1, tile_h, W, C1p), lambda n, i: (n, i, 0, 0)),
            pl.BlockSpec((1, 1, W, C1p), row_t),
            pl.BlockSpec((1, 1, W, C1p), row_b),
            pl.BlockSpec((1, C1p), lambda n, i: (0, 0)),
            pl.BlockSpec((1, C1p), lambda n, i: (0, 0)),
            pl.BlockSpec((9 * C1p, C2p), lambda n, i: (0, 0)),
        ],
        out_specs=[
            pl.BlockSpec((1, tile_h, W, C2p), lambda n, i: (n, i, 0, 0)),
            pl.BlockSpec((1, 1, 1, C2p), lambda n, i: (n, i, 0, 0)),
            pl.BlockSpec((1, 1, 1, C2p), lambda n, i: (n, i, 0, 0)),
        ],
        out_shape=[
            jax.ShapeDtypeStruct((N, H, W, C2p), f32),
            jax.ShapeDtypeStruct((N, n_h, 1, C2p), f32),
            jax.ShapeDtypeStruct((N, n_h, 1, C2p), f32),
        ],
        scratch_shapes=[
            pltpu.VMEM((tile_h + 2, W + 2, C1p), f32),
            pltpu.VMEM((tile_h, W, 9 * C1p), f32),
        ],
        compiler_params=cparams,
    )(h1, h1, h1, scale1, shift1, w2_mat)

    mean2 = jnp.sum(s2, axis=(0, 1, 2)) / nhw
    var2 = jnp.maximum(jnp.sum(q2, axis=(0, 1, 2)) / nhw - mean2 * mean2, 0.0)
    scale2 = g2p * lax.rsqrt(var2 + EPS)
    shift2 = b2p - mean2 * scale2
    scale2 = scale2.reshape(1, C2p)
    shift2 = shift2.reshape(1, C2p)

    # ------------------------------- stage 3 -------------------------------
    RB = tile_h * W
    h2_flat = h2.reshape(nhw, C2p)
    y = pl.pallas_call(
        _bn_relu_kernel,
        grid=(nhw // RB,),
        in_specs=[
            pl.BlockSpec((RB, C2p), lambda i: (i, 0)),
            pl.BlockSpec((1, C2p), lambda i: (0, 0)),
            pl.BlockSpec((1, C2p), lambda i: (0, 0)),
        ],
        out_specs=pl.BlockSpec((RB, C2p), lambda i: (i, 0)),
        out_shape=jax.ShapeDtypeStruct((nhw, C2p), f32),
        compiler_params=pltpu.CompilerParams(
            dimension_semantics=("parallel",),
            vmem_limit_bytes=VMEM_LIMIT),
    )(h2_flat, scale2, shift2)

    out_nhwc = y.reshape(N, H, W, C2p)[..., :C2]
    return jnp.transpose(out_nhwc, (0, 3, 1, 2))  # back to NCHW


# -------------------- pure-JAX reference (for verification) --------------------
def _ref_double_conv(x, w1, g1, b1, w2, g2, b2):
    def conv(x, w):
        return lax.conv_general_dilated(
            x, w, window_strides=(1, 1), padding=((1, 1), (1, 1)),
            dimension_numbers=("NCHW", "OIHW", "NCHW"))

    def bn_relu(y, g, b):
        mean = jnp.mean(y, axis=(0, 2, 3), keepdims=True)
        var = jnp.mean((y - mean) ** 2, axis=(0, 2, 3), keepdims=True)
        y = (y - mean) * lax.rsqrt(var + EPS)
        y = y * g.reshape(1, -1, 1, 1) + b.reshape(1, -1, 1, 1)
        return jnp.maximum(y, 0.0)

    y = bn_relu(conv(x, w1), g1, b1)
    return bn_relu(conv(y, w2), g2, b2)


if __name__ == "__main__":
    N, Cin, Cout, H, W = 2, 4, 8, 16, 16

    key = jax.random.PRNGKey(0)
    k_x, k_w1, k_w2, k_g1, k_b1, k_g2, k_b2 = jax.random.split(key, 7)

    x = jax.random.normal(k_x, (N, Cin, H, W), jnp.float32)
    # Conv2d weights (PyTorch layout: Cout, Cin, kh, kw), bias=False.
    w1 = jax.random.normal(k_w1, (Cout, Cin, 3, 3), jnp.float32) * 0.2
    w2 = jax.random.normal(k_w2, (Cout, Cout, 3, 3), jnp.float32) * 0.2
    # BatchNorm affine params (randomized so the affine path is exercised).
    g1 = 1.0 + 0.1 * jax.random.normal(k_g1, (Cout,), jnp.float32)
    b1 = 0.1 * jax.random.normal(k_b1, (Cout,), jnp.float32)
    g2 = 1.0 + 0.1 * jax.random.normal(k_g2, (Cout,), jnp.float32)
    b2 = 0.1 * jax.random.normal(k_b2, (Cout,), jnp.float32)

    out = jax.jit(double_conv)(x, w1, g1, b1, w2, g2, b2)
    out = jax.block_until_ready(out)

    ref = _ref_double_conv(x, w1, g1, b1, w2, g2, b2)
    np.testing.assert_allclose(np.asarray(out), np.asarray(ref),
                               rtol=1e-4, atol=1e-4)

    print("KERNEL_OK")
</pallas_src>

<mosaic_0001>
module attributes {stable_mosaic.version = 11 : i64} {
  func.func @_conv1_kernel(%arg0: i32, %arg1: i32, %arg2: memref<1x8x18x4xf32, #tpu.memory_space<vmem>>, %arg3: memref<1x1x18x4xf32, #tpu.memory_space<vmem>>, %arg4: memref<1x1x18x4xf32, #tpu.memory_space<vmem>>, %arg5: memref<36x128xf32, #tpu.memory_space<vmem>>, %arg6: memref<1x8x16x128xf32, #tpu.memory_space<vmem>>, %arg7: memref<1x1x1x128xf32, #tpu.memory_space<vmem>>, %arg8: memref<1x1x1x128xf32, #tpu.memory_space<vmem>>, %arg9: memref<10x18x4xf32, #tpu.memory_space<vmem>>, %arg10: memref<8x16x36xf32, #tpu.memory_space<vmem>>) attributes {dimension_semantics = [#tpu.dimension_semantics<parallel>, #tpu.dimension_semantics<parallel>], iteration_bounds = array<i64: 2, 2>, scalar_prefetch = 0 : i64, scratch_operands = 2 : i64, tpu.core_type = #tpu.core_type<tc>, window_params = [{transform_indices = @transform_0, window_bounds = array<i64: 1, 8, 18, 4>}, {transform_indices = @transform_1, window_bounds = array<i64: 1, 1, 18, 4>}, {transform_indices = @transform_2, window_bounds = array<i64: 1, 1, 18, 4>}, {pipeline_mode = #tpu.pipeline_mode<synchronous>, transform_indices = @transform_3, window_bounds = array<i64: 36, 128>}, {transform_indices = @transform_4, window_bounds = array<i64: 1, 8, 16, 128>}, {transform_indices = @transform_5, window_bounds = array<i64: 1, 1, 1, 128>}, {transform_indices = @transform_6, window_bounds = array<i64: 1, 1, 1, 128>}]} {
    %c0_i32 = arith.constant 0 : i32
    %0 = arith.cmpi sgt, %arg1, %c0_i32 : i32
    %1 = arith.extui %0 : i1 to i32
    %2 = arith.sitofp %1 : i32 to f32
    %c1_i32 = arith.constant 1 : i32
    %3 = arith.cmpi slt, %arg1, %c1_i32 : i32
    %4 = arith.extui %3 : i1 to i32
    %5 = arith.sitofp %4 : i32 to f32
    %c0 = arith.constant 0 : index
    %c0_0 = arith.constant 0 : index
    %c0_1 = arith.constant 0 : index
    %c0_2 = arith.constant 0 : index
    %6 = vector.load %arg3[%c0, %c0_0, %c0_1, %c0_2] : memref<1x1x18x4xf32, #tpu.memory_space<vmem>>, vector<1x1x18x4xf32>
    %7 = vector.shape_cast %6 : vector<1x1x18x4xf32> to vector<1x18x4xf32>
    %8 = vector.broadcast %2 : f32 to vector<1x18x4xf32>
    %9 = arith.mulf %7, %8 : vector<1x18x4xf32>
    %c0_3 = arith.constant 0 : index
    %c0_4 = arith.constant 0 : index
    %c0_5 = arith.constant 0 : index
    %10 = vector.load %arg9[%c0_3, %c0_4, %c0_5] : memref<10x18x4xf32, #tpu.memory_space<vmem>>, vector<1x18x4xf32>
    tpu.vector_store %arg9[%c0_3, %c0_4, %c0_5], %9 {strides = array<i32>} : memref<10x18x4xf32, #tpu.memory_space<vmem>>, vector<1x18x4xf32>,
    %c0_6 = arith.constant 0 : index
    %c0_7 = arith.constant 0 : index
    %c0_8 = arith.constant 0 : index
    %c0_9 = arith.constant 0 : index
    %11 = vector.load %arg2[%c0_6, %c0_7, %c0_8, %c0_9] : memref<1x8x18x4xf32, #tpu.memory_space<vmem>>, vector<1x8x18x4xf32>
    %12 = vector.shape_cast %11 : vector<1x8x18x4xf32> to vector<8x18x4xf32>
    %c1 = arith.constant 1 : index
    %c0_10 = arith.constant 0 : index
    %c0_11 = arith.constant 0 : index
    %13 = vector.load %arg9[%c1, %c0_10, %c0_11] : memref<10x18x4xf32, #tpu.memory_space<vmem>>, vector<8x18x4xf32>
    tpu.vector_store %arg9[%c1, %c0_10, %c0_11], %12 {strides = array<i32>} : memref<10x18x4xf32, #tpu.memory_space<vmem>>, vector<8x18x4xf32>,
    %c0_12 = arith.constant 0 : index
    %c0_13 = arith.constant 0 : index
    %c0_14 = arith.constant 0 : index
    %c0_15 = arith.constant 0 : index
    %14 = vector.load %arg4[%c0_12, %c0_13, %c0_14, %c0_15] : memref<1x1x18x4xf32, #tpu.memory_space<vmem>>, vector<1x1x18x4xf32>
    %15 = vector.shape_cast %14 : vector<1x1x18x4xf32> to vector<1x18x4xf32>
    %16 = vector.broadcast %5 : f32 to vector<1x18x4xf32>
    %17 = arith.mulf %15, %16 : vector<1x18x4xf32>
    %c9 = arith.constant 9 : index
    %c0_16 = arith.constant 0 : index
    %c0_17 = arith.constant 0 : index
    %18 = vector.load %arg9[%c9, %c0_16, %c0_17] : memref<10x18x4xf32, #tpu.memory_space<vmem>>, vector<1x18x4xf32>
    tpu.vector_store %arg9[%c9, %c0_16, %c0_17], %17 {strides = array<i32>} : memref<10x18x4xf32, #tpu.memory_space<vmem>>, vector<1x18x4xf32>,
    %c0_18 = arith.constant 0 : index
    %c0_19 = arith.constant 0 : index
    %c0_20 = arith.constant 0 : index
    %19 = vector.load %arg9[%c0_18, %c0_19, %c0_20] : memref<10x18x4xf32, #tpu.memory_space<vmem>>, vector<8x16x4xf32>
    %c0_21 = arith.constant 0 : index
    %c0_22 = arith.constant 0 : index
    %c0_23 = arith.constant 0 : index
    %20 = vector.load %arg10[%c0_21, %c0_22, %c0_23] : memref<8x16x36xf32, #tpu.memory_space<vmem>>, vector<8x16x4xf32>
    tpu.vector_store %arg10[%c0_21, %c0_22, %c0_23], %19 {strides = array<i32>} : memref<8x16x36xf32, #tpu.memory_space<vmem>>, vector<8x16x4xf32>,
    %c0_24 = arith.constant 0 : index
    %c1_25 = arith.constant 1 : index
    %c0_26 = arith.constant 0 : index
    %21 = vector.load %arg9[%c0_24, %c1_25, %c0_26] : memref<10x18x4xf32, #tpu.memory_space<vmem>>, vector<8x16x4xf32>
    %c0_27 = arith.constant 0 : index
    %c0_28 = arith.constant 0 : index
    %c4 = arith.constant 4 : index
    %22 = vector.load %arg10[%c0_27, %c0_28, %c4] : memref<8x16x36xf32, #tpu.memory_space<vmem>>, vector<8x16x4xf32>
    tpu.vector_store %arg10[%c0_27, %c0_28, %c4], %21 {strides = array<i32>} : memref<8x16x36xf32, #tpu.memory_space<vmem>>, vector<8x16x4xf32>,
    %c0_29 = arith.constant 0 : index
    %c2 = arith.constant 2 : index
    %c0_30 = arith.constant 0 : index
    %23 = vector.load %arg9[%c0_29, %c2, %c0_30] : memref<10x18x4xf32, #tpu.memory_space<vmem>>, vector<8x16x4xf32>
    %c0_31 = arith.constant 0 : index
    %c0_32 = arith.constant 0 : index
    %c8 = arith.constant 8 : index
    %24 = vector.load %arg10[%c0_31, %c0_32, %c8] : memref<8x16x36xf32, #tpu.memory_space<vmem>>, vector<8x16x4xf32>
    tpu.vector_store %arg10[%c0_31, %c0_32, %c8], %23 {strides = array<i32>} : memref<8x16x36xf32, #tpu.memory_space<vmem>>, vector<8x16x4xf32>,
    %c1_33 = arith.constant 1 : index
    %c0_34 = arith.constant 0 : index
    %c0_35 = arith.constant 0 : index
    %25 = vector.load %arg9[%c1_33, %c0_34, %c0_35] : memref<10x18x4xf32, #tpu.memory_space<vmem>>, vector<8x16x4xf32>
    %c0_36 = arith.constant 0 : index
    %c0_37 = arith.constant 0 : index
    %c12 = arith.constant 12 : index
    %26 = vector.load %arg10[%c0_36, %c0_37, %c12] : memref<8x16x36xf32, #tpu.memory_space<vmem>>, vector<8x16x4xf32>
    tpu.vector_store %arg10[%c0_36, %c0_37, %c12], %25 {strides = array<i32>} : memref<8x16x36xf32, #tpu.memory_space<vmem>>, vector<8x16x4xf32>,
    %c1_38 = arith.constant 1 : index
    %c1_39 = arith.constant 1 : index
    %c0_40 = arith.constant 0 : index
    %27 = vector.load %arg9[%c1_38, %c1_39, %c0_40] : memref<10x18x4xf32, #tpu.memory_space<vmem>>, vector<8x16x4xf32>
    %c0_41 = arith.constant 0 : index
    %c0_42 = arith.constant 0 : index
    %c16 = arith.constant 16 : index
    %28 = vector.load %arg10[%c0_41, %c0_42, %c16] : memref<8x16x36xf32, #tpu.memory_space<vmem>>, vector<8x16x4xf32>
    tpu.vector_store %arg10[%c0_41, %c0_42, %c16], %27 {strides = array<i32>} : memref<8x16x36xf32, #tpu.memory_space<vmem>>, vector<8x16x4xf32>,
    %c1_43 = arith.constant 1 : index
    %c2_44 = arith.constant 2 : index
    %c0_45 = arith.constant 0 : index
    %29 = vector.load %arg9[%c1_43, %c2_44, %c0_45] : memref<10x18x4xf32, #tpu.memory_space<vmem>>, vector<8x16x4xf32>
    %c0_46 = arith.constant 0 : index
    %c0_47 = arith.constant 0 : index
    %c20 = arith.constant 20 : index
    %30 = vector.load %arg10[%c0_46, %c0_47, %c20] : memref<8x16x36xf32, #tpu.memory_space<vmem>>, vector<8x16x4xf32>
    tpu.vector_store %arg10[%c0_46, %c0_47, %c20], %29 {strides = array<i32>} : memref<8x16x36xf32, #tpu.memory_space<vmem>>, vector<8x16x4xf32>,
    %c2_48 = arith.constant 2 : index
    %c0_49 = arith.constant 0 : index
    %c0_50 = arith.constant 0 : index
    %31 = vector.load %arg9[%c2_48, %c0_49, %c0_50] : memref<10x18x4xf32, #tpu.memory_space<vmem>>, vector<8x16x4xf32>
    %c0_51 = arith.constant 0 : index
    %c0_52 = arith.constant 0 : index
    %c24 = arith.constant 24 : index
    %32 = vector.load %arg10[%c0_51, %c0_52, %c24] : memref<8x16x36xf32, #tpu.memory_space<vmem>>, vector<8x16x4xf32>
    tpu.vector_store %arg10[%c0_51, %c0_52, %c24], %31 {strides = array<i32>} : memref<8x16x36xf32, #tpu.memory_space<vmem>>, vector<8x16x4xf32>,
    %c2_53 = arith.constant 2 : index
    %c1_54 = arith.constant 1 : index
    %c0_55 = arith.constant 0 : index
    %33 = vector.load %arg9[%c2_53, %c1_54, %c0_55] : memref<10x18x4xf32, #tpu.memory_space<vmem>>, vector<8x16x4xf32>
    %c0_56 = arith.constant 0 : index
    %c0_57 = arith.constant 0 : index
    %c28 = arith.constant 28 : index
    %34 = vector.load %arg10[%c0_56, %c0_57, %c28] : memref<8x16x36xf32, #tpu.memory_space<vmem>>, vector<8x16x4xf32>
    tpu.vector_store %arg10[%c0_56, %c0_57, %c28], %33 {strides = array<i32>} : memref<8x16x36xf32, #tpu.memory_space<vmem>>, vector<8x16x4xf32>,
    %c2_58 = arith.constant 2 : index
    %c2_59 = arith.constant 2 : index
    %c0_60 = arith.constant 0 : index
    %35 = vector.load %arg9[%c2_58, %c2_59, %c0_60] : memref<10x18x4xf32, #tpu.memory_space<vmem>>, vector<8x16x4xf32>
    %c0_61 = arith.constant 0 : index
    %c0_62 = arith.constant 0 : index
    %c32 = arith.constant 32 : index
    %36 = vector.load %arg10[%c0_61, %c0_62, %c32] : memref<8x16x36xf32, #tpu.memory_space<vmem>>, vector<8x16x4xf32>
    tpu.vector_store %arg10[%c0_61, %c0_62, %c32], %35 {strides = array<i32>} : memref<8x16x36xf32, #tpu.memory_space<vmem>>, vector<8x16x4xf32>,
    %c0_63 = arith.constant 0 : index
    %c0_64 = arith.constant 0 : index
    %c0_65 = arith.constant 0 : index
    %37 = vector.load %arg10[%c0_63, %c0_64, %c0_65] : memref<8x16x36xf32, #tpu.memory_space<vmem>>, vector<8x16x36xf32>
    %38 = vector.shape_cast %37 : vector<8x16x36xf32> to vector<128x36xf32>
    %c0_66 = arith.constant 0 : index
    %c0_67 = arith.constant 0 : index
    %39 = vector.load %arg5[%c0_66, %c0_67] : memref<36x128xf32, #tpu.memory_space<vmem>>, vector<36x128xf32>
    %cst = arith.constant dense<0.000000e+00> : vector<128x128xf32>
    %40 = tpu.matmul %38, %39, %cst {dimension_numbers = #tpu.dot_dimension_numbers<[1], [0], [0], [1], [0, 0, 1, 1], [], []>} : vector<128x36xf32>, vector<36x128xf32>, vector<128x128xf32> -> vector<128x128xf32>
    %41 = vector.shape_cast %40 : vector<128x128xf32> to vector<1x8x16x128xf32>
    %c0_68 = arith.constant 0 : index
    %c0_69 = arith.constant 0 : index
    %c0_70 = arith.constant 0 : index
    %c0_71 = arith.constant 0 : index
    %42 = vector.load %arg6[%c0_68, %c0_69, %c0_70, %c0_71] : memref<1x8x16x128xf32, #tpu.memory_space<vmem>>, vector<1x8x16x128xf32>
    tpu.vector_store %arg6[%c0_68, %c0_69, %c0_70, %c0_71], %41 {strides = array<i32>} : memref<1x8x16x128xf32, #tpu.memory_space<vmem>>, vector<1x8x16x128xf32>,
    %cst_72 = arith.constant dense<0.000000e+00> : vector<128xf32>
    %43 = vector.multi_reduction <add>, %40, %cst_72 [0] : vector<128x128xf32> to vector<128xf32>
    %44 = vector.shape_cast %43 : vector<128xf32> to vector<1x128xf32>
    %45 = vector.shape_cast %44 : vector<1x128xf32> to vector<1x1x1x128xf32>
    %c0_73 = arith.constant 0 : index
    %c0_74 = arith.constant 0 : index
    %c0_75 = arith.constant 0 : index
    %c0_76 = arith.constant 0 : index
    %46 = vector.load %arg7[%c0_73, %c0_74, %c0_75, %c0_76] : memref<1x1x1x128xf32, #tpu.memory_space<vmem>>, vector<1x1x1x128xf32>
    tpu.vector_store %arg7[%c0_73, %c0_74, %c0_75, %c0_76], %45 {strides = array<i32>} : memref<1x1x1x128xf32, #tpu.memory_space<vmem>>, vector<1x1x1x128xf32>,
    %47 = arith.mulf %40, %40 : vector<128x128xf32>
    %cst_77 = arith.constant dense<0.000000e+00> : vector<128xf32>
    %48 = vector.multi_reduction <add>, %47, %cst_77 [0] : vector<128x128xf32> to vector<128xf32>
    %49 = vector.shape_cast %48 : vector<128xf32> to vector<1x128xf32>
    %50 = vector.shape_cast %49 : vector<1x128xf32> to vector<1x1x1x128xf32>
    %c0_78 = arith.constant 0 : index
    %c0_79 = arith.constant 0 : index
    %c0_80 = arith.constant 0 : index
    %c0_81 = arith.constant 0 : index
    %51 = vector.load %arg8[%c0_78, %c0_79, %c0_80, %c0_81] : memref<1x1x1x128xf32, #tpu.memory_space<vmem>>, vector<1x1x1x128xf32>
    tpu.vector_store %arg8[%c0_78, %c0_79, %c0_80, %c0_81], %50 {strides = array<i32>} : memref<1x1x1x128xf32, #tpu.memory_space<vmem>>, vector<1x1x1x128xf32>,
    return
  }
  func.func @transform_0(%arg0: i32, %arg1: i32) -> (i32, i32, i32, i32) {
    %c0_i32 = arith.constant 0 : i32
    %c0_i32_0 = arith.constant 0 : i32
    %c0_i32_1 = arith.constant 0 : i32
    return %arg0, %arg1, %c0_i32, %c0_i32_0 : i32, i32, i32, i32
  }
  func.func @transform_1(%arg0: i32, %arg1: i32) -> (i32, i32, i32, i32) {
    %c8_i32 = arith.constant 8 : i32
    %0 = arith.muli %arg1, %c8_i32 : i32
    %c1_i32 = arith.constant 1 : i32
    %1 = arith.subi %0, %c1_i32 : i32
    %c0_i32 = arith.constant 0 : i32
    %2 = arith.maxsi %1, %c0_i32 : i32
    %c0_i32_0 = arith.constant 0 : i32
    %c0_i32_1 = arith.constant 0 : i32
    %c0_i32_2 = arith.constant 0 : i32
    return %arg0, %2, %c0_i32_0, %c0_i32_1 : i32, i32, i32, i32
  }
  func.func @transform_2(%arg0: i32, %arg1: i32) -> (i32, i32, i32, i32) {
    %c1_i32 = arith.constant 1 : i32
    %0 = arith.addi %arg1, %c1_i32 : i32
    %c8_i32 = arith.constant 8 : i32
    %1 = arith.muli %0, %c8_i32 : i32
    %c15_i32 = arith.constant 15 : i32
    %2 = arith.minsi %1, %c15_i32 : i32
    %c0_i32 = arith.constant 0 : i32
    %c0_i32_0 = arith.constant 0 : i32
    %c0_i32_1 = arith.constant 0 : i32
    return %arg0, %2, %c0_i32, %c0_i32_0 : i32, i32, i32, i32
  }
  func.func @transform_3(%arg0: i32, %arg1: i32) -> (i32, i32) {
    %c0_i32 = arith.constant 0 : i32
    %c0_i32_0 = arith.constant 0 : i32
    %c0_i32_1 = arith.constant 0 : i32
    return %c0_i32, %c0_i32_0 : i32, i32
  }
  func.func @transform_4(%arg0: i32, %arg1: i32) -> (i32, i32, i32, i32) {
    %c0_i32 = arith.constant 0 : i32
    %c0_i32_0 = arith.constant 0 : i32
    %c0_i32_1 = arith.constant 0 : i32
    return %arg0, %arg1, %c0_i32, %c0_i32_0 : i32, i32, i32, i32
  }
  func.func @transform_5(%arg0: i32, %arg1: i32) -> (i32, i32, i32, i32) {
    %c0_i32 = arith.constant 0 : i32
    %c0_i32_0 = arith.constant 0 : i32
    %c0_i32_1 = arith.constant 0 : i32
    return %arg0, %arg1, %c0_i32, %c0_i32_0 : i32, i32, i32, i32
  }
  func.func @transform_6(%arg0: i32, %arg1: i32) -> (i32, i32, i32, i32) {
    %c0_i32 = arith.constant 0 : i32
    %c0_i32_0 = arith.constant 0 : i32
    %c0_i32_1 = arith.constant 0 : i32
    return %arg0, %arg1, %c0_i32, %c0_i32_0 : i32, i32, i32, i32
  }
}

module attributes {stable_mosaic.version = 11 : i64} {
  func.func @_bn_relu_conv2_kernel(%arg0: i32, %arg1: i32, %arg2: memref<1x8x16x128xf32, #tpu.memory_space<vmem>>, %arg3: memref<1x1x16x128xf32, #tpu.memory_space<vmem>>, %arg4: memref<1x1x16x128xf32, #tpu.memory_space<vmem>>, %arg5: memref<1x128xf32, #tpu.memory_space<vmem>>, %arg6: memref<1x128xf32, #tpu.memory_space<vmem>>, %arg7: memref<1152x128xf32, #tpu.memory_space<vmem>>, %arg8: memref<1x8x16x128xf32, #tpu.memory_space<vmem>>, %arg9: memref<1x1x1x128xf32, #tpu.memory_space<vmem>>, %arg10: memref<1x1x1x128xf32, #tpu.memory_space<vmem>>, %arg11: memref<10x18x128xf32, #tpu.memory_space<vmem>>, %arg12: memref<8x16x1152xf32, #tpu.memory_space<vmem>>) attributes {dimension_semantics = [#tpu.dimension_semantics<parallel>, #tpu.dimension_semantics<parallel>], iteration_bounds = array<i64: 2, 2>, scalar_prefetch = 0 : i64, scratch_operands = 2 : i64, tpu.core_type = #tpu.core_type<tc>, window_params = [{transform_indices = @transform_0, window_bounds = array<i64: 1, 8, 16, 128>}, {transform_indices = @transform_1, window_bounds = array<i64: 1, 1, 16, 128>}, {transform_indices = @transform_2, window_bounds = array<i64: 1, 1, 16, 128>}, {pipeline_mode = #tpu.pipeline_mode<synchronous>, transform_indices = @transform_3, window_bounds = array<i64: 1, 128>}, {pipeline_mode = #tpu.pipeline_mode<synchronous>, transform_indices = @transform_4, window_bounds = array<i64: 1, 128>}, {pipeline_mode = #tpu.pipeline_mode<synchronous>, transform_indices = @transform_5, window_bounds = array<i64: 1152, 128>}, {transform_indices = @transform_6, window_bounds = array<i64: 1, 8, 16, 128>}, {transform_indices = @transform_7, window_bounds = array<i64: 1, 1, 1, 128>}, {transform_indices = @transform_8, window_bounds = array<i64: 1, 1, 1, 128>}]} {
    %c0_i32 = arith.constant 0 : i32
    %0 = arith.cmpi sgt, %arg1, %c0_i32 : i32
    %1 = arith.extui %0 : i1 to i32
    %2 = arith.sitofp %1 : i32 to f32
    %c1_i32 = arith.constant 1 : i32
    %3 = arith.cmpi slt, %arg1, %c1_i32 : i32
    %4 = arith.extui %3 : i1 to i32
    %5 = arith.sitofp %4 : i32 to f32
    %c0 = arith.constant 0 : index
    %c0_0 = arith.constant 0 : index
    %6 = vector.load %arg5[%c0, %c0_0] : memref<1x128xf32, #tpu.memory_space<vmem>>, vector<1x128xf32>
    %c0_1 = arith.constant 0 : index
    %c0_2 = arith.constant 0 : index
    %7 = vector.load %arg6[%c0_1, %c0_2] : memref<1x128xf32, #tpu.memory_space<vmem>>, vector<1x128xf32>
    %cst = arith.constant 0.000000e+00 : f32
    %8 = vector.broadcast %cst : f32 to vector<10x1x128xf32>
    %c0_3 = arith.constant 0 : index
    %c0_4 = arith.constant 0 : index
    %c0_5 = arith.constant 0 : index
    %9 = vector.load %arg11[%c0_3, %c0_4, %c0_5] : memref<10x18x128xf32, #tpu.memory_space<vmem>>, vector<10x1x128xf32>
    tpu.vector_store %arg11[%c0_3, %c0_4, %c0_5], %8 {strides = array<i32>} : memref<10x18x128xf32, #tpu.memory_space<vmem>>, vector<10x1x128xf32>,
    %c0_6 = arith.constant 0 : index
    %c17 = arith.constant 17 : index
    %c0_7 = arith.constant 0 : index
    %10 = vector.load %arg11[%c0_6, %c17, %c0_7] : memref<10x18x128xf32, #tpu.memory_space<vmem>>, vector<10x1x128xf32>
    tpu.vector_store %arg11[%c0_6, %c17, %c0_7], %8 {strides = array<i32>} : memref<10x18x128xf32, #tpu.memory_space<vmem>>, vector<10x1x128xf32>,
    %c0_8 = arith.constant 0 : index
    %c0_9 = arith.constant 0 : index
    %c0_10 = arith.constant 0 : index
    %c0_11 = arith.constant 0 : index
    %11 = vector.load %arg3[%c0_8, %c0_9, %c0_10, %c0_11] : memref<1x1x16x128xf32, #tpu.memory_space<vmem>>, vector<1x1x16x128xf32>
    %12 = vector.shape_cast %11 : vector<1x1x16x128xf32> to vector<1x16x128xf32>
    %13 = vector.shape_cast %6 : vector<1x128xf32> to vector<1x1x128xf32>
    %14 = vector.broadcast %13 : vector<1x1x128xf32> to vector<1x16x128xf32>
    %15 = arith.mulf %12, %14 : vector<1x16x128xf32>
    %16 = vector.shape_cast %7 : vector<1x128xf32> to vector<1x1x128xf32>
    %17 = vector.broadcast %16 : vector<1x1x128xf32> to vector<1x16x128xf32>
    %18 = arith.addf %15, %17 : vector<1x16x128xf32>
    %cst_12 = arith.constant 0.000000e+00 : f32
    %19 = vector.broadcast %cst_12 : f32 to vector<1x16x128xf32>
    %20 = arith.maximumf %18, %19 : vector<1x16x128xf32>
    %21 = vector.broadcast %2 : f32 to vector<1x16x128xf32>
    %22 = arith.mulf %20, %21 : vector<1x16x128xf32>
    %c0_13 = arith.constant 0 : index
    %c1 = arith.constant 1 : index
    %c0_14 = arith.constant 0 : index
    %23 = vector.load %arg11[%c0_13, %c1, %c0_14] : memref<10x18x128xf32, #tpu.memory_space<vmem>>, vector<1x16x128xf32>
    tpu.vector_store %arg11[%c0_13, %c1, %c0_14], %22 {strides = array<i32>} : memref<10x18x128xf32, #tpu.memory_space<vmem>>, vector<1x16x128xf32>,
    %c0_15 = arith.constant 0 : index
    %c0_16 = arith.constant 0 : index
    %c0_17 = arith.constant 0 : index
    %c0_18 = arith.constant 0 : index
    %24 = vector.load %arg2[%c0_15, %c0_16, %c0_17, %c0_18] : memref<1x8x16x128xf32, #tpu.memory_space<vmem>>, vector<1x8x16x128xf32>
    %25 = vector.shape_cast %24 : vector<1x8x16x128xf32> to vector<8x16x128xf32>
    %26 = vector.shape_cast %6 : vector<1x128xf32> to vector<1x1x128xf32>
    %27 = vector.broadcast %26 : vector<1x1x128xf32> to vector<8x16x128xf32>
    %28 = arith.mulf %25, %27 : vector<8x16x128xf32>
    %29 = vector.shape_cast %7 : vector<1x128xf32> to vector<1x1x128xf32>
    %30 = vector.broadcast %29 : vector<1x1x128xf32> to vector<8x16x128xf32>
    %31 = arith.addf %28, %30 : vector<8x16x128xf32>
    %cst_19 = arith.constant 0.000000e+00 : f32
    %32 = vector.broadcast %cst_19 : f32 to vector<8x16x128xf32>
    %33 = arith.maximumf %31, %32 : vector<8x16x128xf32>
    %c1_20 = arith.constant 1 : index
    %c1_21 = arith.constant 1 : index
    %c0_22 = arith.constant 0 : index
    %34 = vector.load %arg11[%c1_20, %c1_21, %c0_22] : memref<10x18x128xf32, #tpu.memory_space<vmem>>, vector<8x16x128xf32>
    tpu.vector_store %arg11[%c1_20, %c1_21, %c0_22], %33 {strides = array<i32>} : memref<10x18x128xf32, #tpu.memory_space<vmem>>, vector<8x16x128xf32>,
    %c0_23 = arith.constant 0 : index
    %c0_24 = arith.constant 0 : index
    %c0_25 = arith.constant 0 : index
    %c0_26 = arith.constant 0 : index
    %35 = vector.load %arg4[%c0_23, %c0_24, %c0_25, %c0_26] : memref<1x1x16x128xf32, #tpu.memory_space<vmem>>, vector<1x1x16x128xf32>
    %36 = vector.shape_cast %35 : vector<1x1x16x128xf32> to vector<1x16x128xf32>
    %37 = vector.shape_cast %6 : vector<1x128xf32> to vector<1x1x128xf32>
    %38 = vector.broadcast %37 : vector<1x1x128xf32> to vector<1x16x128xf32>
    %39 = arith.mulf %36, %38 : vector<1x16x128xf32>
    %40 = vector.shape_cast %7 : vector<1x128xf32> to vector<1x1x128xf32>
    %41 = vector.broadcast %40 : vector<1x1x128xf32> to vector<1x16x128xf32>
    %42 = arith.addf %39, %41 : vector<1x16x128xf32>
    %cst_27 = arith.constant 0.000000e+00 : f32
    %43 = vector.broadcast %cst_27 : f32 to vector<1x16x128xf32>
    %44 = arith.maximumf %42, %43 : vector<1x16x128xf32>
    %45 = vector.broadcast %5 : f32 to vector<1x16x128xf32>
    %46 = arith.mulf %44, %45 : vector<1x16x128xf32>
    %c9 = arith.constant 9 : index
    %c1_28 = arith.constant 1 : index
    %c0_29 = arith.constant 0 : index
    %47 = vector.load %arg11[%c9, %c1_28, %c0_29] : memref<10x18x128xf32, #tpu.memory_space<vmem>>, vector<1x16x128xf32>
    tpu.vector_store %arg11[%c9, %c1_28, %c0_29], %46 {strides = array<i32>} : memref<10x18x128xf32, #tpu.memory_space<vmem>>, vector<1x16x128xf32>,
    %c0_30 = arith.constant 0 : index
    %c0_31 = arith.constant 0 : index
    %c0_32 = arith.constant 0 : index
    %48 = vector.load %arg11[%c0_30, %c0_31, %c0_32] : memref<10x18x128xf32, #tpu.memory_space<vmem>>, vector<8x16x128xf32>
    %c0_33 = arith.constant 0 : index
    %c0_34 = arith.constant 0 : index
    %c0_35 = arith.constant 0 : index
    %49 = vector.load %arg12[%c0_33, %c0_34, %c0_35] : memref<8x16x1152xf32, #tpu.memory_space<vmem>>, vector<8x16x128xf32>
    tpu.vector_store %arg12[%c0_33, %c0_34, %c0_35], %48 {strides = array<i32>} : memref<8x16x1152xf32, #tpu.memory_space<vmem>>, vector<8x16x128xf32>,
    %c0_36 = arith.constant 0 : index
    %c1_37 = arith.constant 1 : index
    %c0_38 = arith.constant 0 : index
    %50 = vector.load %arg11[%c0_36, %c1_37, %c0_38] : memref<10x18x128xf32, #tpu.memory_space<vmem>>, vector<8x16x128xf32>
    %c0_39 = arith.constant 0 : index
    %c0_40 = arith.constant 0 : index
    %c128 = arith.constant 128 : index
    %51 = vector.load %arg12[%c0_39, %c0_40, %c128] : memref<8x16x1152xf32, #tpu.memory_space<vmem>>, vector<8x16x128xf32>
    tpu.vector_store %arg12[%c0_39, %c0_40, %c128], %50 {strides = array<i32>} : memref<8x16x1152xf32, #tpu.memory_space<vmem>>, vector<8x16x128xf32>,
    %c0_41 = arith.constant 0 : index
    %c2 = arith.constant 2 : index
    %c0_42 = arith.constant 0 : index
    %52 = vector.load %arg11[%c0_41, %c2, %c0_42] : memref<10x18x128xf32, #tpu.memory_space<vmem>>, vector<8x16x128xf32>
    %c0_43 = arith.constant 0 : index
    %c0_44 = arith.constant 0 : index
    %c256 = arith.constant 256 : index
    %53 = vector.load %arg12[%c0_43, %c0_44, %c256] : memref<8x16x1152xf32, #tpu.memory_space<vmem>>, vector<8x16x128xf32>
    tpu.vector_store %arg12[%c0_43, %c0_44, %c256], %52 {strides = array<i32>} : memref<8x16x1152xf32, #tpu.memory_space<vmem>>, vector<8x16x128xf32>,
    %c1_45 = arith.constant 1 : index
    %c0_46 = arith.constant 0 : index
    %c0_47 = arith.constant 0 : index
    %54 = vector.load %arg11[%c1_45, %c0_46, %c0_47] : memref<10x18x128xf32, #tpu.memory_space<vmem>>, vector<8x16x128xf32>
    %c0_48 = arith.constant 0 : index
    %c0_49 = arith.constant 0 : index
    %c384 = arith.constant 384 : index
    %55 = vector.load %arg12[%c0_48, %c0_49, %c384] : memref<8x16x1152xf32, #tpu.memory_space<vmem>>, vector<8x16x128xf32>
    tpu.vector_store %arg12[%c0_48, %c0_49, %c384], %54 {strides = array<i32>} : memref<8x16x1152xf32, #tpu.memory_space<vmem>>, vector<8x16x128xf32>,
    %c1_50 = arith.constant 1 : index
    %c1_51 = arith.constant 1 : index
    %c0_52 = arith.constant 0 : index
    %56 = vector.load %arg11[%c1_50, %c1_51, %c0_52] : memref<10x18x128xf32, #tpu.memory_space<vmem>>, vector<8x16x128xf32>
    %c0_53 = arith.constant 0 : index
    %c0_54 = arith.constant 0 : index
    %c512 = arith.constant 512 : index
    %57 = vector.load %arg12[%c0_53, %c0_54, %c512] : memref<8x16x1152xf32, #tpu.memory_space<vmem>>, vector<8x16x128xf32>
    tpu.vector_store %arg12[%c0_53, %c0_54, %c512], %56 {strides = array<i32>} : memref<8x16x1152xf32, #tpu.memory_space<vmem>>, vector<8x16x128xf32>,
    %c1_55 = arith.constant 1 : index
    %c2_56 = arith.constant 2 : index
    %c0_57 = arith.constant 0 : index
    %58 = vector.load %arg11[%c1_55, %c2_56, %c0_57] : memref<10x18x128xf32, #tpu.memory_space<vmem>>, vector<8x16x128xf32>
    %c0_58 = arith.constant 0 : index
    %c0_59 = arith.constant 0 : index
    %c640 = arith.constant 640 : index
    %59 = vector.load %arg12[%c0_58, %c0_59, %c640] : memref<8x16x1152xf32, #tpu.memory_space<vmem>>, vector<8x16x128xf32>
    tpu.vector_store %arg12[%c0_58, %c0_59, %c640], %58 {strides = array<i32>} : memref<8x16x1152xf32, #tpu.memory_space<vmem>>, vector<8x16x128xf32>,
    %c2_60 = arith.constant 2 : index
    %c0_61 = arith.constant 0 : index
    %c0_62 = arith.constant 0 : index
    %60 = vector.load %arg11[%c2_60, %c0_61, %c0_62] : memref<10x18x128xf32, #tpu.memory_space<vmem>>, vector<8x16x128xf32>
    %c0_63 = arith.constant 0 : index
    %c0_64 = arith.constant 0 : index
    %c768 = arith.constant 768 : index
    %61 = vector.load %arg12[%c0_63, %c0_64, %c768] : memref<8x16x1152xf32, #tpu.memory_space<vmem>>, vector<8x16x128xf32>
    tpu.vector_store %arg12[%c0_63, %c0_64, %c768], %60 {strides = array<i32>} : memref<8x16x1152xf32, #tpu.memory_space<vmem>>, vector<8x16x128xf32>,
    %c2_65 = arith.constant 2 : index
    %c1_66 = arith.constant 1 : index
    %c0_67 = arith.constant 0 : index
    %62 = vector.load %arg11[%c2_65, %c1_66, %c0_67] : memref<10x18x128xf32, #tpu.memory_space<vmem>>, vector<8x16x128xf32>
    %c0_68 = arith.constant 0 : index
    %c0_69 = arith.constant 0 : index
    %c896 = arith.constant 896 : index
    %63 = vector.load %arg12[%c0_68, %c0_69, %c896] : memref<8x16x1152xf32, #tpu.memory_space<vmem>>, vector<8x16x128xf32>
    tpu.vector_store %arg12[%c0_68, %c0_69, %c896], %62 {strides = array<i32>} : memref<8x16x1152xf32, #tpu.memory_space<vmem>>, vector<8x16x128xf32>,
    %c2_70 = arith.constant 2 : index
    %c2_71 = arith.constant 2 : index
    %c0_72 = arith.constant 0 : index
    %64 = vector.load %arg11[%c2_70, %c2_71, %c0_72] : memref<10x18x128xf32, #tpu.memory_space<vmem>>, vector<8x16x128xf32>
    %c0_73 = arith.constant 0 : index
    %c0_74 = arith.constant 0 : index
    %c1024 = arith.constant 1024 : index
    %65 = vector.load %arg12[%c0_73, %c0_74, %c1024] : memref<8x16x1152xf32, #tpu.memory_space<vmem>>, vector<8x16x128xf32>
    tpu.vector_store %arg12[%c0_73, %c0_74, %c1024], %64 {strides = array<i32>} : memref<8x16x1152xf32, #tpu.memory_space<vmem>>, vector<8x16x128xf32>,
    %c0_75 = arith.constant 0 : index
    %c0_76 = arith.constant 0 : index
    %c0_77 = arith.constant 0 : index
    %66 = vector.load %arg12[%c0_75, %c0_76, %c0_77] : memref<8x16x1152xf32, #tpu.memory_space<vmem>>, vector<8x16x1152xf32>
    %67 = vector.shape_cast %66 : vector<8x16x1152xf32> to vector<128x1152xf32>
    %c0_78 = arith.constant 0 : index
    %c0_79 = arith.constant 0 : index
    %68 = vector.load %arg7[%c0_78, %c0_79] : memref<1152x128xf32, #tpu.memory_space<vmem>>, vector<1152x128xf32>
    %cst_80 = arith.constant dense<0.000000e+00> : vector<128x128xf32>
    %69 = tpu.matmul %67, %68, %cst_80 {dimension_numbers = #tpu.dot_dimension_numbers<[1], [0], [0], [1], [0, 0, 1, 1], [], []>} : vector<128x1152xf32>, vector<1152x128xf32>, vector<128x128xf32> -> vector<128x128xf32>
    %70 = vector.shape_cast %69 : vector<128x128xf32> to vector<1x8x16x128xf32>
    %c0_81 = arith.constant 0 : index
    %c0_82 = arith.constant 0 : index
    %c0_83 = arith.constant 0 : index
    %c0_84 = arith.constant 0 : index
    %71 = vector.load %arg8[%c0_81, %c0_82, %c0_83, %c0_84] : memref<1x8x16x128xf32, #tpu.memory_space<vmem>>, vector<1x8x16x128xf32>
    tpu.vector_store %arg8[%c0_81, %c0_82, %c0_83, %c0_84], %70 {strides = array<i32>} : memref<1x8x16x128xf32, #tpu.memory_space<vmem>>, vector<1x8x16x128xf32>,
    %cst_85 = arith.constant dense<0.000000e+00> : vector<128xf32>
    %72 = vector.multi_reduction <add>, %69, %cst_85 [0] : vector<128x128xf32> to vector<128xf32>
    %73 = vector.shape_cast %72 : vector<128xf32> to vector<1x128xf32>
    %74 = vector.shape_cast %73 : vector<1x128xf32> to vector<1x1x1x128xf32>
    %c0_86 = arith.constant 0 : index
    %c0_87 = arith.constant 0 : index
    %c0_88 = arith.constant 0 : index
    %c0_89 = arith.constant 0 : index
    %75 = vector.load %arg9[%c0_86, %c0_87, %c0_88, %c0_89] : memref<1x1x1x128xf32, #tpu.memory_space<vmem>>, vector<1x1x1x128xf32>
    tpu.vector_store %arg9[%c0_86, %c0_87, %c0_88, %c0_89], %74 {strides = array<i32>} : memref<1x1x1x128xf32, #tpu.memory_space<vmem>>, vector<1x1x1x128xf32>,
    %76 = arith.mulf %69, %69 : vector<128x128xf32>
    %cst_90 = arith.constant dense<0.000000e+00> : vector<128xf32>
    %77 = vector.multi_reduction <add>, %76, %cst_90 [0] : vector<128x128xf32> to vector<128xf32>
    %78 = vector.shape_cast %77 : vector<128xf32> to vector<1x128xf32>
    %79 = vector.shape_cast %78 : vector<1x128xf32> to vector<1x1x1x128xf32>
    %c0_91 = arith.constant 0 : index
    %c0_92 = arith.constant 0 : index
    %c0_93 = arith.constant 0 : index
    %c0_94 = arith.constant 0 : index
    %80 = vector.load %arg10[%c0_91, %c0_92, %c0_93, %c0_94] : memref<1x1x1x128xf32, #tpu.memory_space<vmem>>, vector<1x1x1x128xf32>
    tpu.vector_store %arg10[%c0_91, %c0_92, %c0_93, %c0_94], %79 {strides = array<i32>} : memref<1x1x1x128xf32, #tpu.memory_space<vmem>>, vector<1x1x1x128xf32>,
    return
  }
  func.func @transform_0(%arg0: i32, %arg1: i32) -> (i32, i32, i32, i32) {
    %c0_i32 = arith.constant 0 : i32
    %c0_i32_0 = arith.constant 0 : i32
    %c0_i32_1 = arith.constant 0 : i32
    return %arg0, %arg1, %c0_i32, %c0_i32_0 : i32, i32, i32, i32
  }
  func.func @transform_1(%arg0: i32, %arg1: i32) -> (i32, i32, i32, i32) {
    %c8_i32 = arith.constant 8 : i32
    %0 = arith.muli %arg1, %c8_i32 : i32
    %c1_i32 = arith.constant 1 : i32
    %1 = arith.subi %0, %c1_i32 : i32
    %c0_i32 = arith.constant 0 : i32
    %2 = arith.maxsi %1, %c0_i32 : i32
    %c0_i32_0 = arith.constant 0 : i32
    %c0_i32_1 = arith.constant 0 : i32
    %c0_i32_2 = arith.constant 0 : i32
    return %arg0, %2, %c0_i32_0, %c0_i32_1 : i32, i32, i32, i32
  }
  func.func @transform_2(%arg0: i32, %arg1: i32) -> (i32, i32, i32, i32) {
    %c1_i32 = arith.constant 1 : i32
    %0 = arith.addi %arg1, %c1_i32 : i32
    %c8_i32 = arith.constant 8 : i32
    %1 = arith.muli %0, %c8_i32 : i32
    %c15_i32 = arith.constant 15 : i32
    %2 = arith.minsi %1, %c15_i32 : i32
    %c0_i32 = arith.constant 0 : i32
    %c0_i32_0 = arith.constant 0 : i32
    %c0_i32_1 = arith.constant 0 : i32
    return %arg0, %2, %c0_i32, %c0_i32_0 : i32, i32, i32, i32
  }
  func.func @transform_3(%arg0: i32, %arg1: i32) -> (i32, i32) {
    %c0_i32 = arith.constant 0 : i32
    %c0_i32_0 = arith.constant 0 : i32
    %c0_i32_1 = arith.constant 0 : i32
    return %c0_i32, %c0_i32_0 : i32, i32
  }
  func.func @transform_4(%arg0: i32, %arg1: i32) -> (i32, i32) {
    %c0_i32 = arith.constant 0 : i32
    %c0_i32_0 = arith.constant 0 : i32
    %c0_i32_1 = arith.constant 0 : i32
    return %c0_i32, %c0_i32_0 : i32, i32
  }
  func.func @transform_5(%arg0: i32, %arg1: i32) -> (i32, i32) {
    %c0_i32 = arith.constant 0 : i32
    %c0_i32_0 = arith.constant 0 : i32
    %c0_i32_1 = arith.constant 0 : i32
    return %c0_i32, %c0_i32_0 : i32, i32
  }
  func.func @transform_6(%arg0: i32, %arg1: i32) -> (i32, i32, i32, i32) {
    %c0_i32 = arith.constant 0 : i32
    %c0_i32_0 = arith.constant 0 : i32
    %c0_i32_1 = arith.constant 0 : i32
    return %arg0, %arg1, %c0_i32, %c0_i32_0 : i32, i32, i32, i32
  }
  func.func @transform_7(%arg0: i32, %arg1: i32) -> (i32, i32, i32, i32) {
    %c0_i32 = arith.constant 0 : i32
    %c0_i32_0 = arith.constant 0 : i32
    %c0_i32_1 = arith.constant 0 : i32
    return %arg0, %arg1, %c0_i32, %c0_i32_0 : i32, i32, i32, i32
  }
  func.func @transform_8(%arg0: i32, %arg1: i32) -> (i32, i32, i32, i32) {
    %c0_i32 = arith.constant 0 : i32
    %c0_i32_0 = arith.constant 0 : i32
    %c0_i32_1 = arith.constant 0 : i32
    return %arg0, %arg1, %c0_i32, %c0_i32_0 : i32, i32, i32, i32
  }
}

module attributes {stable_mosaic.version = 11 : i64} {
  func.func @_bn_relu_kernel(%arg0: i32, %arg1: memref<128x128xf32, #tpu.memory_space<vmem>>, %arg2: memref<1x128xf32, #tpu.memory_space<vmem>>, %arg3: memref<1x128xf32, #tpu.memory_space<vmem>>, %arg4: memref<128x128xf32, #tpu.memory_space<vmem>>) attributes {dimension_semantics = [#tpu.dimension_semantics<parallel>], iteration_bounds = array<i64: 4>, scalar_prefetch = 0 : i64, scratch_operands = 0 : i64, tpu.core_type = #tpu.core_type<tc>, window_params = [{transform_indices = @transform_0, window_bounds = array<i64: 128, 128>}, {pipeline_mode = #tpu.pipeline_mode<synchronous>, transform_indices = @transform_1, window_bounds = array<i64: 1, 128>}, {pipeline_mode = #tpu.pipeline_mode<synchronous>, transform_indices = @transform_2, window_bounds = array<i64: 1, 128>}, {transform_indices = @transform_3, window_bounds = array<i64: 128, 128>}]} {
    %c0 = arith.constant 0 : index
    %c0_0 = arith.constant 0 : index
    %0 = vector.load %arg1[%c0, %c0_0] : memref<128x128xf32, #tpu.memory_space<vmem>>, vector<128x128xf32>
    %c0_1 = arith.constant 0 : index
    %c0_2 = arith.constant 0 : index
    %1 = vector.load %arg2[%c0_1, %c0_2] : memref<1x128xf32, #tpu.memory_space<vmem>>, vector<1x128xf32>
    %2 = vector.broadcast %1 : vector<1x128xf32> to vector<128x128xf32>
    %3 = arith.mulf %0, %2 : vector<128x128xf32>
    %c0_3 = arith.constant 0 : index
    %c0_4 = arith.constant 0 : index
    %4 = vector.load %arg3[%c0_3, %c0_4] : memref<1x128xf32, #tpu.memory_space<vmem>>, vector<1x128xf32>
    %5 = vector.broadcast %4 : vector<1x128xf32> to vector<128x128xf32>
    %6 = arith.addf %3, %5 : vector<128x128xf32>
    %cst = arith.constant 0.000000e+00 : f32
    %7 = vector.broadcast %cst : f32 to vector<128x128xf32>
    %8 = arith.maximumf %6, %7 : vector<128x128xf32>
    %c0_5 = arith.constant 0 : index
    %c0_6 = arith.constant 0 : index
    %9 = vector.load %arg4[%c0_5, %c0_6] : memref<128x128xf32, #tpu.memory_space<vmem>>, vector<128x128xf32>
    tpu.vector_store %arg4[%c0_5, %c0_6], %8 {strides = array<i32>} : memref<128x128xf32, #tpu.memory_space<vmem>>, vector<128x128xf32>,
    return
  }
  func.func @transform_0(%arg0: i32) -> (i32, i32) {
    %c0_i32 = arith.constant 0 : i32
    %c0_i32_0 = arith.constant 0 : i32
    return %arg0, %c0_i32 : i32, i32
  }
  func.func @transform_1(%arg0: i32) -> (i32, i32) {
    %c0_i32 = arith.constant 0 : i32
    %c0_i32_0 = arith.constant 0 : i32
    %c0_i32_1 = arith.constant 0 : i32
    return %c0_i32, %c0_i32_0 : i32, i32
  }
  func.func @transform_2(%arg0: i32) -> (i32, i32) {
    %c0_i32 = arith.constant 0 : i32
    %c0_i32_0 = arith.constant 0 : i32
    %c0_i32_1 = arith.constant 0 : i32
    return %c0_i32, %c0_i32_0 : i32, i32
  }
  func.func @transform_3(%arg0: i32) -> (i32, i32) {
    %c0_i32 = arith.constant 0 : i32
    %c0_i32_0 = arith.constant 0 : i32
    return %arg0, %c0_i32 : i32, i32
  }
}

</mosaic_0001>

<llo_original>
// kernel: double_conv.5
$region0: #{double_conv.5}
  #allocation0 [shape = 'u32[]', space=smem, size = 0x4, offset = 0x4, fixed_abs, tag = 'smem constant byte address 0x4 - core index']
  #allocation1 [shape = 'u32[72,128]{1,0:T(1,128)}', space=vmem, size = 0x9000, scoped, tag = 'internal scratch']
  %s0 = inlined_call_operand.vmem [shape: f32[512,128], index: 0, kind: input, shape index: {}]
  %s1 = inlined_call_operand.vmem [shape: f32[1,128], index: 1, kind: input, shape index: {}]
  %s2 = inlined_call_operand.vmem [shape: f32[1,128], index: 2, kind: input, shape index: {}]
  %s3 = inlined_call_operand.vmem [shape: f32[512,128], index: 3, kind: output, shape index: {}]
  %s4 = sld [smem:[#allocation0]]
  $region45: #{double_conv.5} parent=0
    _
  %s6 = ssub.s32 1, %s4
  %s7 = scalar_select 0, %s6, %s4
  loop: start=0, step=1, limit=6
  $region2: #{double_conv.5} parent=0 // loop_pre_header
    _
  $region3: #{double_conv.5} parent=0 // loop_header
    %s9 = sphi 0, %s13
    %p10 = scmp.ge.s32.totalorder %s9, 6
    %s19 = sphi 0, %s21
    %s22 = sphi 0, %s19
    %s23 = sphi 0, %s22
    %s39 = sphi 0, %s23
    %s43 = sphi 0, %s43
    %s45 = sphi 0, %s43
    %s46 = sphi 0, %s45
    %s60 = sphi 0, %s46
    %s64 = sphi 0, %s64
    %s66 = sphi 0, %s64
    %s67 = sphi 0, %s66
    %s81 = sphi 0, %s67
    %s87 = sphi 0, %s89
    %s90 = sphi 0, %s87
    %s91 = sphi 0, %s90
    %s107 = sphi 0, %s91
  $region4: #{double_conv.5} parent=0 // loop_header_branch
    %12 = sbr.rel (%p10) target = $region8
  $region5: #{double_conv.5} parent=0 // loop_body
    %s14 = ssub.s32 %s9, 1
    %s15 = ssub.s32 %s9, 2
    %s16 = sadd.s32 %s9, 1
    %s17 = ssub.s32 %s9, %s16
    %p18 = scmp.eq.s32.totalorder %s17, 0
    %s20 = sadd.s32 %s19, 1
    %s21 = scalar_select %p18, %s19, %s20
    %p24 = pneg %p18
    %p25 = scmp.eq.s32.totalorder %s9, 3
    %p26 = por %p24, %p25
    %p27 = scmp.ne.s32.totalorder %s19, %s22
    %p28 = scmp.eq.s32.totalorder %s9, 0
    %p29 = por %p27, %p28
    %p30 = scmp.ne.s32.totalorder %s19, %s22
    %p31 = scmp.eq.s32.totalorder %s14, 3
    %p32 = por %p30, %p31
    %p33 = scmp.ne.s32.totalorder %s22, %s23
    %p34 = scmp.eq.s32.totalorder %s14, 0
    %p35 = por %p33, %p34
    %p36 = scmp.ne.s32.totalorder %s22, %s23
    %p37 = scmp.eq.s32.totalorder %s15, 3
    %p38 = por %p36, %p37
    %p40 = scmp.ne.s32.totalorder %s23, %s39
    %p41 = scmp.eq.s32.totalorder %s15, 0
    %p42 = por %p40, %p41
    %s44 = sadd.s32 %s43, 1
    %p47 = scmp.eq.s32.totalorder %s9, 3
    %p48 = scmp.ne.s32.totalorder %s43, %s45
    %p49 = scmp.eq.s32.totalorder %s9, 0
    %p50 = por %p48, %p49
    %p51 = scmp.ne.s32.totalorder %s43, %s45
    %p52 = scmp.eq.s32.totalorder %s14, 3
    %p53 = por %p51, %p52
    %p54 = scmp.ne.s32.totalorder %s45, %s46
    %p55 = scmp.eq.s32.totalorder %s14, 0
    %p56 = por %p54, %p55
    %p57 = scmp.ne.s32.totalorder %s45, %s46
    %p58 = scmp.eq.s32.totalorder %s15, 3
    %p59 = por %p57, %p58
    %p61 = scmp.ne.s32.totalorder %s46, %s60
    %p62 = scmp.eq.s32.totalorder %s15, 0
    %p63 = por %p61, %p62
    %s65 = sadd.s32 %s64, 1
    %p68 = scmp.eq.s32.totalorder %s9, 3
    %p69 = scmp.ne.s32.totalorder %s64, %s66
    %p70 = scmp.eq.s32.totalorder %s9, 0
    %p71 = por %p69, %p70
    %p72 = scmp.ne.s32.totalorder %s64, %s66
    %p73 = scmp.eq.s32.totalorder %s14, 3
    %p74 = por %p72, %p73
    %p75 = scmp.ne.s32.totalorder %s66, %s67
    %p76 = scmp.eq.s32.totalorder %s14, 0
    %p77 = por %p75, %p76
    %p78 = scmp.ne.s32.totalorder %s66, %s67
    %p79 = scmp.eq.s32.totalorder %s15, 3
    %p80 = por %p78, %p79
    %p82 = scmp.ne.s32.totalorder %s67, %s81
    %p83 = scmp.eq.s32.totalorder %s15, 0
    %p84 = por %p82, %p83
    %s85 = ssub.s32 %s9, %s16
    %p86 = scmp.eq.s32.totalorder %s85, 0
    %s88 = sadd.s32 %s87, 1
    %s89 = scalar_select %p86, %s87, %s88
    %p92 = pneg %p86
    %p93 = scmp.eq.s32.totalorder %s9, 3
    %p94 = por %p92, %p93
    %p95 = scmp.ne.s32.totalorder %s87, %s90
    %p96 = scmp.eq.s32.totalorder %s9, 0
    %p97 = por %p95, %p96
    %p98 = scmp.ne.s32.totalorder %s87, %s90
    %p99 = scmp.eq.s32.totalorder %s14, 3
    %p100 = por %p98, %p99
    %p101 = scmp.ne.s32.totalorder %s90, %s91
    %p102 = scmp.eq.s32.totalorder %s14, 0
    %p103 = por %p101, %p102
    %p104 = scmp.ne.s32.totalorder %s90, %s91
    %p105 = scmp.eq.s32.totalorder %s15, 3
    %p106 = por %p104, %p105
    %p108 = scmp.ne.s32.totalorder %s91, %s107
    %p109 = scmp.eq.s32.totalorder %s15, 0
    %p110 = por %p108, %p109
    %p111 = scmp.le.s32.totalorder 1, %s9
    %p112 = scmp.lt.s32.totalorder %s9, 5
    %p113 = pnand %p111, %p112
    %p114 = pneg %p113
    // Predicated region
    $region9: #{double_conv.5} parent=5 // pred_check
      _
    $region10: #{double_conv.5} parent=5 // pred_check_branch
      %116 = sbr.rel (%p113) target = $region12
    $region11: #{double_conv.5} parent=5 // pred_region
      %s117 = ssub.s32 %s9, 1
      // Predicated region
      $region13: #{double_conv.5} parent=11 // pred_check
        %p118 = pneg %p56
      $region14: #{double_conv.5} parent=11 // pred_check_branch
        %120 = sbr.rel (%p118) target = $region16
      $region15: #{double_conv.5} parent=11 // pred_region
        _
      $region16: #{double_conv.5} parent=11 // pred_fallthru
        _
      // Predicated region
      $region17: #{double_conv.5} parent=11 // pred_check
        %p121 = pneg %p77
      $region18: #{double_conv.5} parent=11 // pred_check_branch
        %123 = sbr.rel (%p121) target = $region20
      $region19: #{double_conv.5} parent=11 // pred_region
        _
      $region20: #{double_conv.5} parent=11 // pred_fallthru
        _
    $region12: #{double_conv.5} parent=5 // pred_fallthru
      _
    %p124 = scmp.lt.s32.totalorder %s9, 4
    // Predicated region
    $region21: #{double_conv.5} parent=5 // pred_check
      %p125 = pneg %p124
    $region22: #{double_conv.5} parent=5 // pred_check_branch
      %127 = sbr.rel (%p125) target = $region24
    $region23: #{double_conv.5} parent=5 // pred_region
      // Predicated region
      $region25: #{double_conv.5} parent=23 // pred_check
        %p128 = pneg %p29
      $region26: #{double_conv.5} parent=23 // pred_check_branch
        %130 = sbr.rel (%p128) target = $region28
      $region27: #{double_conv.5} parent=23 // pred_region
        %s131 = smul.u32 16, %s9
        %p132 = scmp.lt.s32.totalorder %s131, 63
        %s133 = scalar_select %p132, %s131, 63
        %s134 = smul.addr %s133, 8
        %s135 = scalar_lea.vmem %s0, %s134
        %s136 = smul.u32 16, %s9
      $region28: #{double_conv.5} parent=23 // pred_fallthru
        _
    $region24: #{double_conv.5} parent=5 // pred_fallthru
      _
    %p137 = scmp.le.s32.totalorder 1, %s9
    %p138 = scmp.lt.s32.totalorder %s9, 5
    %p139 = pnand %p137, %p138
    %p140 = pneg %p139
    // Predicated region
    $region29: #{double_conv.5} parent=5 // pred_check
      _
    $region30: #{double_conv.5} parent=5 // pred_check_branch
      %142 = sbr.rel (%p139) target = $region32
    $region31: #{double_conv.5} parent=5 // pred_region
      %s143 = ssub.s32 %s9, 1
      %s144 = smul.u32 16, %s14
      %p145 = scmp.lt.s32.totalorder %s144, 63
      %s146 = scalar_select %p145, %s144, 63
      %s147 = smul.addr %s146, 8
      %s148 = scalar_lea.vmem %s0, %s147
      %p149 = pneg %p35
      %p150 = pneg %p32
      %p151 = pneg %p56
      %p152 = pneg %p53
      %p153 = pneg %p77
      %p154 = pneg %p74
      %p155 = pneg %p103
      %p156 = pneg %p100
      %s157 = smul.u32 16, %s14
      %p158 = scmp.lt.s32.totalorder %s157, 63
      %s159 = scalar_select %p158, %s157, 63
      %s160 = smul.addr %s159, 8
      %s161 = scalar_lea.vmem %s3, %s160
      %s162 = smul.u32 16, %s14
      %p163 = scmp.lt.s32.totalorder %s162, 63
      %s164 = scalar_select %p163, %s162, 63
      %s165 = smul.addr %s164, 8
      %s166 = scalar_lea.vmem %s0, %s165
      %s167 = smul.u32 16, %s14
      %s168 = smul.u32 16, %s14
      %p169 = scmp.lt.s32.totalorder %s168, 63
      %s170 = scalar_select %p169, %s168, 63
      %s171 = smul.addr %s170, 8
      %s172 = scalar_lea.vmem %s3, %s171
      %s173 = smul.u32 16, %s14
      %v174 = vld [vmem:[%s166] sm:$0xff]
      %v175 = vld [vmem:[%s166 + $0x8] sm:$0xff]
      %v176 = vld [vmem:[%s166 + $0x10] sm:$0xff]
      %v177 = vld [vmem:[%s166 + $0x18] sm:$0xff]
      %v178 = vld [vmem:[%s166 + $0x20] sm:$0xff]
      %v179 = vld [vmem:[%s166 + $0x28] sm:$0xff]
      %v180 = vld [vmem:[%s166 + $0x30] sm:$0xff]
      %v181 = vld [vmem:[%s166 + $0x38] sm:$0xff]
      %v182 = vld [vmem:[%s166 + $0x40] sm:$0xff]
      %v183 = vld [vmem:[%s166 + $0x48] sm:$0xff]
      %v184 = vld [vmem:[%s166 + $0x50] sm:$0xff]
      %v185 = vld [vmem:[%s166 + $0x58] sm:$0xff]
      %v186 = vld [vmem:[%s166 + $0x60] sm:$0xff]
      %v187 = vld [vmem:[%s166 + $0x68] sm:$0xff]
      %v188 = vld [vmem:[%s166 + $0x70] sm:$0xff]
      %v189 = vld [vmem:[%s166 + $0x78] sm:$0xff]
      %v190 = vld [vmem:[%s1] sm:$0x1]
      %v192 = vperm.slane %v190, 0
      %v194 = vmul.f32 %v174, %v192
      %v195 = vmul.f32 %v175, %v192
      %v196 = vmul.f32 %v176, %v192
      %v197 = vmul.f32 %v177, %v192
      %v198 = vmul.f32 %v178, %v192
      %v199 = vmul.f32 %v179, %v192
      %v200 = vmul.f32 %v180, %v192
      %v201 = vmul.f32 %v181, %v192
      %v202 = vmul.f32 %v182, %v192
      %v203 = vmul.f32 %v183, %v192
      %v204 = vmul.f32 %v184, %v192
      %v205 = vmul.f32 %v185, %v192
      %v206 = vmul.f32 %v186, %v192
      %v207 = vmul.f32 %v187, %v192
      %v208 = vmul.f32 %v188, %v192
      %v209 = vmul.f32 %v189, %v192
      %v210 = vld [vmem:[%s2] sm:$0x1]
      %v212 = vperm.slane %v210, 0
      %v214 = vadd.f32 %v194, %v212
      %v215 = vadd.f32 %v195, %v212
      %v216 = vadd.f32 %v196, %v212
      %v217 = vadd.f32 %v197, %v212
      %v218 = vadd.f32 %v198, %v212
      %v219 = vadd.f32 %v199, %v212
      %v220 = vadd.f32 %v200, %v212
      %v221 = vadd.f32 %v201, %v212
      %v222 = vadd.f32 %v202, %v212
      %v223 = vadd.f32 %v203, %v212
      %v224 = vadd.f32 %v204, %v212
      %v225 = vadd.f32 %v205, %v212
      %v226 = vadd.f32 %v206, %v212
      %v227 = vadd.f32 %v207, %v212
      %v228 = vadd.f32 %v208, %v212
      %v229 = vadd.f32 %v209, %v212
      %v230 = vmax.f32 %v214, 0.0
      %v231 = vmax.f32 %v215, 0.0
      %v232 = vmax.f32 %v216, 0.0
      %v233 = vmax.f32 %v217, 0.0
      %v234 = vmax.f32 %v218, 0.0
      %v235 = vmax.f32 %v219, 0.0
      %v236 = vmax.f32 %v220, 0.0
      %v237 = vmax.f32 %v221, 0.0
      %v238 = vmax.f32 %v222, 0.0
      %v239 = vmax.f32 %v223, 0.0
      %v240 = vmax.f32 %v224, 0.0
      %v241 = vmax.f32 %v225, 0.0
      %v242 = vmax.f32 %v226, 0.0
      %v243 = vmax.f32 %v227, 0.0
      %v244 = vmax.f32 %v228, 0.0
      %v245 = vmax.f32 %v229, 0.0
      %246 = vst [vmem:[%s172] sm:$0xff] %v230
      %247 = vst [vmem:[%s172 + $0x8] sm:$0xff] %v231
      %248 = vst [vmem:[%s172 + $0x10] sm:$0xff] %v232
      %249 = vst [vmem:[%s172 + $0x18] sm:$0xff] %v233
      %250 = vst [vmem:[%s172 + $0x20] sm:$0xff] %v234
      %251 = vst [vmem:[%s172 + $0x28] sm:$0xff] %v235
      %252 = vst [vmem:[%s172 + $0x30] sm:$0xff] %v236
      %253 = vst [vmem:[%s172 + $0x38] sm:$0xff] %v237
      %254 = vst [vmem:[%s172 + $0x40] sm:$0xff] %v238
      %255 = vst [vmem:[%s172 + $0x48] sm:$0xff] %v239
      %256 = vst [vmem:[%s172 + $0x50] sm:$0xff] %v240
      %257 = vst [vmem:[%s172 + $0x58] sm:$0xff] %v241
      %258 = vst [vmem:[%s172 + $0x60] sm:$0xff] %v242
      %259 = vst [vmem:[%s172 + $0x68] sm:$0xff] %v243
      %260 = vst [vmem:[%s172 + $0x70] sm:$0xff] %v244
      %261 = vst [vmem:[%s172 + $0x78] sm:$0xff] %v245
      %s262 = smul.u32 16, %s14
      %p263 = scmp.lt.s32.totalorder %s262, 63
      %s264 = scalar_select %p263, %s262, 63
      %s265 = smul.addr %s264, 8
      %s266 = scalar_lea.vmem %s3, %s265
      // Predicated region
      $region33: #{double_conv.5} parent=31 // pred_check
        %p267 = pneg %p100
      $region34: #{double_conv.5} parent=31 // pred_check_branch
        %269 = sbr.rel (%p267) target = $region36
      $region35: #{double_conv.5} parent=31 // pred_region
        %s270 = smul.u32 16, %s14
      $region36: #{double_conv.5} parent=31 // pred_fallthru
        _
    $region32: #{double_conv.5} parent=5 // pred_fallthru
      _
    %p271 = scmp.le.s32.totalorder 2, %s9
    // Predicated region
    $region37: #{double_conv.5} parent=5 // pred_check
      %p272 = pneg %p271
    $region38: #{double_conv.5} parent=5 // pred_check_branch
      %274 = sbr.rel (%p272) target = $region40
    $region39: #{double_conv.5} parent=5 // pred_region
      %s275 = ssub.s32 %s9, 2
      // Predicated region
      $region41: #{double_conv.5} parent=39 // pred_check
        %p276 = pneg %p106
      $region42: #{double_conv.5} parent=39 // pred_check_branch
        %278 = sbr.rel (%p276) target = $region44
      $region43: #{double_conv.5} parent=39 // pred_region
        %s279 = smul.u32 16, %s15
        %p280 = scmp.lt.s32.totalorder %s279, 63
        %s281 = scalar_select %p280, %s279, 63
        %s282 = smul.addr %s281, 8
        %s283 = scalar_lea.vmem %s3, %s282
      $region44: #{double_conv.5} parent=39 // pred_fallthru
        _
    $region40: #{double_conv.5} parent=5 // pred_fallthru
      _
  $region6: #{double_conv.5} parent=0 // loop_footer
    %s13 = sadd.s32 1, %s9
  $region7: #{double_conv.5} parent=0 // loop_footer_branch
    %8 = sbr.rel target = $region3
  $region8: #{double_conv.5} parent=0 // loop_exit
    _

// kernel: double_conv.3
$region0: #{double_conv.3}
  #allocation0 [shape = 'u32[]', space=smem, size = 0x4, offset = 0x4, fixed_abs, tag = 'smem constant byte address 0x4 - core index']
  #allocation1 [shape = 'u32[72,128]{1,0:T(1,128)}', space=vmem, size = 0x9000, scoped, tag = 'internal scratch']
  #allocation2 [shape = 'f32[10,18,4]{2,1,0:T(8,128)}', space=vmem, size = 0x1e000, scoped, tag = 'scratch operand']
  #allocation3 [shape = 'f32[8,16,36]{2,1,0:T(8,128)}', space=vmem, size = 0x10000, scoped, tag = 'scratch operand']
  %s0 = inlined_call_operand.vmem [shape: f32[2,16,18,4], index: 0, kind: input, shape index: {}, may-alias: {0,1,2}]
  %s1 = inlined_call_operand.vmem [shape: f32[2,16,18,4], index: 1, kind: input, shape index: {}, may-alias: {0,1,2}]
  %s2 = inlined_call_operand.vmem [shape: f32[2,16,18,4], index: 2, kind: input, shape index: {}, may-alias: {0,1,2}]
  %s3 = inlined_call_operand.vmem [shape: f32[36,128], index: 3, kind: input, shape index: {}]
  %s4 = inlined_call_operand.vmem [shape: f32[2,16,16,128], index: 4, kind: output, shape index: {0}]
  %s5 = inlined_call_operand.vmem [shape: f32[2,2,1,128], index: 5, kind: output, shape index: {1}]
  %s6 = inlined_call_operand.vmem [shape: f32[2,2,1,128], index: 6, kind: output, shape index: {2}]
  %7 = xla_tuple %s4, %s5, %s6
  %s8 = sld [smem:[#allocation0]]
  $region65: #{double_conv.3} parent=0
    _
  %s10 = ssub.s32 1, %s8
  %s11 = scalar_select 0, %s10, %s8
  loop: start=0, step=1, limit=6
  $region2: #{double_conv.3} parent=0 // loop_pre_header
    _
  $region3: #{double_conv.3} parent=0 // loop_header
    %s13 = sphi 0, %s17
    %p14 = scmp.ge.s32.totalorder %s13, 6
    %s20 = sphi 0, %s32
    %s21 = sphi 0, %s28
    %s22 = sphi 0, %s20
    %s23 = sphi 0, %s21
    %s24 = sphi 0, %s22
    %s25 = sphi 0, %s23
    %s37 = sphi 0, %s39
    %s40 = sphi 0, %s37
    %s41 = sphi 0, %s40
    %s57 = sphi 0, %s41
    %s73 = sphi 0, %s75
    %s76 = sphi 0, %s73
    %s77 = sphi 0, %s76
    %s93 = sphi 0, %s77
    %s109 = sphi 0, %s111
    %s112 = sphi 0, %s109
    %s113 = sphi 0, %s112
    %s129 = sphi 0, %s113
    %s133 = sphi 0, %s133
    %s135 = sphi 0, %s133
    %s136 = sphi 0, %s135
    %s150 = sphi 0, %s136
    %s158 = sphi 0, %s160
    %s161 = sphi 0, %s158
    %s162 = sphi 0, %s161
    %s178 = sphi 0, %s162
    %s186 = sphi 0, %s188
    %s189 = sphi 0, %s186
    %s190 = sphi 0, %s189
    %s206 = sphi 0, %s190
    %s214 = sphi 0, %s216
    %s217 = sphi 0, %s214
    %s218 = sphi 0, %s217
    %s234 = sphi 0, %s218
  $region4: #{double_conv.3} parent=0 // loop_header_branch
    %16 = sbr.rel (%p14) target = $region8
  $region5: #{double_conv.3} parent=0 // loop_body
    %s18 = ssub.s32 %s13, 1
    %s19 = ssub.s32 %s13, 2
    %s26 = sadd.s32 1, %s21
    %p27 = scmp.ge.s32.totalorder %s26, 2
    %s28 = scalar_select %p27, 0, %s26
    %s29 = sadd.s32 1, %s20
    %s30 = scalar_select %p27, %s29, %s20
    %p31 = scmp.ge.s32.totalorder %s30, 2
    %s32 = scalar_select %p31, 0, %s30
    %s33 = ssub.s32 %s20, %s32
    %s34 = ssub.s32 %s21, %s28
    %s35 = sor.u32 %s33, %s34
    %p36 = scmp.eq.s32.totalorder %s35, 0
    %s38 = sadd.s32 %s37, 1
    %s39 = scalar_select %p36, %s37, %s38
    %p42 = pneg %p36
    %p43 = scmp.eq.s32.totalorder %s13, 3
    %p44 = por %p42, %p43
    %p45 = scmp.ne.s32.totalorder %s37, %s40
    %p46 = scmp.eq.s32.totalorder %s13, 0
    %p47 = por %p45, %p46
    %p48 = scmp.ne.s32.totalorder %s37, %s40
    %p49 = scmp.eq.s32.totalorder %s18, 3
    %p50 = por %p48, %p49
    %p51 = scmp.ne.s32.totalorder %s40, %s41
    %p52 = scmp.eq.s32.totalorder %s18, 0
    %p53 = por %p51, %p52
    %p54 = scmp.ne.s32.totalorder %s40, %s41
    %p55 = scmp.eq.s32.totalorder %s19, 3
    %p56 = por %p54, %p55
    %p58 = scmp.ne.s32.totalorder %s41, %s57
    %p59 = scmp.eq.s32.totalorder %s19, 0
    %p60 = por %p58, %p59
    %s61 = smul.u32 %s21, 8
    %s62 = ssub.s32 %s61, 1
    %p63 = scmp.gt.s32.totalorder %s62, 0
    %s64 = scalar_select %p63, %s62, 0
    %s65 = smul.u32 %s28, 8
    %s66 = ssub.s32 %s65, 1
    %p67 = scmp.gt.s32.totalorder %s66, 0
    %s68 = scalar_select %p67, %s66, 0
    %s69 = ssub.s32 %s20, %s32
    %s70 = ssub.s32 %s64, %s68
    %s71 = sor.u32 %s69, %s70
    %p72 = scmp.eq.s32.totalorder %s71, 0
    %s74 = sadd.s32 %s73, 1
    %s75 = scalar_select %p72, %s73, %s74
    %p78 = pneg %p72
    %p79 = scmp.eq.s32.totalorder %s13, 3
    %p80 = por %p78, %p79
    %p81 = scmp.ne.s32.totalorder %s73, %s76
    %p82 = scmp.eq.s32.totalorder %s13, 0
    %p83 = por %p81, %p82
    %p84 = scmp.ne.s32.totalorder %s73, %s76
    %p85 = scmp.eq.s32.totalorder %s18, 3
    %p86 = por %p84, %p85
    %p87 = scmp.ne.s32.totalorder %s76, %s77
    %p88 = scmp.eq.s32.totalorder %s18, 0
    %p89 = por %p87, %p88
    %p90 = scmp.ne.s32.totalorder %s76, %s77
    %p91 = scmp.eq.s32.totalorder %s19, 3
    %p92 = por %p90, %p91
    %p94 = scmp.ne.s32.totalorder %s77, %s93
    %p95 = scmp.eq.s32.totalorder %s19, 0
    %p96 = por %p94, %p95
    %s97 = sadd.s32 %s21, 1
    %s98 = smul.u32 %s97, 8
    %p99 = scmp.lt.s32.totalorder %s98, 15
    %s100 = scalar_select %p99, %s98, 15
    %s101 = sadd.s32 %s28, 1
    %s102 = smul.u32 %s101, 8
    %p103 = scmp.lt.s32.totalorder %s102, 15
    %s104 = scalar_select %p103, %s102, 15
    %s105 = ssub.s32 %s20, %s32
    %s106 = ssub.s32 %s100, %s104
    %s107 = sor.u32 %s105, %s106
    %p108 = scmp.eq.s32.totalorder %s107, 0
    %s110 = sadd.s32 %s109, 1
    %s111 = scalar_select %p108, %s109, %s110
    %p114 = pneg %p108
    %p115 = scmp.eq.s32.totalorder %s13, 3
    %p116 = por %p114, %p115
    %p117 = scmp.ne.s32.totalorder %s109, %s112
    %p118 = scmp.eq.s32.totalorder %s13, 0
    %p119 = por %p117, %p118
    %p120 = scmp.ne.s32.totalorder %s109, %s112
    %p121 = scmp.eq.s32.totalorder %s18, 3
    %p122 = por %p120, %p121
    %p123 = scmp.ne.s32.totalorder %s112, %s113
    %p124 = scmp.eq.s32.totalorder %s18, 0
    %p125 = por %p123, %p124
    %p126 = scmp.ne.s32.totalorder %s112, %s113
    %p127 = scmp.eq.s32.totalorder %s19, 3
    %p128 = por %p126, %p127
    %p130 = scmp.ne.s32.totalorder %s113, %s129
    %p131 = scmp.eq.s32.totalorder %s19, 0
    %p132 = por %p130, %p131
    %s134 = sadd.s32 %s133, 1
    %p137 = scmp.eq.s32.totalorder %s13, 3
    %p138 = scmp.ne.s32.totalorder %s133, %s135
    %p139 = scmp.eq.s32.totalorder %s13, 0
    %p140 = por %p138, %p139
    %p141 = scmp.ne.s32.totalorder %s133, %s135
    %p142 = scmp.eq.s32.totalorder %s18, 3
    %p143 = por %p141, %p142
    %p144 = scmp.ne.s32.totalorder %s135, %s136
    %p145 = scmp.eq.s32.totalorder %s18, 0
    %p146 = por %p144, %p145
    %p147 = scmp.ne.s32.totalorder %s135, %s136
    %p148 = scmp.eq.s32.totalorder %s19, 3
    %p149 = por %p147, %p148
    %p151 = scmp.ne.s32.totalorder %s136, %s150
    %p152 = scmp.eq.s32.totalorder %s19, 0
    %p153 = por %p151, %p152
    %s154 = ssub.s32 %s20, %s32
    %s155 = ssub.s32 %s21, %s28
    %s156 = sor.u32 %s154, %s155
    %p157 = scmp.eq.s32.totalorder %s156, 0
    %s159 = sadd.s32 %s158, 1
    %s160 = scalar_select %p157, %s158, %s159
    %p163 = pneg %p157
    %p164 = scmp.eq.s32.totalorder %s13, 3
    %p165 = por %p163, %p164
    %p166 = scmp.ne.s32.totalorder %s158, %s161
    %p167 = scmp.eq.s32.totalorder %s13, 0
    %p168 = por %p166, %p167
    %p169 = scmp.ne.s32.totalorder %s158, %s161
    %p170 = scmp.eq.s32.totalorder %s18, 3
    %p171 = por %p169, %p170
    %p172 = scmp.ne.s32.totalorder %s161, %s162
    %p173 = scmp.eq.s32.totalorder %s18, 0
    %p174 = por %p172, %p173
    %p175 = scmp.ne.s32.totalorder %s161, %s162
    %p176 = scmp.eq.s32.totalorder %s19, 3
    %p177 = por %p175, %p176
    %p179 = scmp.ne.s32.totalorder %s162, %s178
    %p180 = scmp.eq.s32.totalorder %s19, 0
    %p181 = por %p179, %p180
    %s182 = ssub.s32 %s20, %s32
    %s183 = ssub.s32 %s21, %s28
    %s184 = sor.u32 %s182, %s183
    %p185 = scmp.eq.s32.totalorder %s184, 0
    %s187 = sadd.s32 %s186, 1
    %s188 = scalar_select %p185, %s186, %s187
    %p191 = pneg %p185
    %p192 = scmp.eq.s32.totalorder %s13, 3
    %p193 = por %p191, %p192
    %p194 = scmp.ne.s32.totalorder %s186, %s189
    %p195 = scmp.eq.s32.totalorder %s13, 0
    %p196 = por %p194, %p195
    %p197 = scmp.ne.s32.totalorder %s186, %s189
    %p198 = scmp.eq.s32.totalorder %s18, 3
    %p199 = por %p197, %p198
    %p200 = scmp.ne.s32.totalorder %s189, %s190
    %p201 = scmp.eq.s32.totalorder %s18, 0
    %p202 = por %p200, %p201
    %p203 = scmp.ne.s32.totalorder %s189, %s190
    %p204 = scmp.eq.s32.totalorder %s19, 3
    %p205 = por %p203, %p204
    %p207 = scmp.ne.s32.totalorder %s190, %s206
    %p208 = scmp.eq.s32.totalorder %s19, 0
    %p209 = por %p207, %p208
    %s210 = ssub.s32 %s20, %s32
    %s211 = ssub.s32 %s21, %s28
    %s212 = sor.u32 %s210, %s211
    %p213 = scmp.eq.s32.totalorder %s212, 0
    %s215 = sadd.s32 %s214, 1
    %s216 = scalar_select %p213, %s214, %s215
    %p219 = pneg %p213
    %p220 = scmp.eq.s32.totalorder %s13, 3
    %p221 = por %p219, %p220
    %p222 = scmp.ne.s32.totalorder %s214, %s217
    %p223 = scmp.eq.s32.totalorder %s13, 0
    %p224 = por %p222, %p223
    %p225 = scmp.ne.s32.totalorder %s214, %s217
    %p226 = scmp.eq.s32.totalorder %s18, 3
    %p227 = por %p225, %p226
    %p228 = scmp.ne.s32.totalorder %s217, %s218
    %p229 = scmp.eq.s32.totalorder %s18, 0
    %p230 = por %p228, %p229
    %p231 = scmp.ne.s32.totalorder %s217, %s218
    %p232 = scmp.eq.s32.totalorder %s19, 3
    %p233 = por %p231, %p232
    %p235 = scmp.ne.s32.totalorder %s218, %s234
    %p236 = scmp.eq.s32.totalorder %s19, 0
    %p237 = por %p235, %p236
    %p238 = scmp.le.s32.totalorder 1, %s13
    %p239 = scmp.lt.s32.totalorder %s13, 5
    %p240 = pnand %p238, %p239
    %p241 = pneg %p240
    // Predicated region
    $region9: #{double_conv.3} parent=5 // pred_check
      _
    $region10: #{double_conv.3} parent=5 // pred_check_branch
      %243 = sbr.rel (%p240) target = $region12
    $region11: #{double_conv.3} parent=5 // pred_region
      %s244 = ssub.s32 %s13, 1
      // Predicated region
      $region13: #{double_conv.3} parent=11 // pred_check
        %p245 = pneg %p146
      $region14: #{double_conv.3} parent=11 // pred_check_branch
        %247 = sbr.rel (%p245) target = $region16
      $region15: #{double_conv.3} parent=11 // pred_region
        _
      $region16: #{double_conv.3} parent=11 // pred_fallthru
        _
    $region12: #{double_conv.3} parent=5 // pred_fallthru
      _
    %p248 = scmp.lt.s32.totalorder %s13, 4
    // Predicated region
    $region17: #{double_conv.3} parent=5 // pred_check
      %p249 = pneg %p248
    $region18: #{double_conv.3} parent=5 // pred_check_branch
      %251 = sbr.rel (%p249) target = $region20
    $region19: #{double_conv.3} parent=5 // pred_region
      // Predicated region
      $region21: #{double_conv.3} parent=19 // pred_check
        %p252 = pneg %p47
      $region22: #{double_conv.3} parent=19 // pred_check_branch
        %254 = sbr.rel (%p252) target = $region24
      $region23: #{double_conv.3} parent=19 // pred_region
        %s255 = smul.u32 8, %s21
        %p256 = scmp.lt.s32.totalorder %s20, 1
        %s257 = scalar_select %p256, %s20, 1
        %p258 = scmp.lt.s32.totalorder %s255, 15
        %s259 = scalar_select %p258, %s255, 15
        %s260 = smul.addr %s259, 3
        %s261 = smul.addr %s257, 48
        %s262 = sadd.s32 %s260, %s261
        %s263 = smul.addr %s262, 8
        %s264 = scalar_lea.vmem %s0, %s263
        %s265 = smul.u32 8, %s21
      $region24: #{double_conv.3} parent=19 // pred_fallthru
        _
      // Predicated region
      $region25: #{double_conv.3} parent=19 // pred_check
        %p266 = pneg %p83
      $region26: #{double_conv.3} parent=19 // pred_check_branch
        %268 = sbr.rel (%p266) target = $region28
      $region27: #{double_conv.3} parent=19 // pred_region
        %s269 = smul.u32 %s21, 8
        %s270 = ssub.s32 %s269, 1
        %p271 = scmp.gt.s32.totalorder %s270, 0
        %s272 = scalar_select %p271, %s270, 0
        %p273 = scmp.lt.s32.totalorder %s20, 1
        %s274 = scalar_select %p273, %s20, 1
        %p275 = scmp.lt.s32.totalorder %s272, 15
        %s276 = scalar_select %p275, %s272, 15
        %s277 = smul.addr %s276, 3
        %s278 = smul.addr %s274, 48
        %s279 = sadd.s32 %s277, %s278
        %s280 = smul.addr %s279, 8
        %s281 = scalar_lea.vmem %s1, %s280
        %s282 = smul.u32 %s21, 8
        %s283 = ssub.s32 %s282, 1
        %p284 = scmp.gt.s32.totalorder %s283, 0
        %s285 = scalar_select %p284, %s283, 0
      $region28: #{double_conv.3} parent=19 // pred_fallthru
        _
      // Predicated region
      $region29: #{double_conv.3} parent=19 // pred_check
        %p286 = pneg %p119
      $region30: #{double_conv.3} parent=19 // pred_check_branch
        %288 = sbr.rel (%p286) target = $region32
      $region31: #{double_conv.3} parent=19 // pred_region
        %s289 = sadd.s32 %s21, 1
        %s290 = smul.u32 %s289, 8
        %p291 = scmp.lt.s32.totalorder %s290, 15
        %s292 = scalar_select %p291, %s290, 15
        %p293 = scmp.lt.s32.totalorder %s20, 1
        %s294 = scalar_select %p293, %s20, 1
        %p295 = scmp.lt.s32.totalorder %s292, 15
        %s296 = scalar_select %p295, %s292, 15
        %s297 = smul.addr %s296, 3
        %s298 = smul.addr %s294, 48
        %s299 = sadd.s32 %s297, %s298
        %s300 = smul.addr %s299, 8
        %s301 = scalar_lea.vmem %s2, %s300
        %s302 = sadd.s32 %s21, 1
        %s303 = smul.u32 %s302, 8
        %p304 = scmp.lt.s32.totalorder %s303, 15
        %s305 = scalar_select %p304, %s303, 15
      $region32: #{double_conv.3} parent=19 // pred_fallthru
        _
    $region20: #{double_conv.3} parent=5 // pred_fallthru
      _
    %p306 = scmp.le.s32.totalorder 1, %s13
    %p307 = scmp.lt.s32.totalorder %s13, 5
    %p308 = pnand %p306, %p307
    %p309 = pneg %p308
    // Predicated region
    $region33: #{double_conv.3} parent=5 // pred_check
      _
    $region34: #{double_conv.3} parent=5 // pred_check_branch
      %311 = sbr.rel (%p308) target = $region36
    $region35: #{double_conv.3} parent=5 // pred_region
      %s312 = ssub.s32 %s13, 1
      %s313 = smul.u32 8, %s23
      %p314 = scmp.lt.s32.totalorder %s22, 1
      %s315 = scalar_select %p314, %s22, 1
      %p316 = scmp.lt.s32.totalorder %s313, 15
      %s317 = scalar_select %p316, %s313, 15
      %s318 = smul.addr %s317, 3
      %s319 = smul.addr %s315, 48
      %s320 = sadd.s32 %s318, %s319
      %s321 = smul.addr %s320, 8
      %s322 = scalar_lea.vmem %s0, %s321
      %p323 = pneg %p53
      %p324 = pneg %p50
      %s325 = smul.u32 %s23, 8
      %s326 = ssub.s32 %s325, 1
      %p327 = scmp.gt.s32.totalorder %s326, 0
      %s328 = scalar_select %p327, %s326, 0
      %p329 = scmp.lt.s32.totalorder %s22, 1
      %s330 = scalar_select %p329, %s22, 1
      %p331 = scmp.lt.s32.totalorder %s328, 15
      %s332 = scalar_select %p331, %s328, 15
      %s333 = smul.addr %s332, 3
      %s334 = smul.addr %s330, 48
      %s335 = sadd.s32 %s333, %s334
      %s336 = smul.addr %s335, 8
      %s337 = scalar_lea.vmem %s1, %s336
      %p338 = pneg %p89
      %p339 = pneg %p86
      %s340 = sadd.s32 %s23, 1
      %s341 = smul.u32 %s340, 8
      %p342 = scmp.lt.s32.totalorder %s341, 15
      %s343 = scalar_select %p342, %s341, 15
      %p344 = scmp.lt.s32.totalorder %s22, 1
      %s345 = scalar_select %p344, %s22, 1
      %p346 = scmp.lt.s32.totalorder %s343, 15
      %s347 = scalar_select %p346, %s343, 15
      %s348 = smul.addr %s347, 3
      %s349 = smul.addr %s345, 48
      %s350 = sadd.s32 %s348, %s349
      %s351 = smul.addr %s350, 8
      %s352 = scalar_lea.vmem %s2, %s351
      %p353 = pneg %p125
      %p354 = pneg %p122
      %p355 = pneg %p146
      %p356 = pneg %p143
      %p357 = pneg %p174
      %p358 = pneg %p171
      %s359 = smul.u32 8, %s23
      %p360 = scmp.lt.s32.totalorder %s22, 1
      %s361 = scalar_select %p360, %s22, 1
      %p362 = scmp.lt.s32.totalorder %s359, 15
      %s363 = scalar_select %p362, %s359, 15
      %s364 = smul.addr %s363, 2
      %s365 = smul.addr %s361, 32
      %s366 = sadd.s32 %s364, %s365
      %s367 = smul.addr %s366, 8
      %s368 = scalar_lea.vmem %s4, %s367
      %p369 = pneg %p202
      %p370 = pneg %p199
      %p371 = scmp.lt.s32.totalorder %s22, 1
      %s372 = scalar_select %p371, %s22, 1
      %p373 = scmp.lt.s32.totalorder %s23, 1
      %s374 = scalar_select %p373, %s23, 1
      %s375 = smul.addr %s372, 2
      %s376 = sadd.s32 %s374, %s375
      %s377 = scalar_lea.vmem %s5, %s376
      %p378 = pneg %p230
      %p379 = pneg %p227
      %p380 = scmp.lt.s32.totalorder %s22, 1
      %s381 = scalar_select %p380, %s22, 1
      %p382 = scmp.lt.s32.totalorder %s23, 1
      %s383 = scalar_select %p382, %s23, 1
      %s384 = smul.addr %s381, 2
      %s385 = sadd.s32 %s383, %s384
      %s386 = scalar_lea.vmem %s6, %s385
      %s387 = smul.u32 8, %s23
      %p388 = scmp.lt.s32.totalorder %s22, 1
      %s389 = scalar_select %p388, %s22, 1
      %p390 = scmp.lt.s32.totalorder %s387, 15
      %s391 = scalar_select %p390, %s387, 15
      %s392 = smul.addr %s391, 3
      %s393 = smul.addr %s389, 48
      %s394 = sadd.s32 %s392, %s393
      %s395 = smul.addr %s394, 8
      %s396 = scalar_lea.vmem %s0, %s395
      %s397 = smul.u32 8, %s23
      %s398 = smul.u32 %s23, 8
      %s399 = ssub.s32 %s398, 1
      %p400 = scmp.gt.s32.totalorder %s399, 0
      %s401 = scalar_select %p400, %s399, 0
      %p402 = scmp.lt.s32.totalorder %s22, 1
      %s403 = scalar_select %p402, %s22, 1
      %p404 = scmp.lt.s32.totalorder %s401, 15
      %s405 = scalar_select %p404, %s401, 15
      %s406 = smul.addr %s405, 3
      %s407 = smul.addr %s403, 48
      %s408 = sadd.s32 %s406, %s407
      %s409 = smul.addr %s408, 8
      %s410 = scalar_lea.vmem %s1, %s409
      %s411 = smul.u32 %s23, 8
      %s412 = ssub.s32 %s411, 1
      %p413 = scmp.gt.s32.totalorder %s412, 0
      %s414 = scalar_select %p413, %s412, 0
      %s415 = sadd.s32 %s23, 1
      %s416 = smul.u32 %s415, 8
      %p417 = scmp.lt.s32.totalorder %s416, 15
      %s418 = scalar_select %p417, %s416, 15
      %p419 = scmp.lt.s32.totalorder %s22, 1
      %s420 = scalar_select %p419, %s22, 1
      %p421 = scmp.lt.s32.totalorder %s418, 15
      %s422 = scalar_select %p421, %s418, 15
      %s423 = smul.addr %s422, 3
      %s424 = smul.addr %s420, 48
      %s425 = sadd.s32 %s423, %s424
      %s426 = smul.addr %s425, 8
      %s427 = scalar_lea.vmem %s2, %s426
      %s428 = sadd.s32 %s23, 1
      %s429 = smul.u32 %s428, 8
      %p430 = scmp.lt.s32.totalorder %s429, 15
      %s431 = scalar_select %p430, %s429, 15
      %s432 = smul.u32 8, %s23
      %p433 = scmp.lt.s32.totalorder %s22, 1
      %s434 = scalar_select %p433, %s22, 1
      %p435 = scmp.lt.s32.totalorder %s432, 15
      %s436 = scalar_select %p435, %s432, 15
      %s437 = smul.addr %s436, 2
      %s438 = smul.addr %s434, 32
      %s439 = sadd.s32 %s437, %s438
      %s440 = smul.addr %s439, 8
      %s441 = scalar_lea.vmem %s4, %s440
      %s442 = smul.u32 8, %s23
      %p443 = scmp.lt.s32.totalorder %s22, 1
      %s444 = scalar_select %p443, %s22, 1
      %p445 = scmp.lt.s32.totalorder %s23, 1
      %s446 = scalar_select %p445, %s23, 1
      %s447 = smul.addr %s444, 2
      %s448 = sadd.s32 %s446, %s447
      %s449 = scalar_lea.vmem %s5, %s448
      %p450 = scmp.lt.s32.totalorder %s22, 1
      %s451 = scalar_select %p450, %s22, 1
      %p452 = scmp.lt.s32.totalorder %s23, 1
      %s453 = scalar_select %p452, %s23, 1
      %s454 = smul.addr %s451, 2
      %s455 = sadd.s32 %s453, %s454
      %s456 = scalar_lea.vmem %s6, %s455
      %p457 = scmp.gt.s32.totalorder %s23, 0
      %s458 = scalar_select %p457, 1, 0
      %s459 = scvt.s32.f32 %s458
      %p460 = scmp.lt.s32.totalorder %s23, 1
      %s461 = scalar_select %p460, 1, 0
      %s462 = scvt.s32.f32 %s461
      %v463 = vld [vmem:[%s410] sm:$0xff]
      %v464 = vld [vmem:[%s410 + $0x8] sm:$0xff]
      %v465 = vld [vmem:[%s410 + $0x10] sm:$0x3]
      %v466 = vstv %s459
      %v467 = vmul.f32 %v463, %v466
      %v468 = vmul.f32 %v464, %v466
      %v469 = vmul.f32 %v465, %v466
      %vm470 = vcmask 31744
      %471 = vst.msk [vmem:[#allocation2] sm:$0xff] %vm470, %v467
      %472 = vst.msk [vmem:[#allocation2 + $0x8] sm:$0xff] %vm470, %v468
      %vm473 = vcmask 25600
      %474 = vst.msk [vmem:[#allocation2 + $0x10] sm:$0x3] %vm473, %v469
      %v475 = vld [vmem:[%s396] sm:$0xff]
      %v476 = vld [vmem:[%s396 + $0x8] sm:$0xff]
      %v477 = vld [vmem:[%s396 + $0x10] sm:$0x3]
      %v478 = vld [vmem:[%s396 + $0x18] sm:$0xff]
      %v479 = vld [vmem:[%s396 + $0x20] sm:$0xff]
      %v480 = vld [vmem:[%s396 + $0x28] sm:$0x3]
      %v481 = vld [vmem:[%s396 + $0x30] sm:$0xff]
      %v482 = vld [vmem:[%s396 + $0x38] sm:$0xff]
      %v483 = vld [vmem:[%s396 + $0x40] sm:$0x3]
      %v484 = vld [vmem:[%s396 + $0x48] sm:$0xff]
      %v485 = vld [vmem:[%s396 + $0x50] sm:$0xff]
      %v486 = vld [vmem:[%s396 + $0x58] sm:$0x3]
      %v487 = vld [vmem:[%s396 + $0x60] sm:$0xff]
      %v488 = vld [vmem:[%s396 + $0x68] sm:$0xff]
      %v489 = vld [vmem:[%s396 + $0x70] sm:$0x3]
      %v490 = vld [vmem:[%s396 + $0x78] sm:$0xff]
      %v491 = vld [vmem:[%s396 + $0x80] sm:$0xff]
      %v492 = vld [vmem:[%s396 + $0x88] sm:$0x3]
      %v493 = vld [vmem:[%s396 + $0x90] sm:$0xff]
      %v494 = vld [vmem:[%s396 + $0x98] sm:$0xff]
      %v495 = vld [vmem:[%s396 + $0xa0] sm:$0x3]
      %v496 = vld [vmem:[%s396 + $0xa8] sm:$0xff]
      %v497 = vld [vmem:[%s396 + $0xb0] sm:$0xff]
      %v498 = vld [vmem:[%s396 + $0xb8] sm:$0x3]
      %s499 = scalar_lea.vmem [#allocation2], 24
      %500 = vst.msk [vmem:[%s499] sm:$0xff] %vm470, %v475
      %501 = vst.msk [vmem:[%s499 + $0x8] sm:$0xff] %vm470, %v476
      %502 = vst.msk [vmem:[%s499 + $0x10] sm:$0x3] %vm473, %v477
      %503 = vst.msk [vmem:[%s499 + $0x18] sm:$0xff] %vm470, %v478
      %504 = vst.msk [vmem:[%s499 + $0x20] sm:$0xff] %vm470, %v479
      %505 = vst.msk [vmem:[%s499 + $0x28] sm:$0x3] %vm473, %v480
      %506 = vst.msk [vmem:[%s499 + $0x30] sm:$0xff] %vm470, %v481
      %507 = vst.msk [vmem:[%s499 + $0x38] sm:$0xff] %vm470, %v482
      %508 = vst.msk [vmem:[%s499 + $0x40] sm:$0x3] %vm473, %v483
      %509 = vst.msk [vmem:[%s499 + $0x48] sm:$0xff] %vm470, %v484
      %510 = vst.msk [vmem:[%s499 + $0x50] sm:$0xff] %vm470, %v485
      %511 = vst.msk [vmem:[%s499 + $0x58] sm:$0x3] %vm473, %v486
      %512 = vst.msk [vmem:[%s499 + $0x60] sm:$0xff] %vm470, %v487
      %513 = vst.msk [vmem:[%s499 + $0x68] sm:$0xff] %vm470, %v488
      %514 = vst.msk [vmem:[%s499 + $0x70] sm:$0x3] %vm473, %v489
      %515 = vst.msk [vmem:[%s499 + $0x78] sm:$0xff] %vm470, %v490
      %516 = vst.msk [vmem:[%s499 + $0x80] sm:$0xff] %vm470, %v491
      %517 = vst.msk [vmem:[%s499 + $0x88] sm:$0x3] %vm473, %v492
      %518 = vst.msk [vmem:[%s499 + $0x90] sm:$0xff] %vm470, %v493
      %519 = vst.msk [vmem:[%s499 + $0x98] sm:$0xff] %vm470, %v494
      %520 = vst.msk [vmem:[%s499 + $0xa0] sm:$0x3] %vm473, %v495
      %521 = vst.msk [vmem:[%s499 + $0xa8] sm:$0xff] %vm470, %v496
      %522 = vst.msk [vmem:[%s499 + $0xb0] sm:$0xff] %vm470, %v497
      %523 = vst.msk [vmem:[%s499 + $0xb8] sm:$0x3] %vm473, %v498
      %v524 = vld [vmem:[%s427] sm:$0xff]
      %v525 = vld [vmem:[%s427 + $0x8] sm:$0xff]
      %v526 = vld [vmem:[%s427 + $0x10] sm:$0x3]
      %v527 = vstv %s462
      %v528 = vmul.f32 %v524, %v527
      %v529 = vmul.f32 %v525, %v527
      %v530 = vmul.f32 %v526, %v527
      %s531 = scalar_lea.vmem [#allocation2], 216
      %532 = vst.msk [vmem:[%s531] sm:$0xff] %vm470, %v528
      %533 = vst.msk [vmem:[%s531 + $0x8] sm:$0xff] %vm470, %v529
      %534 = vst.msk [vmem:[%s531 + $0x10] sm:$0x3] %vm473, %v530
      %v535 = vld [vmem:[#allocation2] sm:$0xff]
      %v536 = vld [vmem:[#allocation2 + $0x8] sm:$0xff]
      %v537 = vld [vmem:[#allocation2 + $0x18] sm:$0xff]
      %v538 = vld [vmem:[#allocation2 + $0x20] sm:$0xff]
      %v539 = vld [vmem:[#allocation2 + $0x30] sm:$0xff]
      %v540 = vld [vmem:[#allocation2 + $0x38] sm:$0xff]
      %v541 = vld [vmem:[#allocation2 + $0x48] sm:$0xff]
      %v542 = vld [vmem:[#allocation2 + $0x50] sm:$0xff]
      %v543 = vld [vmem:[#allocation2 + $0x60] sm:$0xff]
      %v544 = vld [vmem:[#allocation2 + $0x68] sm:$0xff]
      %v545 = vld [vmem:[#allocation2 + $0x78] sm:$0xff]
      %v546 = vld [vmem:[#allocation2 + $0x80] sm:$0xff]
      %v547 = vld [vmem:[#allocation2 + $0x90] sm:$0xff]
      %v548 = vld [vmem:[#allocation2 + $0x98] sm:$0xff]
      %v549 = vld [vmem:[#allocation2 + $0xa8] sm:$0xff]
      %v550 = vld [vmem:[#allocation2 + $0xb0] sm:$0xff]
      %551 = vst.msk [vmem:[#allocation3] sm:$0xff] %vm470, %v535
      %552 = vst.msk [vmem:[#allocation3 + $0x8] sm:$0xff] %vm470, %v536
      %553 = vst.msk [vmem:[#allocation3 + $0x10] sm:$0xff] %vm470, %v537
      %554 = vst.msk [vmem:[#allocation3 + $0x18] sm:$0xff] %vm470, %v538
      %555 = vst.msk [vmem:[#allocation3 + $0x20] sm:$0xff] %vm470, %v539
      %556 = vst.msk [vmem:[#allocation3 + $0x28] sm:$0xff] %vm470, %v540
      %557 = vst.msk [vmem:[#allocation3 + $0x30] sm:$0xff] %vm470, %v541
      %558 = vst.msk [vmem:[#allocation3 + $0x38] sm:$0xff] %vm470, %v542
      %559 = vst.msk [vmem:[#allocation3 + $0x40] sm:$0xff] %vm470, %v543
      %560 = vst.msk [vmem:[#allocation3 + $0x48] sm:$0xff] %vm470, %v544
      %561 = vst.msk [vmem:[#allocation3 + $0x50] sm:$0xff] %vm470, %v545
      %562 = vst.msk [vmem:[#allocation3 + $0x58] sm:$0xff] %vm470, %v546
      %563 = vst.msk [vmem:[#allocation3 + $0x60] sm:$0xff] %vm470, %v547
      %564 = vst.msk [vmem:[#allocation3 + $0x68] sm:$0xff] %vm470, %v548
      %565 = vst.msk [vmem:[#allocation3 + $0x70] sm:$0xff] %vm470, %v549
      %566 = vst.msk [vmem:[#allocation3 + $0x78] sm:$0xff] %vm470, %v550
      %v567 = vld [vmem:[#allocation2 + $0x1] sm:$0xff]
      %v568 = vld [vmem:[#allocation2 + $0x9] sm:$0xff]
      %v569 = vld [vmem:[#allocation2 + $0x19] sm:$0xff]
      %v570 = vld [vmem:[#allocation2 + $0x21] sm:$0xff]
      %v571 = vld [vmem:[#allocation2 + $0x31] sm:$0xff]
      %v572 = vld [vmem:[#allocation2 + $0x39] sm:$0xff]
      %v573 = vld [vmem:[#allocation2 + $0x49] sm:$0xff]
      %v574 = vld [vmem:[#allocation2 + $0x51] sm:$0xff]
      %v575 = vld [vmem:[#allocation2 + $0x61] sm:$0xff]
      %v576 = vld [vmem:[#allocation2 + $0x69] sm:$0xff]
      %v577 = vld [vmem:[#allocation2 + $0x79] sm:$0xff]
      %v578 = vld [vmem:[#allocation2 + $0x81] sm:$0xff]
      %v579 = vld [vmem:[#allocation2 + $0x91] sm:$0xff]
      %v580 = vld [vmem:[#allocation2 + $0x99] sm:$0xff]
      %v581 = vld [vmem:[#allocation2 + $0xa9] sm:$0xff]
      %v582 = vld [vmem:[#allocation2 + $0xb1] sm:$0xff]
      %599 = vrot.lane.b32.xlu0 %v567, 4
      %v600 = vpop.permute.xlu0 %599
      %601 = vrot.lane.b32.xlu0 %v568, 4
      %v602 = vpop.permute.xlu0 %601
      %603 = vrot.lane.b32.xlu0 %v569, 4
      %v604 = vpop.permute.xlu0 %603
      %605 = vrot.lane.b32.xlu0 %v570, 4
      %v606 = vpop.permute.xlu0 %605
      %607 = vrot.lane.b32.xlu0 %v571, 4
      %v608 = vpop.permute.xlu0 %607
      %609 = vrot.lane.b32.xlu0 %v572, 4
      %v610 = vpop.permute.xlu0 %609
      %611 = vrot.lane.b32.xlu0 %v573, 4
      %v612 = vpop.permute.xlu0 %611
      %613 = vrot.lane.b32.xlu0 %v574, 4
      %v614 = vpop.permute.xlu0 %613
      %615 = vrot.lane.b32.xlu0 %v575, 4
      %v616 = vpop.permute.xlu0 %615
      %617 = vrot.lane.b32.xlu0 %v576, 4
      %v618 = vpop.permute.xlu0 %617
      %619 = vrot.lane.b32.xlu0 %v577, 4
      %v620 = vpop.permute.xlu0 %619
      %621 = vrot.lane.b32.xlu0 %v578, 4
      %v622 = vpop.permute.xlu0 %621
      %623 = vrot.lane.b32.xlu0 %v579, 4
      %v624 = vpop.permute.xlu0 %623
      %625 = vrot.lane.b32.xlu0 %v580, 4
      %v626 = vpop.permute.xlu0 %625
      %627 = vrot.lane.b32.xlu0 %v581, 4
      %v628 = vpop.permute.xlu0 %627
      %629 = vrot.lane.b32.xlu0 %v582, 4
      %v630 = vpop.permute.xlu0 %629
      %vm647 = vcmask 64544
      %648 = vst.msk [vmem:[#allocation3] sm:$0xff] %vm647, %v600
      %649 = vst.msk [vmem:[#allocation3 + $0x8] sm:$0xff] %vm647, %v602
      %650 = vst.msk [vmem:[#allocation3 + $0x10] sm:$0xff] %vm647, %v604
      %651 = vst.msk [vmem:[#allocation3 + $0x18] sm:$0xff] %vm647, %v606
      %652 = vst.msk [vmem:[#allocation3 + $0x20] sm:$0xff] %vm647, %v608
      %653 = vst.msk [vmem:[#allocation3 + $0x28] sm:$0xff] %vm647, %v610
      %654 = vst.msk [vmem:[#allocation3 + $0x30] sm:$0xff] %vm647, %v612
      %655 = vst.msk [vmem:[#allocation3 + $0x38] sm:$0xff] %vm647, %v614
      %656 = vst.msk [vmem:[#allocation3 + $0x40] sm:$0xff] %vm647, %v616
      %657 = vst.msk [vmem:[#allocation3 + $0x48] sm:$0xff] %vm647, %v618
      %658 = vst.msk [vmem:[#allocation3 + $0x50] sm:$0xff] %vm647, %v620
      %659 = vst.msk [vmem:[#allocation3 + $0x58] sm:$0xff] %vm647, %v622
      %660 = vst.msk [vmem:[#allocation3 + $0x60] sm:$0xff] %vm647, %v624
      %661 = vst.msk [vmem:[#allocation3 + $0x68] sm:$0xff] %vm647, %v626
      %662 = vst.msk [vmem:[#allocation3 + $0x70] sm:$0xff] %vm647, %v628
      %663 = vst.msk [vmem:[#allocation3 + $0x78] sm:$0xff] %vm647, %v630
      %v664 = vld [vmem:[#allocation2 + $0x2] sm:$0xff]
      %v665 = vld [vmem:[#allocation2 + $0xa] sm:$0xff]
      %v666 = vld [vmem:[#allocation2 + $0x1a] sm:$0xff]
      %v667 = vld [vmem:[#allocation2 + $0x22] sm:$0xff]
      %v668 = vld [vmem:[#allocation2 + $0x32] sm:$0xff]
      %v669 = vld [vmem:[#allocation2 + $0x3a] sm:$0xff]
      %v670 = vld [vmem:[#allocation2 + $0x4a] sm:$0xff]
      %v671 = vld [vmem:[#allocation2 + $0x52] sm:$0xff]
      %v672 = vld [vmem:[#allocation2 + $0x62] sm:$0xff]
      %v673 = vld [vmem:[#allocation2 + $0x6a] sm:$0xff]
      %v674 = vld [vmem:[#allocation2 + $0x7a] sm:$0xff]
      %v675 = vld [vmem:[#allocation2 + $0x82] sm:$0xff]
      %v676 = vld [vmem:[#allocation2 + $0x92] sm:$0xff]
      %v677 = vld [vmem:[#allocation2 + $0x9a] sm:$0xff]
      %v678 = vld [vmem:[#allocation2 + $0xaa] sm:$0xff]
      %v679 = vld [vmem:[#allocation2 + $0xb2] sm:$0xff]
      %696 = vrot.lane.b32.xlu0 %v664, 8
      %v697 = vpop.permute.xlu0 %696
      %698 = vrot.lane.b32.xlu0 %v665, 8
      %v699 = vpop.permute.xlu0 %698
      %700 = vrot.lane.b32.xlu0 %v666, 8
      %v701 = vpop.permute.xlu0 %700
      %702 = vrot.lane.b32.xlu0 %v667, 8
      %v703 = vpop.permute.xlu0 %702
      %704 = vrot.lane.b32.xlu0 %v668, 8
      %v705 = vpop.permute.xlu0 %704
      %706 = vrot.lane.b32.xlu0 %v669, 8
      %v707 = vpop.permute.xlu0 %706
      %708 = vrot.lane.b32.xlu0 %v670, 8
      %v709 = vpop.permute.xlu0 %708
      %710 = vrot.lane.b32.xlu0 %v671, 8
      %v711 = vpop.permute.xlu0 %710
      %712 = vrot.lane.b32.xlu0 %v672, 8
      %v713 = vpop.permute.xlu0 %712
      %714 = vrot.lane.b32.xlu0 %v673, 8
      %v715 = vpop.permute.xlu0 %714
      %716 = vrot.lane.b32.xlu0 %v674, 8
      %v717 = vpop.permute.xlu0 %716
      %718 = vrot.lane.b32.xlu0 %v675, 8
      %v719 = vpop.permute.xlu0 %718
      %720 = vrot.lane.b32.xlu0 %v676, 8
      %v721 = vpop.permute.xlu0 %720
      %722 = vrot.lane.b32.xlu0 %v677, 8
      %v723 = vpop.permute.xlu0 %722
      %724 = vrot.lane.b32.xlu0 %v678, 8
      %v725 = vpop.permute.xlu0 %724
      %726 = vrot.lane.b32.xlu0 %v679, 8
      %v727 = vpop.permute.xlu0 %726
      %vm744 = vcmask 97344
      %745 = vst.msk [vmem:[#allocation3] sm:$0xff] %vm744, %v697
      %746 = vst.msk [vmem:[#allocation3 + $0x8] sm:$0xff] %vm744, %v699
      %747 = vst.msk [vmem:[#allocation3 + $0x10] sm:$0xff] %vm744, %v701
      %748 = vst.msk [vmem:[#allocation3 + $0x18] sm:$0xff] %vm744, %v703
      %749 = vst.msk [vmem:[#allocation3 + $0x20] sm:$0xff] %vm744, %v705
      %750 = vst.msk [vmem:[#allocation3 + $0x28] sm:$0xff] %vm744, %v707
      %751 = vst.msk [vmem:[#allocation3 + $0x30] sm:$0xff] %vm744, %v709
      %752 = vst.msk [vmem:[#allocation3 + $0x38] sm:$0xff] %vm744, %v711
      %753 = vst.msk [vmem:[#allocation3 + $0x40] sm:$0xff] %vm744, %v713
      %754 = vst.msk [vmem:[#allocation3 + $0x48] sm:$0xff] %vm744, %v715
      %755 = vst.msk [vmem:[#allocation3 + $0x50] sm:$0xff] %vm744, %v717
      %756 = vst.msk [vmem:[#allocation3 + $0x58] sm:$0xff] %vm744, %v719
      %757 = vst.msk [vmem:[#allocation3 + $0x60] sm:$0xff] %vm744, %v721
      %758 = vst.msk [vmem:[#allocation3 + $0x68] sm:$0xff] %vm744, %v723
      %759 = vst.msk [vmem:[#allocation3 + $0x70] sm:$0xff] %vm744, %v725
      %760 = vst.msk [vmem:[#allocation3 + $0x78] sm:$0xff] %vm744, %v727
      %v761 = vld [vmem:[%s499] sm:$0xff]
      %v762 = vld [vmem:[%s499 + $0x8] sm:$0xff]
      %v763 = vld [vmem:[%s499 + $0x18] sm:$0xff]
      %v764 = vld [vmem:[%s499 + $0x20] sm:$0xff]
      %v765 = vld [vmem:[%s499 + $0x30] sm:$0xff]
      %v766 = vld [vmem:[%s499 + $0x38] sm:$0xff]
      %v767 = vld [vmem:[%s499 + $0x48] sm:$0xff]
      %v768 = vld [vmem:[%s499 + $0x50] sm:$0xff]
      %v769 = vld [vmem:[%s499 + $0x60] sm:$0xff]
      %v770 = vld [vmem:[%s499 + $0x68] sm:$0xff]
      %v771 = vld [vmem:[%s499 + $0x78] sm:$0xff]
      %v772 = vld [vmem:[%s499 + $0x80] sm:$0xff]
      %v773 = vld [vmem:[%s499 + $0x90] sm:$0xff]
      %v774 = vld [vmem:[%s499 + $0x98] sm:$0xff]
      %v775 = vld [vmem:[%s499 + $0xa8] sm:$0xff]
      %v776 = vld [vmem:[%s499 + $0xb0] sm:$0xff]
      %793 = vrot.lane.b32.xlu0 %v761, 12
      %v794 = vpop.permute.xlu0 %793
      %795 = vrot.lane.b32.xlu0 %v762, 12
      %v796 = vpop.permute.xlu0 %795
      %797 = vrot.lane.b32.xlu0 %v763, 12
      %v798 = vpop.permute.xlu0 %797
      %799 = vrot.lane.b32.xlu0 %v764, 12
      %v800 = vpop.permute.xlu0 %799
      %801 = vrot.lane.b32.xlu0 %v765, 12
      %v802 = vpop.permute.xlu0 %801
      %803 = vrot.lane.b32.xlu0 %v766, 12
      %v804 = vpop.permute.xlu0 %803
      %805 = vrot.lane.b32.xlu0 %v767, 12
      %v806 = vpop.permute.xlu0 %805
      %807 = vrot.lane.b32.xlu0 %v768, 12
      %v808 = vpop.permute.xlu0 %807
      %809 = vrot.lane.b32.xlu0 %v769, 12
      %v810 = vpop.permute.xlu0 %809
      %811 = vrot.lane.b32.xlu0 %v770, 12
      %v812 = vpop.permute.xlu0 %811
      %813 = vrot.lane.b32.xlu0 %v771, 12
      %v814 = vpop.permute.xlu0 %813
      %815 = vrot.lane.b32.xlu0 %v772, 12
      %v816 = vpop.permute.xlu0 %815
      %817 = vrot.lane.b32.xlu0 %v773, 12
      %v818 = vpop.permute.xlu0 %817
      %819 = vrot.lane.b32.xlu0 %v774, 12
      %v820 = vpop.permute.xlu0 %819
      %821 = vrot.lane.b32.xlu0 %v775, 12
      %v822 = vpop.permute.xlu0 %821
      %823 = vrot.lane.b32.xlu0 %v776, 12
      %v824 = vpop.permute.xlu0 %823
      %vm841 = vcmask 130144
      %842 = vst.msk [vmem:[#allocation3] sm:$0xff] %vm841, %v794
      %843 = vst.msk [vmem:[#allocation3 + $0x8] sm:$0xff] %vm841, %v796
      %844 = vst.msk [vmem:[#allocation3 + $0x10] sm:$0xff] %vm841, %v798
      %845 = vst.msk [vmem:[#allocation3 + $0x18] sm:$0xff] %vm841, %v800
      %846 = vst.msk [vmem:[#allocation3 + $0x20] sm:$0xff] %vm841, %v802
      %847 = vst.msk [vmem:[#allocation3 + $0x28] sm:$0xff] %vm841, %v804
      %848 = vst.msk [vmem:[#allocation3 + $0x30] sm:$0xff] %vm841, %v806
      %849 = vst.msk [vmem:[#allocation3 + $0x38] sm:$0xff] %vm841, %v808
      %850 = vst.msk [vmem:[#allocation3 + $0x40] sm:$0xff] %vm841, %v810
      %851 = vst.msk [vmem:[#allocation3 + $0x48] sm:$0xff] %vm841, %v812
      %852 = vst.msk [vmem:[#allocation3 + $0x50] sm:$0xff] %vm841, %v814
      %853 = vst.msk [vmem:[#allocation3 + $0x58] sm:$0xff] %vm841, %v816
      %854 = vst.msk [vmem:[#allocation3 + $0x60] sm:$0xff] %vm841, %v818
      %855 = vst.msk [vmem:[#allocation3 + $0x68] sm:$0xff] %vm841, %v820
      %856 = vst.msk [vmem:[#allocation3 + $0x70] sm:$0xff] %vm841, %v822
      %857 = vst.msk [vmem:[#allocation3 + $0x78] sm:$0xff] %vm841, %v824
      %v858 = vld [vmem:[%s499 + $0x1] sm:$0xff]
      %v859 = vld [vmem:[%s499 + $0x9] sm:$0xff]
      %v860 = vld [vmem:[%s499 + $0x19] sm:$0xff]
      %v861 = vld [vmem:[%s499 + $0x21] sm:$0xff]
      %v862 = vld [vmem:[%s499 + $0x31] sm:$0xff]
      %v863 = vld [vmem:[%s499 + $0x39] sm:$0xff]
      %v864 = vld [vmem:[%s499 + $0x49] sm:$0xff]
      %v865 = vld [vmem:[%s499 + $0x51] sm:$0xff]
      %v866 = vld [vmem:[%s499 + $0x61] sm:$0xff]
      %v867 = vld [vmem:[%s499 + $0x69] sm:$0xff]
      %v868 = vld [vmem:[%s499 + $0x79] sm:$0xff]
      %v869 = vld [vmem:[%s499 + $0x81] sm:$0xff]
      %v870 = vld [vmem:[%s499 + $0x91] sm:$0xff]
      %v871 = vld [vmem:[%s499 + $0x99] sm:$0xff]
      %v872 = vld [vmem:[%s499 + $0xa9] sm:$0xff]
      %v873 = vld [vmem:[%s499 + $0xb1] sm:$0xff]
      %890 = vrot.lane.b32.xlu0 %v858, 16
      %v891 = vpop.permute.xlu0 %890
      %892 = vrot.lane.b32.xlu0 %v859, 16
      %v893 = vpop.permute.xlu0 %892
      %894 = vrot.lane.b32.xlu0 %v860, 16
      %v895 = vpop.permute.xlu0 %894
      %896 = vrot.lane.b32.xlu0 %v861, 16
      %v897 = vpop.permute.xlu0 %896
      %898 = vrot.lane.b32.xlu0 %v862, 16
      %v899 = vpop.permute.xlu0 %898
      %900 = vrot.lane.b32.xlu0 %v863, 16
      %v901 = vpop.permute.xlu0 %900
      %902 = vrot.lane.b32.xlu0 %v864, 16
      %v903 = vpop.permute.xlu0 %902
      %904 = vrot.lane.b32.xlu0 %v865, 16
      %v905 = vpop.permute.xlu0 %904
      %906 = vrot.lane.b32.xlu0 %v866, 16
      %v907 = vpop.permute.xlu0 %906
      %908 = vrot.lane.b32.xlu0 %v867, 16
      %v909 = vpop.permute.xlu0 %908
      %910 = vrot.lane.b32.xlu0 %v868, 16
      %v911 = vpop.permute.xlu0 %910
      %912 = vrot.lane.b32.xlu0 %v869, 16
      %v913 = vpop.permute.xlu0 %912
      %914 = vrot.lane.b32.xlu0 %v870, 16
      %v915 = vpop.permute.xlu0 %914
      %916 = vrot.lane.b32.xlu0 %v871, 16
      %v917 = vpop.permute.xlu0 %916
      %918 = vrot.lane.b32.xlu0 %v872, 16
      %v919 = vpop.permute.xlu0 %918
      %920 = vrot.lane.b32.xlu0 %v873, 16
      %v921 = vpop.permute.xlu0 %920
      %vm938 = vcmask 162944
      %939 = vst.msk [vmem:[#allocation3] sm:$0xff] %vm938, %v891
      %940 = vst.msk [vmem:[#allocation3 + $0x8] sm:$0xff] %vm938, %v893
      %941 = vst.msk [vmem:[#allocation3 + $0x10] sm:$0xff] %vm938, %v895
      %942 = vst.msk [vmem:[#allocation3 + $0x18] sm:$0xff] %vm938, %v897
      %943 = vst.msk [vmem:[#allocation3 + $0x20] sm:$0xff] %vm938, %v899
      %944 = vst.msk [vmem:[#allocation3 + $0x28] sm:$0xff] %vm938, %v901
      %945 = vst.msk [vmem:[#allocation3 + $0x30] sm:$0xff] %vm938, %v903
      %946 = vst.msk [vmem:[#allocation3 + $0x38] sm:$0xff] %vm938, %v905
      %947 = vst.msk [vmem:[#allocation3 + $0x40] sm:$0xff] %vm938, %v907
      %948 = vst.msk [vmem:[#allocation3 + $0x48] sm:$0xff] %vm938, %v909
      %949 = vst.msk [vmem:[#allocation3 + $0x50] sm:$0xff] %vm938, %v911
      %950 = vst.msk [vmem:[#allocation3 + $0x58] sm:$0xff] %vm938, %v913
      %951 = vst.msk [vmem:[#allocation3 + $0x60] sm:$0xff] %vm938, %v915
      %952 = vst.msk [vmem:[#allocation3 + $0x68] sm:$0xff] %vm938, %v917
      %953 = vst.msk [vmem:[#allocation3 + $0x70] sm:$0xff] %vm938, %v919
      %954 = vst.msk [vmem:[#allocation3 + $0x78] sm:$0xff] %vm938, %v921
      %v955 = vld [vmem:[%s499 + $0x2] sm:$0xff]
      %v956 = vld [vmem:[%s499 + $0xa] sm:$0xff]
      %v957 = vld [vmem:[%s499 + $0x1a] sm:$0xff]
      %v958 = vld [vmem:[%s499 + $0x22] sm:$0xff]
      %v959 = vld [vmem:[%s499 + $0x32] sm:$0xff]
      %v960 = vld [vmem:[%s499 + $0x3a] sm:$0xff]
      %v961 = vld [vmem:[%s499 + $0x4a] sm:$0xff]
      %v962 = vld [vmem:[%s499 + $0x52] sm:$0xff]
      %v963 = vld [vmem:[%s499 + $0x62] sm:$0xff]
      %v964 = vld [vmem:[%s499 + $0x6a] sm:$0xff]
      %v965 = vld [vmem:[%s499 + $0x7a] sm:$0xff]
      %v966 = vld [vmem:[%s499 + $0x82] sm:$0xff]
      %v967 = vld [vmem:[%s499 + $0x92] sm:$0xff]
      %v968 = vld [vmem:[%s499 + $0x9a] sm:$0xff]
      %v969 = vld [vmem:[%s499 + $0xaa] sm:$0xff]
      %v970 = vld [vmem:[%s499 + $0xb2] sm:$0xff]
      %987 = vrot.lane.b32.xlu0 %v955, 20
      %v988 = vpop.permute.xlu0 %987
      %989 = vrot.lane.b32.xlu0 %v956, 20
      %v990 = vpop.permute.xlu0 %989
      %991 = vrot.lane.b32.xlu0 %v957, 20
      %v992 = vpop.permute.xlu0 %991
      %993 = vrot.lane.b32.xlu0 %v958, 20
      %v994 = vpop.permute.xlu0 %993
      %995 = vrot.lane.b32.xlu0 %v959, 20
      %v996 = vpop.permute.xlu0 %995
      %997 = vrot.lane.b32.xlu0 %v960, 20
      %v998 = vpop.permute.xlu0 %997
      %999 = vrot.lane.b32.xlu0 %v961, 20
      %v1000 = vpop.permute.xlu0 %999
      %1001 = vrot.lane.b32.xlu0 %v962, 20
      %v1002 = vpop.permute.xlu0 %1001
      %1003 = vrot.lane.b32.xlu0 %v963, 20
      %v1004 = vpop.permute.xlu0 %1003
      %1005 = vrot.lane.b32.xlu0 %v964, 20
      %v1006 = vpop.permute.xlu0 %1005
      %1007 = vrot.lane.b32.xlu0 %v965, 20
      %v1008 = vpop.permute.xlu0 %1007
      %1009 = vrot.lane.b32.xlu0 %v966, 20
      %v1010 = vpop.permute.xlu0 %1009
      %1011 = vrot.lane.b32.xlu0 %v967, 20
      %v1012 = vpop.permute.xlu0 %1011
      %1013 = vrot.lane.b32.xlu0 %v968, 20
      %v1014 = vpop.permute.xlu0 %1013
      %1015 = vrot.lane.b32.xlu0 %v969, 20
      %v1016 = vpop.permute.xlu0 %1015
      %1017 = vrot.lane.b32.xlu0 %v970, 20
      %v1018 = vpop.permute.xlu0 %1017
      %vm1035 = vcmask 195744
      %1036 = vst.msk [vmem:[#allocation3] sm:$0xff] %vm1035, %v988
      %1037 = vst.msk [vmem:[#allocation3 + $0x8] sm:$0xff] %vm1035, %v990
      %1038 = vst.msk [vmem:[#allocation3 + $0x10] sm:$0xff] %vm1035, %v992
      %1039 = vst.msk [vmem:[#allocation3 + $0x18] sm:$0xff] %vm1035, %v994
      %1040 = vst.msk [vmem:[#allocation3 + $0x20] sm:$0xff] %vm1035, %v996
      %1041 = vst.msk [vmem:[#allocation3 + $0x28] sm:$0xff] %vm1035, %v998
      %1042 = vst.msk [vmem:[#allocation3 + $0x30] sm:$0xff] %vm1035, %v1000
      %1043 = vst.msk [vmem:[#allocation3 + $0x38] sm:$0xff] %vm1035, %v1002
      %1044 = vst.msk [vmem:[#allocation3 + $0x40] sm:$0xff] %vm1035, %v1004
      %1045 = vst.msk [vmem:[#allocation3 + $0x48] sm:$0xff] %vm1035, %v1006
      %1046 = vst.msk [vmem:[#allocation3 + $0x50] sm:$0xff] %vm1035, %v1008
      %1047 = vst.msk [vmem:[#allocation3 + $0x58] sm:$0xff] %vm1035, %v1010
      %1048 = vst.msk [vmem:[#allocation3 + $0x60] sm:$0xff] %vm1035, %v1012
      %1049 = vst.msk [vmem:[#allocation3 + $0x68] sm:$0xff] %vm1035, %v1014
      %1050 = vst.msk [vmem:[#allocation3 + $0x70] sm:$0xff] %vm1035, %v1016
      %1051 = vst.msk [vmem:[#allocation3 + $0x78] sm:$0xff] %vm1035, %v1018
      %s1052 = scalar_lea.vmem [#allocation2], 48
      %v1053 = vld [vmem:[%s1052] sm:$0xff]
      %v1054 = vld [vmem:[%s1052 + $0x8] sm:$0xff]
      %v1055 = vld [vmem:[%s1052 + $0x18] sm:$0xff]
      %v1056 = vld [vmem:[%s1052 + $0x20] sm:$0xff]
      %v1057 = vld [vmem:[%s1052 + $0x30] sm:$0xff]
      %v1058 = vld [vmem:[%s1052 + $0x38] sm:$0xff]
      %v1059 = vld [vmem:[%s1052 + $0x48] sm:$0xff]
      %v1060 = vld [vmem:[%s1052 + $0x50] sm:$0xff]
      %v1061 = vld [vmem:[%s1052 + $0x60] sm:$0xff]
      %v1062 = vld [vmem:[%s1052 + $0x68] sm:$0xff]
      %v1063 = vld [vmem:[%s1052 + $0x78] sm:$0xff]
      %v1064 = vld [vmem:[%s1052 + $0x80] sm:$0xff]
      %v1065 = vld [vmem:[%s1052 + $0x90] sm:$0xff]
      %v1066 = vld [vmem:[%s1052 + $0x98] sm:$0xff]
      %v1067 = vld [vmem:[%s1052 + $0xa8] sm:$0xff]
      %v1068 = vld [vmem:[%s1052 + $0xb0] sm:$0xff]
      %1085 = vrot.lane.b32.xlu0 %v1053, 24
      %v1086 = vpop.permute.xlu0 %1085
      %1087 = vrot.lane.b32.xlu0 %v1054, 24
      %v1088 = vpop.permute.xlu0 %1087
      %1089 = vrot.lane.b32.xlu0 %v1055, 24
      %v1090 = vpop.permute.xlu0 %1089
      %1091 = vrot.lane.b32.xlu0 %v1056, 24
      %v1092 = vpop.permute.xlu0 %1091
      %1093 = vrot.lane.b32.xlu0 %v1057, 24
      %v1094 = vpop.permute.xlu0 %1093
      %1095 = vrot.lane.b32.xlu0 %v1058, 24
      %v1096 = vpop.permute.xlu0 %1095
      %1097 = vrot.lane.b32.xlu0 %v1059, 24
      %v1098 = vpop.permute.xlu0 %1097
      %1099 = vrot.lane.b32.xlu0 %v1060, 24
      %v1100 = vpop.permute.xlu0 %1099
      %1101 = vrot.lane.b32.xlu0 %v1061, 24
      %v1102 = vpop.permute.xlu0 %1101
      %1103 = vrot.lane.b32.xlu0 %v1062, 24
      %v1104 = vpop.permute.xlu0 %1103
      %1105 = vrot.lane.b32.xlu0 %v1063, 24
      %v1106 = vpop.permute.xlu0 %1105
      %1107 = vrot.lane.b32.xlu0 %v1064, 24
      %v1108 = vpop.permute.xlu0 %1107
      %1109 = vrot.lane.b32.xlu0 %v1065, 24
      %v1110 = vpop.permute.xlu0 %1109
      %1111 = vrot.lane.b32.xlu0 %v1066, 24
      %v1112 = vpop.permute.xlu0 %1111
      %1113 = vrot.lane.b32.xlu0 %v1067, 24
      %v1114 = vpop.permute.xlu0 %1113
      %1115 = vrot.lane.b32.xlu0 %v1068, 24
      %v1116 = vpop.permute.xlu0 %1115
      %vm1133 = vcmask 228544
      %1134 = vst.msk [vmem:[#allocation3] sm:$0xff] %vm1133, %v1086
      %1135 = vst.msk [vmem:[#allocation3 + $0x8] sm:$0xff] %vm1133, %v1088
      %1136 = vst.msk [vmem:[#allocation3 + $0x10] sm:$0xff] %vm1133, %v1090
      %1137 = vst.msk [vmem:[#allocation3 + $0x18] sm:$0xff] %vm1133, %v1092
      %1138 = vst.msk [vmem:[#allocation3 + $0x20] sm:$0xff] %vm1133, %v1094
      %1139 = vst.msk [vmem:[#allocation3 + $0x28] sm:$0xff] %vm1133, %v1096
      %1140 = vst.msk [vmem:[#allocation3 + $0x30] sm:$0xff] %vm1133, %v1098
      %1141 = vst.msk [vmem:[#allocation3 + $0x38] sm:$0xff] %vm1133, %v1100
      %1142 = vst.msk [vmem:[#allocation3 + $0x40] sm:$0xff] %vm1133, %v1102
      %1143 = vst.msk [vmem:[#allocation3 + $0x48] sm:$0xff] %vm1133, %v1104
      %1144 = vst.msk [vmem:[#allocation3 + $0x50] sm:$0xff] %vm1133, %v1106
      %1145 = vst.msk [vmem:[#allocation3 + $0x58] sm:$0xff] %vm1133, %v1108
      %1146 = vst.msk [vmem:[#allocation3 + $0x60] sm:$0xff] %vm1133, %v1110
      %1147 = vst.msk [vmem:[#allocation3 + $0x68] sm:$0xff] %vm1133, %v1112
      %1148 = vst.msk [vmem:[#allocation3 + $0x70] sm:$0xff] %vm1133, %v1114
      %1149 = vst.msk [vmem:[#allocation3 + $0x78] sm:$0xff] %vm1133, %v1116
      %v1150 = vld [vmem:[%s1052 + $0x1] sm:$0xff]
      %v1151 = vld [vmem:[%s1052 + $0x9] sm:$0xff]
      %v1152 = vld [vmem:[%s1052 + $0x19] sm:$0xff]
      %v1153 = vld [vmem:[%s1052 + $0x21] sm:$0xff]
      %v1154 = vld [vmem:[%s1052 + $0x31] sm:$0xff]
      %v1155 = vld [vmem:[%s1052 + $0x39] sm:$0xff]
      %v1156 = vld [vmem:[%s1052 + $0x49] sm:$0xff]
      %v1157 = vld [vmem:[%s1052 + $0x51] sm:$0xff]
      %v1158 = vld [vmem:[%s1052 + $0x61] sm:$0xff]
      %v1159 = vld [vmem:[%s1052 + $0x69] sm:$0xff]
      %v1160 = vld [vmem:[%s1052 + $0x79] sm:$0xff]
      %v1161 = vld [vmem:[%s1052 + $0x81] sm:$0xff]
      %v1162 = vld [vmem:[%s1052 + $0x91] sm:$0xff]
      %v1163 = vld [vmem:[%s1052 + $0x99] sm:$0xff]
      %v1164 = vld [vmem:[%s1052 + $0xa9] sm:$0xff]
      %v1165 = vld [vmem:[%s1052 + $0xb1] sm:$0xff]
      %1182 = vrot.lane.b32.xlu0 %v1150, 28
      %v1183 = vpop.permute.xlu0 %1182
      %1184 = vrot.lane.b32.xlu0 %v1151, 28
      %v1185 = vpop.permute.xlu0 %1184
      %1186 = vrot.lane.b32.xlu0 %v1152, 28
      %v1187 = vpop.permute.xlu0 %1186
      %1188 = vrot.lane.b32.xlu0 %v1153, 28
      %v1189 = vpop.permute.xlu0 %1188
      %1190 = vrot.lane.b32.xlu0 %v1154, 28
      %v1191 = vpop.permute.xlu0 %1190
      %1192 = vrot.lane.b32.xlu0 %v1155, 28
      %v1193 = vpop.permute.xlu0 %1192
      %1194 = vrot.lane.b32.xlu0 %v1156, 28
      %v1195 = vpop.permute.xlu0 %1194
      %1196 = vrot.lane.b32.xlu0 %v1157, 28
      %v1197 = vpop.permute.xlu0 %1196
      %1198 = vrot.lane.b32.xlu0 %v1158, 28
      %v1199 = vpop.permute.xlu0 %1198
      %1200 = vrot.lane.b32.xlu0 %v1159, 28
      %v1201 = vpop.permute.xlu0 %1200
      %1202 = vrot.lane.b32.xlu0 %v1160, 28
      %v1203 = vpop.permute.xlu0 %1202
      %1204 = vrot.lane.b32.xlu0 %v1161, 28
      %v1205 = vpop.permute.xlu0 %1204
      %1206 = vrot.lane.b32.xlu0 %v1162, 28
      %v1207 = vpop.permute.xlu0 %1206
      %1208 = vrot.lane.b32.xlu0 %v1163, 28
      %v1209 = vpop.permute.xlu0 %1208
      %1210 = vrot.lane.b32.xlu0 %v1164, 28
      %v1211 = vpop.permute.xlu0 %1210
      %1212 = vrot.lane.b32.xlu0 %v1165, 28
      %v1213 = vpop.permute.xlu0 %1212
      %vm1230 = vcmask 261344
      %1231 = vst.msk [vmem:[#allocation3] sm:$0xff] %vm1230, %v1183
      %1232 = vst.msk [vmem:[#allocation3 + $0x8] sm:$0xff] %vm1230, %v1185
      %1233 = vst.msk [vmem:[#allocation3 + $0x10] sm:$0xff] %vm1230, %v1187
      %1234 = vst.msk [vmem:[#allocation3 + $0x18] sm:$0xff] %vm1230, %v1189
      %1235 = vst.msk [vmem:[#allocation3 + $0x20] sm:$0xff] %vm1230, %v1191
      %1236 = vst.msk [vmem:[#allocation3 + $0x28] sm:$0xff] %vm1230, %v1193
      %1237 = vst.msk [vmem:[#allocation3 + $0x30] sm:$0xff] %vm1230, %v1195
      %1238 = vst.msk [vmem:[#allocation3 + $0x38] sm:$0xff] %vm1230, %v1197
      %1239 = vst.msk [vmem:[#allocation3 + $0x40] sm:$0xff] %vm1230, %v1199
      %1240 = vst.msk [vmem:[#allocation3 + $0x48] sm:$0xff] %vm1230, %v1201
      %1241 = vst.msk [vmem:[#allocation3 + $0x50] sm:$0xff] %vm1230, %v1203
      %1242 = vst.msk [vmem:[#allocation3 + $0x58] sm:$0xff] %vm1230, %v1205
      %1243 = vst.msk [vmem:[#allocation3 + $0x60] sm:$0xff] %vm1230, %v1207
      %1244 = vst.msk [vmem:[#allocation3 + $0x68] sm:$0xff] %vm1230, %v1209
      %1245 = vst.msk [vmem:[#allocation3 + $0x70] sm:$0xff] %vm1230, %v1211
      %1246 = vst.msk [vmem:[#allocation3 + $0x78] sm:$0xff] %vm1230, %v1213
      %v1247 = vld [vmem:[%s1052 + $0x2] sm:$0xff]
      %v1248 = vld [vmem:[%s1052 + $0xa] sm:$0xff]
      %v1249 = vld [vmem:[%s1052 + $0x1a] sm:$0xff]
      %v1250 = vld [vmem:[%s1052 + $0x22] sm:$0xff]
      %v1251 = vld [vmem:[%s1052 + $0x32] sm:$0xff]
      %v1252 = vld [vmem:[%s1052 + $0x3a] sm:$0xff]
      %v1253 = vld [vmem:[%s1052 + $0x4a] sm:$0xff]
      %v1254 = vld [vmem:[%s1052 + $0x52] sm:$0xff]
      %v1255 = vld [vmem:[%s1052 + $0x62] sm:$0xff]
      %v1256 = vld [vmem:[%s1052 + $0x6a] sm:$0xff]
      %v1257 = vld [vmem:[%s1052 + $0x7a] sm:$0xff]
      %v1258 = vld [vmem:[%s1052 + $0x82] sm:$0xff]
      %v1259 = vld [vmem:[%s1052 + $0x92] sm:$0xff]
      %v1260 = vld [vmem:[%s1052 + $0x9a] sm:$0xff]
      %v1261 = vld [vmem:[%s1052 + $0xaa] sm:$0xff]
      %v1262 = vld [vmem:[%s1052 + $0xb2] sm:$0xff]
      %1279 = vrot.lane.b32.xlu0 %v1247, 32
      %v1280 = vpop.permute.xlu0 %1279
      %1281 = vrot.lane.b32.xlu0 %v1248, 32
      %v1282 = vpop.permute.xlu0 %1281
      %1283 = vrot.lane.b32.xlu0 %v1249, 32
      %v1284 = vpop.permute.xlu0 %1283
      %1285 = vrot.lane.b32.xlu0 %v1250, 32
      %v1286 = vpop.permute.xlu0 %1285
      %1287 = vrot.lane.b32.xlu0 %v1251, 32
      %v1288 = vpop.permute.xlu0 %1287
      %1289 = vrot.lane.b32.xlu0 %v1252, 32
      %v1290 = vpop.permute.xlu0 %1289
      %1291 = vrot.lane.b32.xlu0 %v1253, 32
      %v1292 = vpop.permute.xlu0 %1291
      %1293 = vrot.lane.b32.xlu0 %v1254, 32
      %v1294 = vpop.permute.xlu0 %1293
      %1295 = vrot.lane.b32.xlu0 %v1255, 32
      %v1296 = vpop.permute.xlu0 %1295
      %1297 = vrot.lane.b32.xlu0 %v1256, 32
      %v1298 = vpop.permute.xlu0 %1297
      %1299 = vrot.lane.b32.xlu0 %v1257, 32
      %v1300 = vpop.permute.xlu0 %1299
      %1301 = vrot.lane.b32.xlu0 %v1258, 32
      %v1302 = vpop.permute.xlu0 %1301
      %1303 = vrot.lane.b32.xlu0 %v1259, 32
      %v1304 = vpop.permute.xlu0 %1303
      %1305 = vrot.lane.b32.xlu0 %v1260, 32
      %v1306 = vpop.permute.xlu0 %1305
      %1307 = vrot.lane.b32.xlu0 %v1261, 32
      %v1308 = vpop.permute.xlu0 %1307
      %1309 = vrot.lane.b32.xlu0 %v1262, 32
      %v1310 = vpop.permute.xlu0 %1309
      %vm1327 = vcmask 294144
      %1328 = vst.msk [vmem:[#allocation3] sm:$0xff] %vm1327, %v1280
      %1329 = vst.msk [vmem:[#allocation3 + $0x8] sm:$0xff] %vm1327, %v1282
      %1330 = vst.msk [vmem:[#allocation3 + $0x10] sm:$0xff] %vm1327, %v1284
      %1331 = vst.msk [vmem:[#allocation3 + $0x18] sm:$0xff] %vm1327, %v1286
      %1332 = vst.msk [vmem:[#allocation3 + $0x20] sm:$0xff] %vm1327, %v1288
      %1333 = vst.msk [vmem:[#allocation3 + $0x28] sm:$0xff] %vm1327, %v1290
      %1334 = vst.msk [vmem:[#allocation3 + $0x30] sm:$0xff] %vm1327, %v1292
      %1335 = vst.msk [vmem:[#allocation3 + $0x38] sm:$0xff] %vm1327, %v1294
      %1336 = vst.msk [vmem:[#allocation3 + $0x40] sm:$0xff] %vm1327, %v1296
      %1337 = vst.msk [vmem:[#allocation3 + $0x48] sm:$0xff] %vm1327, %v1298
      %1338 = vst.msk [vmem:[#allocation3 + $0x50] sm:$0xff] %vm1327, %v1300
      %1339 = vst.msk [vmem:[#allocation3 + $0x58] sm:$0xff] %vm1327, %v1302
      %1340 = vst.msk [vmem:[#allocation3 + $0x60] sm:$0xff] %vm1327, %v1304
      %1341 = vst.msk [vmem:[#allocation3 + $0x68] sm:$0xff] %vm1327, %v1306
      %1342 = vst.msk [vmem:[#allocation3 + $0x70] sm:$0xff] %vm1327, %v1308
      %1343 = vst.msk [vmem:[#allocation3 + $0x78] sm:$0xff] %vm1327, %v1310
      %v1344 = vld [vmem:[#allocation3] sm:$0xff]
      %v1345 = vld [vmem:[#allocation3 + $0x8] sm:$0xff]
      %v1346 = vld [vmem:[#allocation3 + $0x10] sm:$0xff]
      %v1347 = vld [vmem:[#allocation3 + $0x18] sm:$0xff]
      %v1348 = vld [vmem:[#allocation3 + $0x20] sm:$0xff]
      %v1349 = vld [vmem:[#allocation3 + $0x28] sm:$0xff]
      %v1350 = vld [vmem:[#allocation3 + $0x30] sm:$0xff]
      %v1351 = vld [vmem:[#allocation3 + $0x38] sm:$0xff]
      %v1352 = vld [vmem:[#allocation3 + $0x40] sm:$0xff]
      %v1353 = vld [vmem:[#allocation3 + $0x48] sm:$0xff]
      %v1354 = vld [vmem:[#allocation3 + $0x50] sm:$0xff]
      %v1355 = vld [vmem:[#allocation3 + $0x58] sm:$0xff]
      %v1356 = vld [vmem:[#allocation3 + $0x60] sm:$0xff]
      %v1357 = vld [vmem:[#allocation3 + $0x68] sm:$0xff]
      %v1358 = vld [vmem:[#allocation3 + $0x70] sm:$0xff]
      %v1359 = vld [vmem:[#allocation3 + $0x78] sm:$0xff]
      %v1360 = vld [vmem:[%s3] sm:$0xff]
      %v1361 = vld [vmem:[%s3 + $0x8] sm:$0xff]
      %v1362 = vld [vmem:[%s3 + $0x10] sm:$0xff]
      %v1363 = vld [vmem:[%s3 + $0x18] sm:$0xff]
      %v1364 = vld [vmem:[%s3 + $0x20] sm:$0xf]
      %vm1365 = vcmask 293888
      %v1367 = vsel %vm1365, %v1344, 0
      %v1370 = vsel %vm1365, %v1345, 0
      %v1373 = vsel %vm1365, %v1346, 0
      %v1376 = vsel %vm1365, %v1347, 0
      %v1379 = vsel %vm1365, %v1348, 0
      %v1382 = vsel %vm1365, %v1349, 0
      %v1385 = vsel %vm1365, %v1350, 0
      %v1388 = vsel %vm1365, %v1351, 0
      %v1391 = vsel %vm1365, %v1352, 0
      %v1394 = vsel %vm1365, %v1353, 0
      %v1397 = vsel %vm1365, %v1354, 0
      %v1400 = vsel %vm1365, %v1355, 0
      %v1403 = vsel %vm1365, %v1356, 0
      %v1406 = vsel %vm1365, %v1357, 0
      %v1409 = vsel %vm1365, %v1358, 0
      %v1412 = vsel %vm1365, %v1359, 0
      %vm1414 = vcmask 1043456
      %v1416 = vsel %vm1414, %v1364, 0
      %1418 = vmatpush.msra.mxu0 0.0
      %1419 = vmatpush.msra.mxu0 0.0
      %1420 = vmatpush.msra.mxu0 0.0
      %1421 = vmatpush.msra.mxu0 0.0
      %1422 = vmatpush.msra.mxu0 0.0
      %1423 = vmatpush.msra.mxu0 0.0
      %1424 = vmatpush.msra.mxu0 0.0
      %1425 = vmatpush.msra.mxu0 0.0
      %1426 = vmatpush.msra.mxu0 0.0
      %1427 = vmatpush.msra.mxu0 0.0
      %1428 = vmatpush.msra.mxu0 0.0
      %1429 = vmatpush.msra.mxu0 %v1416
      %1430 = vmatpush.msra.mxu0 %v1363
      %1431 = vmatpush.msra.mxu0 %v1362
      %1432 = vmatpush.msra.mxu0 %v1361
      %1433 = vmatpush.msra.mxu0 %v1360
      %1434 = vmatmul.f32.gmra.mxu0 %v1367
      %v1435 = vpop.f32.mrf.mxu0
      %v1436 = vadd.f32 0.0, %v1435
      %1437 = vmatmul.f32.gmra.mxu0 %v1370
      %v1438 = vpop.f32.mrf.mxu0
      %v1439 = vadd.f32 0.0, %v1438
      %1440 = vmatmul.f32.gmra.mxu0 %v1373
      %v1441 = vpop.f32.mrf.mxu0
      %v1442 = vadd.f32 0.0, %v1441
      %1443 = vmatmul.f32.gmra.mxu0 %v1376
      %v1444 = vpop.f32.mrf.mxu0
      %v1445 = vadd.f32 0.0, %v1444
      %1446 = vmatmul.f32.gmra.mxu0 %v1379
      %v1447 = vpop.f32.mrf.mxu0
      %v1448 = vadd.f32 0.0, %v1447
      %1449 = vmatmul.f32.gmra.mxu0 %v1382
      %v1450 = vpop.f32.mrf.mxu0
      %v1451 = vadd.f32 0.0, %v1450
      %1452 = vmatmul.f32.gmra.mxu0 %v1385
      %v1453 = vpop.f32.mrf.mxu0
      %v1454 = vadd.f32 0.0, %v1453
      %1455 = vmatmul.f32.gmra.mxu0 %v1388
      %v1456 = vpop.f32.mrf.mxu0
      %v1457 = vadd.f32 0.0, %v1456
      %1458 = vmatmul.f32.gmra.mxu0 %v1391
      %v1459 = vpop.f32.mrf.mxu0
      %v1460 = vadd.f32 0.0, %v1459
      %1461 = vmatmul.f32.gmra.mxu0 %v1394
      %v1462 = vpop.f32.mrf.mxu0
      %v1463 = vadd.f32 0.0, %v1462
      %1464 = vmatmul.f32.gmra.mxu0 %v1397
      %v1465 = vpop.f32.mrf.mxu0
      %v1466 = vadd.f32 0.0, %v1465
      %1467 = vmatmul.f32.gmra.mxu0 %v1400
      %v1468 = vpop.f32.mrf.mxu0
      %v1469 = vadd.f32 0.0, %v1468
      %1470 = vmatmul.f32.gmra.mxu0 %v1403
      %v1471 = vpop.f32.mrf.mxu0
      %v1472 = vadd.f32 0.0, %v1471
      %1473 = vmatmul.f32.gmra.mxu0 %v1406
      %v1474 = vpop.f32.mrf.mxu0
      %v1475 = vadd.f32 0.0, %v1474
      %1476 = vmatmul.f32.gmra.mxu0 %v1409
      %v1477 = vpop.f32.mrf.mxu0
      %v1478 = vadd.f32 0.0, %v1477
      %1479 = vmatmul.f32.gmra.mxu0 %v1412
      %v1480 = vpop.f32.mrf.mxu0
      %v1481 = vadd.f32 0.0, %v1480
      %1482 = vdwg.mxu0
      %1483 = vst [vmem:[%s441] sm:$0xff] %v1436
      %1484 = vst [vmem:[%s441 + $0x8] sm:$0xff] %v1439
      %1485 = vst [vmem:[%s441 + $0x10] sm:$0xff] %v1442
      %1486 = vst [vmem:[%s441 + $0x18] sm:$0xff] %v1445
      %1487 = vst [vmem:[%s441 + $0x20] sm:$0xff] %v1448
      %1488 = vst [vmem:[%s441 + $0x28] sm:$0xff] %v1451
      %1489 = vst [vmem:[%s441 + $0x30] sm:$0xff] %v1454
      %1490 = vst [vmem:[%s441 + $0x38] sm:$0xff] %v1457
      %1491 = vst [vmem:[%s441 + $0x40] sm:$0xff] %v1460
      %1492 = vst [vmem:[%s441 + $0x48] sm:$0xff] %v1463
      %1493 = vst [vmem:[%s441 + $0x50] sm:$0xff] %v1466
      %1494 = vst [vmem:[%s441 + $0x58] sm:$0xff] %v1469
      %1495 = vst [vmem:[%s441 + $0x60] sm:$0xff] %v1472
      %1496 = vst [vmem:[%s441 + $0x68] sm:$0xff] %v1475
      %1497 = vst [vmem:[%s441 + $0x70] sm:$0xff] %v1478
      %1498 = vst [vmem:[%s441 + $0x78] sm:$0xff] %v1481
      %v1499 = vadd.f32 %v1436, %v1439
      %v1500 = vadd.f32 %v1499, %v1442
      %v1501 = vadd.f32 %v1500, %v1445
      %v1502 = vadd.f32 %v1501, %v1448
      %v1503 = vadd.f32 %v1502, %v1451
      %v1504 = vadd.f32 %v1503, %v1454
      %v1505 = vadd.f32 %v1504, %v1457
      %v1506 = vadd.f32 %v1505, %v1460
      %v1507 = vadd.f32 %v1506, %v1463
      %v1508 = vadd.f32 %v1507, %v1466
      %v1509 = vadd.f32 %v1508, %v1469
      %v1510 = vadd.f32 %v1509, %v1472
      %v1511 = vadd.f32 %v1510, %v1475
      %v1512 = vadd.f32 %v1511, %v1478
      %v1513 = vadd.f32 %v1512, %v1481
      %v1514 = vrot.slane %v1513, 4
      %v1515 = vadd.f32 %v1513, %v1514
      %v1516 = vrot.slane %v1515, 2
      %v1517 = vadd.f32 %v1515, %v1516
      %v1518 = vrot.slane %v1517, 1
      %v1519 = vadd.f32 %v1517, %v1518
      %1520 = vst [vmem:[%s449] sm:$0x1] %v1519
      %v1521 = vmul.f32 %v1436, %v1436
      %v1522 = vmul.f32 %v1439, %v1439
      %v1523 = vmul.f32 %v1442, %v1442
      %v1524 = vmul.f32 %v1445, %v1445
      %v1525 = vmul.f32 %v1448, %v1448
      %v1526 = vmul.f32 %v1451, %v1451
      %v1527 = vmul.f32 %v1454, %v1454
      %v1528 = vmul.f32 %v1457, %v1457
      %v1529 = vmul.f32 %v1460, %v1460
      %v1530 = vmul.f32 %v1463, %v1463
      %v1531 = vmul.f32 %v1466, %v1466
      %v1532 = vmul.f32 %v1469, %v1469
      %v1533 = vmul.f32 %v1472, %v1472
      %v1534 = vmul.f32 %v1475, %v1475
      %v1535 = vmul.f32 %v1478, %v1478
      %v1536 = vmul.f32 %v1481, %v1481
      %v1537 = vadd.f32 %v1521, %v1522
      %v1538 = vadd.f32 %v1537, %v1523
      %v1539 = vadd.f32 %v1538, %v1524
      %v1540 = vadd.f32 %v1539, %v1525
      %v1541 = vadd.f32 %v1540, %v1526
      %v1542 = vadd.f32 %v1541, %v1527
      %v1543 = vadd.f32 %v1542, %v1528
      %v1544 = vadd.f32 %v1543, %v1529
      %v1545 = vadd.f32 %v1544, %v1530
      %v1546 = vadd.f32 %v1545, %v1531
      %v1547 = vadd.f32 %v1546, %v1532
      %v1548 = vadd.f32 %v1547, %v1533
      %v1549 = vadd.f32 %v1548, %v1534
      %v1550 = vadd.f32 %v1549, %v1535
      %v1551 = vadd.f32 %v1550, %v1536
      %v1552 = vrot.slane %v1551, 4
      %v1553 = vadd.f32 %v1551, %v1552
      %v1554 = vrot.slane %v1553, 2
      %v1555 = vadd.f32 %v1553, %v1554
      %v1556 = vrot.slane %v1555, 1
      %v1557 = vadd.f32 %v1555, %v1556
      %1558 = vst [vmem:[%s456] sm:$0x1] %v1557
      %s1559 = smul.u32 8, %s23
      %p1560 = scmp.lt.s32.totalorder %s22, 1
      %s1561 = scalar_select %p1560, %s22, 1
      %p1562 = scmp.lt.s32.totalorder %s1559, 15
      %s1563 = scalar_select %p1562, %s1559, 15
      %s1564 = smul.addr %s1563, 2
      %s1565 = smul.addr %s1561, 32
      %s1566 = sadd.s32 %s1564, %s1565
      %s1567 = smul.addr %s1566, 8
      %s1568 = scalar_lea.vmem %s4, %s1567
      %p1569 = scmp.lt.s32.totalorder %s22, 1
      %s1570 = scalar_select %p1569, %s22, 1
      %p1571 = scmp.lt.s32.totalorder %s23, 1
      %s1572 = scalar_select %p1571, %s23, 1
      %s1573 = smul.addr %s1570, 2
      %s1574 = sadd.s32 %s1572, %s1573
      %s1575 = scalar_lea.vmem %s5, %s1574
      %p1576 = scmp.lt.s32.totalorder %s22, 1
      %s1577 = scalar_select %p1576, %s22, 1
      %p1578 = scmp.lt.s32.totalorder %s23, 1
      %s1579 = scalar_select %p1578, %s23, 1
      %s1580 = smul.addr %s1577, 2
      %s1581 = sadd.s32 %s1579, %s1580
      %s1582 = scalar_lea.vmem %s6, %s1581
      // Predicated region
      $region37: #{double_conv.3} parent=35 // pred_check
        %p1583 = pneg %p171
      $region38: #{double_conv.3} parent=35 // pred_check_branch
        %1585 = sbr.rel (%p1583) target = $region40
      $region39: #{double_conv.3} parent=35 // pred_region
        %s1586 = smul.u32 8, %s23
      $region40: #{double_conv.3} parent=35 // pred_fallthru
        _
      // Predicated region
      $region41: #{double_conv.3} parent=35 // pred_check
        %p1587 = pneg %p199
      $region42: #{double_conv.3} parent=35 // pred_check_branch
        %1589 = sbr.rel (%p1587) target = $region44
      $region43: #{double_conv.3} parent=35 // pred_region
        _
      $region44: #{double_conv.3} parent=35 // pred_fallthru
        _
      // Predicated region
      $region45: #{double_conv.3} parent=35 // pred_check
        %p1590 = pneg %p227
      $region46: #{double_conv.3} parent=35 // pred_check_branch
        %1592 = sbr.rel (%p1590) target = $region48
      $region47: #{double_conv.3} parent=35 // pred_region
        _
      $region48: #{double_conv.3} parent=35 // pred_fallthru
        _
    $region36: #{double_conv.3} parent=5 // pred_fallthru
      _
    %p1593 = scmp.le.s32.totalorder 2, %s13
    // Predicated region
    $region49: #{double_conv.3} parent=5 // pred_check
      %p1594 = pneg %p1593
    $region50: #{double_conv.3} parent=5 // pred_check_branch
      %1596 = sbr.rel (%p1594) target = $region52
    $region51: #{double_conv.3} parent=5 // pred_region
      %s1597 = ssub.s32 %s13, 2
      // Predicated region
      $region53: #{double_conv.3} parent=51 // pred_check
        %p1598 = pneg %p177
      $region54: #{double_conv.3} parent=51 // pred_check_branch
        %1600 = sbr.rel (%p1598) target = $region56
      $region55: #{double_conv.3} parent=51 // pred_region
        %s1601 = smul.u32 8, %s25
        %p1602 = scmp.lt.s32.totalorder %s24, 1
        %s1603 = scalar_select %p1602, %s24, 1
        %p1604 = scmp.lt.s32.totalorder %s1601, 15
        %s1605 = scalar_select %p1604, %s1601, 15
        %s1606 = smul.addr %s1605, 2
        %s1607 = smul.addr %s1603, 32
        %s1608 = sadd.s32 %s1606, %s1607
        %s1609 = smul.addr %s1608, 8
        %s1610 = scalar_lea.vmem %s4, %s1609
      $region56: #{double_conv.3} parent=51 // pred_fallthru
        _
      // Predicated region
      $region57: #{double_conv.3} parent=51 // pred_check
        %p1611 = pneg %p205
      $region58: #{double_conv.3} parent=51 // pred_check_branch
        %1613 = sbr.rel (%p1611) target = $region60
      $region59: #{double_conv.3} parent=51 // pred_region
        %p1614 = scmp.lt.s32.totalorder %s24, 1
        %s1615 = scalar_select %p1614, %s24, 1
        %p1616 = scmp.lt.s32.totalorder %s25, 1
        %s1617 = scalar_select %p1616, %s25, 1
        %s1618 = smul.addr %s1615, 2
        %s1619 = sadd.s32 %s1617, %s1618
        %s1620 = scalar_lea.vmem %s5, %s1619
      $region60: #{double_conv.3} parent=51 // pred_fallthru
        _
      // Predicated region
      $region61: #{double_conv.3} parent=51 // pred_check
        %p1621 = pneg %p233
      $region62: #{double_conv.3} parent=51 // pred_check_branch
        %1623 = sbr.rel (%p1621) target = $region64
      $region63: #{double_conv.3} parent=51 // pred_region
        %p1624 = scmp.lt.s32.totalorder %s24, 1
        %s1625 = scalar_select %p1624, %s24, 1
        %p1626 = scmp.lt.s32.totalorder %s25, 1
        %s1627 = scalar_select %p1626, %s25, 1
        %s1628 = smul.addr %s1625, 2
        %s1629 = sadd.s32 %s1627, %s1628
        %s1630 = scalar_lea.vmem %s6, %s1629
      $region64: #{double_conv.3} parent=51 // pred_fallthru
        _
    $region52: #{double_conv.3} parent=5 // pred_fallthru
      _
  $region6: #{double_conv.3} parent=0 // loop_footer
    %s17 = sadd.s32 1, %s13
  $region7: #{double_conv.3} parent=0 // loop_footer_branch
    %12 = sbr.rel target = $region3
  $region8: #{double_conv.3} parent=0 // loop_exit
    _

// kernel: double_conv.4
$region0: #{double_conv.4}
  #allocation0 [shape = 'u32[]', space=smem, size = 0x4, offset = 0x4, fixed_abs, tag = 'smem constant byte address 0x4 - core index']
  #allocation1 [shape = 'u32[72,128]{1,0:T(1,128)}', space=vmem, size = 0x9000, scoped, tag = 'internal scratch']
  #allocation2 [shape = 'f32[10,18,128]{2,1,0:T(8,128)}', space=vmem, size = 0x1e000, scoped, tag = 'scratch operand']
  #allocation3 [shape = 'f32[8,16,1152]{2,1,0:T(8,128)}', space=vmem, size = 0x90000, scoped, tag = 'scratch operand']
  %s0 = inlined_call_operand.vmem [shape: f32[2,16,16,128], index: 0, kind: input, shape index: {}, may-alias: {0,1,2}]
  %s1 = inlined_call_operand.vmem [shape: f32[2,16,16,128], index: 1, kind: input, shape index: {}, may-alias: {0,1,2}]
  %s2 = inlined_call_operand.vmem [shape: f32[2,16,16,128], index: 2, kind: input, shape index: {}, may-alias: {0,1,2}]
  %s3 = inlined_call_operand.vmem [shape: f32[1,128], index: 3, kind: input, shape index: {}]
  %s4 = inlined_call_operand.vmem [shape: f32[1,128], index: 4, kind: input, shape index: {}]
  %s5 = inlined_call_operand.vmem [shape: f32[1152,128], index: 5, kind: input, shape index: {}]
  %s6 = inlined_call_operand.vmem [shape: f32[2,16,16,128], index: 6, kind: output, shape index: {0}]
  %s7 = inlined_call_operand.vmem [shape: f32[2,2,1,128], index: 7, kind: output, shape index: {1}]
  %s8 = inlined_call_operand.vmem [shape: f32[2,2,1,128], index: 8, kind: output, shape index: {2}]
  %9 = xla_tuple %s6, %s7, %s8
  %s10 = sld [smem:[#allocation0]]
  $region73: #{double_conv.4} parent=0
    _
  %s12 = ssub.s32 1, %s10
  %s13 = scalar_select 0, %s12, %s10
  loop: start=0, step=1, limit=6
  $region2: #{double_conv.4} parent=0 // loop_pre_header
    _
  $region3: #{double_conv.4} parent=0 // loop_header
    %s15 = sphi 0, %s19
    %p16 = scmp.ge.s32.totalorder %s15, 6
    %s22 = sphi 0, %s34
    %s23 = sphi 0, %s30
    %s24 = sphi 0, %s22
    %s25 = sphi 0, %s23
    %s26 = sphi 0, %s24
    %s27 = sphi 0, %s25
    %s39 = sphi 0, %s41
    %s42 = sphi 0, %s39
    %s43 = sphi 0, %s42
    %s59 = sphi 0, %s43
    %s75 = sphi 0, %s77
    %s78 = sphi 0, %s75
    %s79 = sphi 0, %s78
    %s95 = sphi 0, %s79
    %s111 = sphi 0, %s113
    %s114 = sphi 0, %s111
    %s115 = sphi 0, %s114
    %s131 = sphi 0, %s115
    %s135 = sphi 0, %s135
    %s137 = sphi 0, %s135
    %s138 = sphi 0, %s137
    %s152 = sphi 0, %s138
    %s156 = sphi 0, %s156
    %s158 = sphi 0, %s156
    %s159 = sphi 0, %s158
    %s173 = sphi 0, %s159
    %s177 = sphi 0, %s177
    %s179 = sphi 0, %s177
    %s180 = sphi 0, %s179
    %s194 = sphi 0, %s180
    %s202 = sphi 0, %s204
    %s205 = sphi 0, %s202
    %s206 = sphi 0, %s205
    %s222 = sphi 0, %s206
    %s230 = sphi 0, %s232
    %s233 = sphi 0, %s230
    %s234 = sphi 0, %s233
    %s250 = sphi 0, %s234
    %s258 = sphi 0, %s260
    %s261 = sphi 0, %s258
    %s262 = sphi 0, %s261
    %s278 = sphi 0, %s262
  $region4: #{double_conv.4} parent=0 // loop_header_branch
    %18 = sbr.rel (%p16) target = $region8
  $region5: #{double_conv.4} parent=0 // loop_body
    %s20 = ssub.s32 %s15, 1
    %s21 = ssub.s32 %s15, 2
    %s28 = sadd.s32 1, %s23
    %p29 = scmp.ge.s32.totalorder %s28, 2
    %s30 = scalar_select %p29, 0, %s28
    %s31 = sadd.s32 1, %s22
    %s32 = scalar_select %p29, %s31, %s22
    %p33 = scmp.ge.s32.totalorder %s32, 2
    %s34 = scalar_select %p33, 0, %s32
    %s35 = ssub.s32 %s22, %s34
    %s36 = ssub.s32 %s23, %s30
    %s37 = sor.u32 %s35, %s36
    %p38 = scmp.eq.s32.totalorder %s37, 0
    %s40 = sadd.s32 %s39, 1
    %s41 = scalar_select %p38, %s39, %s40
    %p44 = pneg %p38
    %p45 = scmp.eq.s32.totalorder %s15, 3
    %p46 = por %p44, %p45
    %p47 = scmp.ne.s32.totalorder %s39, %s42
    %p48 = scmp.eq.s32.totalorder %s15, 0
    %p49 = por %p47, %p48
    %p50 = scmp.ne.s32.totalorder %s39, %s42
    %p51 = scmp.eq.s32.totalorder %s20, 3
    %p52 = por %p50, %p51
    %p53 = scmp.ne.s32.totalorder %s42, %s43
    %p54 = scmp.eq.s32.totalorder %s20, 0
    %p55 = por %p53, %p54
    %p56 = scmp.ne.s32.totalorder %s42, %s43
    %p57 = scmp.eq.s32.totalorder %s21, 3
    %p58 = por %p56, %p57
    %p60 = scmp.ne.s32.totalorder %s43, %s59
    %p61 = scmp.eq.s32.totalorder %s21, 0
    %p62 = por %p60, %p61
    %s63 = smul.u32 %s23, 8
    %s64 = ssub.s32 %s63, 1
    %p65 = scmp.gt.s32.totalorder %s64, 0
    %s66 = scalar_select %p65, %s64, 0
    %s67 = smul.u32 %s30, 8
    %s68 = ssub.s32 %s67, 1
    %p69 = scmp.gt.s32.totalorder %s68, 0
    %s70 = scalar_select %p69, %s68, 0
    %s71 = ssub.s32 %s22, %s34
    %s72 = ssub.s32 %s66, %s70
    %s73 = sor.u32 %s71, %s72
    %p74 = scmp.eq.s32.totalorder %s73, 0
    %s76 = sadd.s32 %s75, 1
    %s77 = scalar_select %p74, %s75, %s76
    %p80 = pneg %p74
    %p81 = scmp.eq.s32.totalorder %s15, 3
    %p82 = por %p80, %p81
    %p83 = scmp.ne.s32.totalorder %s75, %s78
    %p84 = scmp.eq.s32.totalorder %s15, 0
    %p85 = por %p83, %p84
    %p86 = scmp.ne.s32.totalorder %s75, %s78
    %p87 = scmp.eq.s32.totalorder %s20, 3
    %p88 = por %p86, %p87
    %p89 = scmp.ne.s32.totalorder %s78, %s79
    %p90 = scmp.eq.s32.totalorder %s20, 0
    %p91 = por %p89, %p90
    %p92 = scmp.ne.s32.totalorder %s78, %s79
    %p93 = scmp.eq.s32.totalorder %s21, 3
    %p94 = por %p92, %p93
    %p96 = scmp.ne.s32.totalorder %s79, %s95
    %p97 = scmp.eq.s32.totalorder %s21, 0
    %p98 = por %p96, %p97
    %s99 = sadd.s32 %s23, 1
    %s100 = smul.u32 %s99, 8
    %p101 = scmp.lt.s32.totalorder %s100, 15
    %s102 = scalar_select %p101, %s100, 15
    %s103 = sadd.s32 %s30, 1
    %s104 = smul.u32 %s103, 8
    %p105 = scmp.lt.s32.totalorder %s104, 15
    %s106 = scalar_select %p105, %s104, 15
    %s107 = ssub.s32 %s22, %s34
    %s108 = ssub.s32 %s102, %s106
    %s109 = sor.u32 %s107, %s108
    %p110 = scmp.eq.s32.totalorder %s109, 0
    %s112 = sadd.s32 %s111, 1
    %s113 = scalar_select %p110, %s111, %s112
    %p116 = pneg %p110
    %p117 = scmp.eq.s32.totalorder %s15, 3
    %p118 = por %p116, %p117
    %p119 = scmp.ne.s32.totalorder %s111, %s114
    %p120 = scmp.eq.s32.totalorder %s15, 0
    %p121 = por %p119, %p120
    %p122 = scmp.ne.s32.totalorder %s111, %s114
    %p123 = scmp.eq.s32.totalorder %s20, 3
    %p124 = por %p122, %p123
    %p125 = scmp.ne.s32.totalorder %s114, %s115
    %p126 = scmp.eq.s32.totalorder %s20, 0
    %p127 = por %p125, %p126
    %p128 = scmp.ne.s32.totalorder %s114, %s115
    %p129 = scmp.eq.s32.totalorder %s21, 3
    %p130 = por %p128, %p129
    %p132 = scmp.ne.s32.totalorder %s115, %s131
    %p133 = scmp.eq.s32.totalorder %s21, 0
    %p134 = por %p132, %p133
    %s136 = sadd.s32 %s135, 1
    %p139 = scmp.eq.s32.totalorder %s15, 3
    %p140 = scmp.ne.s32.totalorder %s135, %s137
    %p141 = scmp.eq.s32.totalorder %s15, 0
    %p142 = por %p140, %p141
    %p143 = scmp.ne.s32.totalorder %s135, %s137
    %p144 = scmp.eq.s32.totalorder %s20, 3
    %p145 = por %p143, %p144
    %p146 = scmp.ne.s32.totalorder %s137, %s138
    %p147 = scmp.eq.s32.totalorder %s20, 0
    %p148 = por %p146, %p147
    %p149 = scmp.ne.s32.totalorder %s137, %s138
    %p150 = scmp.eq.s32.totalorder %s21, 3
    %p151 = por %p149, %p150
    %p153 = scmp.ne.s32.totalorder %s138, %s152
    %p154 = scmp.eq.s32.totalorder %s21, 0
    %p155 = por %p153, %p154
    %s157 = sadd.s32 %s156, 1
    %p160 = scmp.eq.s32.totalorder %s15, 3
    %p161 = scmp.ne.s32.totalorder %s156, %s158
    %p162 = scmp.eq.s32.totalorder %s15, 0
    %p163 = por %p161, %p162
    %p164 = scmp.ne.s32.totalorder %s156, %s158
    %p165 = scmp.eq.s32.totalorder %s20, 3
    %p166 = por %p164, %p165
    %p167 = scmp.ne.s32.totalorder %s158, %s159
    %p168 = scmp.eq.s32.totalorder %s20, 0
    %p169 = por %p167, %p168
    %p170 = scmp.ne.s32.totalorder %s158, %s159
    %p171 = scmp.eq.s32.totalorder %s21, 3
    %p172 = por %p170, %p171
    %p174 = scmp.ne.s32.totalorder %s159, %s173
    %p175 = scmp.eq.s32.totalorder %s21, 0
    %p176 = por %p174, %p175
    %s178 = sadd.s32 %s177, 1
    %p181 = scmp.eq.s32.totalorder %s15, 3
    %p182 = scmp.ne.s32.totalorder %s177, %s179
    %p183 = scmp.eq.s32.totalorder %s15, 0
    %p184 = por %p182, %p183
    %p185 = scmp.ne.s32.totalorder %s177, %s179
    %p186 = scmp.eq.s32.totalorder %s20, 3
    %p187 = por %p185, %p186
    %p188 = scmp.ne.s32.totalorder %s179, %s180
    %p189 = scmp.eq.s32.totalorder %s20, 0
    %p190 = por %p188, %p189
    %p191 = scmp.ne.s32.totalorder %s179, %s180
    %p192 = scmp.eq.s32.totalorder %s21, 3
    %p193 = por %p191, %p192
    %p195 = scmp.ne.s32.totalorder %s180, %s194
    %p196 = scmp.eq.s32.totalorder %s21, 0
    %p197 = por %p195, %p196
    %s198 = ssub.s32 %s22, %s34
    %s199 = ssub.s32 %s23, %s30
    %s200 = sor.u32 %s198, %s199
    %p201 = scmp.eq.s32.totalorder %s200, 0
    %s203 = sadd.s32 %s202, 1
    %s204 = scalar_select %p201, %s202, %s203
    %p207 = pneg %p201
    %p208 = scmp.eq.s32.totalorder %s15, 3
    %p209 = por %p207, %p208
    %p210 = scmp.ne.s32.totalorder %s202, %s205
    %p211 = scmp.eq.s32.totalorder %s15, 0
    %p212 = por %p210, %p211
    %p213 = scmp.ne.s32.totalorder %s202, %s205
    %p214 = scmp.eq.s32.totalorder %s20, 3
    %p215 = por %p213, %p214
    %p216 = scmp.ne.s32.totalorder %s205, %s206
    %p217 = scmp.eq.s32.totalorder %s20, 0
    %p218 = por %p216, %p217
    %p219 = scmp.ne.s32.totalorder %s205, %s206
    %p220 = scmp.eq.s32.totalorder %s21, 3
    %p221 = por %p219, %p220
    %p223 = scmp.ne.s32.totalorder %s206, %s222
    %p224 = scmp.eq.s32.totalorder %s21, 0
    %p225 = por %p223, %p224
    %s226 = ssub.s32 %s22, %s34
    %s227 = ssub.s32 %s23, %s30
    %s228 = sor.u32 %s226, %s227
    %p229 = scmp.eq.s32.totalorder %s228, 0
    %s231 = sadd.s32 %s230, 1
    %s232 = scalar_select %p229, %s230, %s231
    %p235 = pneg %p229
    %p236 = scmp.eq.s32.totalorder %s15, 3
    %p237 = por %p235, %p236
    %p238 = scmp.ne.s32.totalorder %s230, %s233
    %p239 = scmp.eq.s32.totalorder %s15, 0
    %p240 = por %p238, %p239
    %p241 = scmp.ne.s32.totalorder %s230, %s233
    %p242 = scmp.eq.s32.totalorder %s20, 3
    %p243 = por %p241, %p242
    %p244 = scmp.ne.s32.totalorder %s233, %s234
    %p245 = scmp.eq.s32.totalorder %s20, 0
    %p246 = por %p244, %p245
    %p247 = scmp.ne.s32.totalorder %s233, %s234
    %p248 = scmp.eq.s32.totalorder %s21, 3
    %p249 = por %p247, %p248
    %p251 = scmp.ne.s32.totalorder %s234, %s250
    %p252 = scmp.eq.s32.totalorder %s21, 0
    %p253 = por %p251, %p252
    %s254 = ssub.s32 %s22, %s34
    %s255 = ssub.s32 %s23, %s30
    %s256 = sor.u32 %s254, %s255
    %p257 = scmp.eq.s32.totalorder %s256, 0
    %s259 = sadd.s32 %s258, 1
    %s260 = scalar_select %p257, %s258, %s259
    %p263 = pneg %p257
    %p264 = scmp.eq.s32.totalorder %s15, 3
    %p265 = por %p263, %p264
    %p266 = scmp.ne.s32.totalorder %s258, %s261
    %p267 = scmp.eq.s32.totalorder %s15, 0
    %p268 = por %p266, %p267
    %p269 = scmp.ne.s32.totalorder %s258, %s261
    %p270 = scmp.eq.s32.totalorder %s20, 3
    %p271 = por %p269, %p270
    %p272 = scmp.ne.s32.totalorder %s261, %s262
    %p273 = scmp.eq.s32.totalorder %s20, 0
    %p274 = por %p272, %p273
    %p275 = scmp.ne.s32.totalorder %s261, %s262
    %p276 = scmp.eq.s32.totalorder %s21, 3
    %p277 = por %p275, %p276
    %p279 = scmp.ne.s32.totalorder %s262, %s278
    %p280 = scmp.eq.s32.totalorder %s21, 0
    %p281 = por %p279, %p280
    %p282 = scmp.le.s32.totalorder 1, %s15
    %p283 = scmp.lt.s32.totalorder %s15, 5
    %p284 = pnand %p282, %p283
    %p285 = pneg %p284
    // Predicated region
    $region9: #{double_conv.4} parent=5 // pred_check
      _
    $region10: #{double_conv.4} parent=5 // pred_check_branch
      %287 = sbr.rel (%p284) target = $region12
    $region11: #{double_conv.4} parent=5 // pred_region
      %s288 = ssub.s32 %s15, 1
      // Predicated region
      $region13: #{double_conv.4} parent=11 // pred_check
        %p289 = pneg %p148
      $region14: #{double_conv.4} parent=11 // pred_check_branch
        %291 = sbr.rel (%p289) target = $region16
      $region15: #{double_conv.4} parent=11 // pred_region
        _
      $region16: #{double_conv.4} parent=11 // pred_fallthru
        _
      // Predicated region
      $region17: #{double_conv.4} parent=11 // pred_check
        %p292 = pneg %p169
      $region18: #{double_conv.4} parent=11 // pred_check_branch
        %294 = sbr.rel (%p292) target = $region20
      $region19: #{double_conv.4} parent=11 // pred_region
        _
      $region20: #{double_conv.4} parent=11 // pred_fallthru
        _
      // Predicated region
      $region21: #{double_conv.4} parent=11 // pred_check
        %p295 = pneg %p190
      $region22: #{double_conv.4} parent=11 // pred_check_branch
        %297 = sbr.rel (%p295) target = $region24
      $region23: #{double_conv.4} parent=11 // pred_region
        _
      $region24: #{double_conv.4} parent=11 // pred_fallthru
        _
    $region12: #{double_conv.4} parent=5 // pred_fallthru
      _
    %p298 = scmp.lt.s32.totalorder %s15, 4
    // Predicated region
    $region25: #{double_conv.4} parent=5 // pred_check
      %p299 = pneg %p298
    $region26: #{double_conv.4} parent=5 // pred_check_branch
      %301 = sbr.rel (%p299) target = $region28
    $region27: #{double_conv.4} parent=5 // pred_region
      // Predicated region
      $region29: #{double_conv.4} parent=27 // pred_check
        %p302 = pneg %p49
      $region30: #{double_conv.4} parent=27 // pred_check_branch
        %304 = sbr.rel (%p302) target = $region32
      $region31: #{double_conv.4} parent=27 // pred_region
        %s305 = smul.u32 8, %s23
        %p306 = scmp.lt.s32.totalorder %s22, 1
        %s307 = scalar_select %p306, %s22, 1
        %p308 = scmp.lt.s32.totalorder %s305, 15
        %s309 = scalar_select %p308, %s305, 15
        %s310 = smul.addr %s309, 2
        %s311 = smul.addr %s307, 32
        %s312 = sadd.s32 %s310, %s311
        %s313 = smul.addr %s312, 8
        %s314 = scalar_lea.vmem %s0, %s313
        %s315 = smul.u32 8, %s23
      $region32: #{double_conv.4} parent=27 // pred_fallthru
        _
      // Predicated region
      $region33: #{double_conv.4} parent=27 // pred_check
        %p316 = pneg %p85
      $region34: #{double_conv.4} parent=27 // pred_check_branch
        %318 = sbr.rel (%p316) target = $region36
      $region35: #{double_conv.4} parent=27 // pred_region
        %s319 = smul.u32 %s23, 8
        %s320 = ssub.s32 %s319, 1
        %p321 = scmp.gt.s32.totalorder %s320, 0
        %s322 = scalar_select %p321, %s320, 0
        %p323 = scmp.lt.s32.totalorder %s22, 1
        %s324 = scalar_select %p323, %s22, 1
        %p325 = scmp.lt.s32.totalorder %s322, 15
        %s326 = scalar_select %p325, %s322, 15
        %s327 = smul.addr %s326, 2
        %s328 = smul.addr %s324, 32
        %s329 = sadd.s32 %s327, %s328
        %s330 = smul.addr %s329, 8
        %s331 = scalar_lea.vmem %s1, %s330
        %s332 = smul.u32 %s23, 8
        %s333 = ssub.s32 %s332, 1
        %p334 = scmp.gt.s32.totalorder %s333, 0
        %s335 = scalar_select %p334, %s333, 0
      $region36: #{double_conv.4} parent=27 // pred_fallthru
        _
      // Predicated region
      $region37: #{double_conv.4} parent=27 // pred_check
        %p336 = pneg %p121
      $region38: #{double_conv.4} parent=27 // pred_check_branch
        %338 = sbr.rel (%p336) target = $region40
      $region39: #{double_conv.4} parent=27 // pred_region
        %s339 = sadd.s32 %s23, 1
        %s340 = smul.u32 %s339, 8
        %p341 = scmp.lt.s32.totalorder %s340, 15
        %s342 = scalar_select %p341, %s340, 15
        %p343 = scmp.lt.s32.totalorder %s22, 1
        %s344 = scalar_select %p343, %s22, 1
        %p345 = scmp.lt.s32.totalorder %s342, 15
        %s346 = scalar_select %p345, %s342, 15
        %s347 = smul.addr %s346, 2
        %s348 = smul.addr %s344, 32
        %s349 = sadd.s32 %s347, %s348
        %s350 = smul.addr %s349, 8
        %s351 = scalar_lea.vmem %s2, %s350
        %s352 = sadd.s32 %s23, 1
        %s353 = smul.u32 %s352, 8
        %p354 = scmp.lt.s32.totalorder %s353, 15
        %s355 = scalar_select %p354, %s353, 15
      $region40: #{double_conv.4} parent=27 // pred_fallthru
        _
    $region28: #{double_conv.4} parent=5 // pred_fallthru
      _
    %p356 = scmp.le.s32.totalorder 1, %s15
    %p357 = scmp.lt.s32.totalorder %s15, 5
    %p358 = pnand %p356, %p357
    %p359 = pneg %p358
    // Predicated region
    $region41: #{double_conv.4} parent=5 // pred_check
      _
    $region42: #{double_conv.4} parent=5 // pred_check_branch
      %361 = sbr.rel (%p358) target = $region44
    $region43: #{double_conv.4} parent=5 // pred_region
      %s362 = ssub.s32 %s15, 1
      %s363 = smul.u32 8, %s25
      %p364 = scmp.lt.s32.totalorder %s24, 1
      %s365 = scalar_select %p364, %s24, 1
      %p366 = scmp.lt.s32.totalorder %s363, 15
      %s367 = scalar_select %p366, %s363, 15
      %s368 = smul.addr %s367, 2
      %s369 = smul.addr %s365, 32
      %s370 = sadd.s32 %s368, %s369
      %s371 = smul.addr %s370, 8
      %s372 = scalar_lea.vmem %s0, %s371
      %p373 = pneg %p55
      %p374 = pneg %p52
      %s375 = smul.u32 %s25, 8
      %s376 = ssub.s32 %s375, 1
      %p377 = scmp.gt.s32.totalorder %s376, 0
      %s378 = scalar_select %p377, %s376, 0
      %p379 = scmp.lt.s32.totalorder %s24, 1
      %s380 = scalar_select %p379, %s24, 1
      %p381 = scmp.lt.s32.totalorder %s378, 15
      %s382 = scalar_select %p381, %s378, 15
      %s383 = smul.addr %s382, 2
      %s384 = smul.addr %s380, 32
      %s385 = sadd.s32 %s383, %s384
      %s386 = smul.addr %s385, 8
      %s387 = scalar_lea.vmem %s1, %s386
      %p388 = pneg %p91
      %p389 = pneg %p88
      %s390 = sadd.s32 %s25, 1
      %s391 = smul.u32 %s390, 8
      %p392 = scmp.lt.s32.totalorder %s391, 15
      %s393 = scalar_select %p392, %s391, 15
      %p394 = scmp.lt.s32.totalorder %s24, 1
      %s395 = scalar_select %p394, %s24, 1
      %p396 = scmp.lt.s32.totalorder %s393, 15
      %s397 = scalar_select %p396, %s393, 15
      %s398 = smul.addr %s397, 2
      %s399 = smul.addr %s395, 32
      %s400 = sadd.s32 %s398, %s399
      %s401 = smul.addr %s400, 8
      %s402 = scalar_lea.vmem %s2, %s401
      %p403 = pneg %p127
      %p404 = pneg %p124
      %p405 = pneg %p148
      %p406 = pneg %p145
      %p407 = pneg %p169
      %p408 = pneg %p166
      %p409 = pneg %p190
      %p410 = pneg %p187
      %p411 = pneg %p218
      %p412 = pneg %p215
      %s413 = smul.u32 8, %s25
      %p414 = scmp.lt.s32.totalorder %s24, 1
      %s415 = scalar_select %p414, %s24, 1
      %p416 = scmp.lt.s32.totalorder %s413, 15
      %s417 = scalar_select %p416, %s413, 15
      %s418 = smul.addr %s417, 2
      %s419 = smul.addr %s415, 32
      %s420 = sadd.s32 %s418, %s419
      %s421 = smul.addr %s420, 8
      %s422 = scalar_lea.vmem %s6, %s421
      %p423 = pneg %p246
      %p424 = pneg %p243
      %p425 = scmp.lt.s32.totalorder %s24, 1
      %s426 = scalar_select %p425, %s24, 1
      %p427 = scmp.lt.s32.totalorder %s25, 1
      %s428 = scalar_select %p427, %s25, 1
      %s429 = smul.addr %s426, 2
      %s430 = sadd.s32 %s428, %s429
      %s431 = scalar_lea.vmem %s7, %s430
      %p432 = pneg %p274
      %p433 = pneg %p271
      %p434 = scmp.lt.s32.totalorder %s24, 1
      %s435 = scalar_select %p434, %s24, 1
      %p436 = scmp.lt.s32.totalorder %s25, 1
      %s437 = scalar_select %p436, %s25, 1
      %s438 = smul.addr %s435, 2
      %s439 = sadd.s32 %s437, %s438
      %s440 = scalar_lea.vmem %s8, %s439
      %s441 = smul.u32 8, %s25
      %p442 = scmp.lt.s32.totalorder %s24, 1
      %s443 = scalar_select %p442, %s24, 1
      %p444 = scmp.lt.s32.totalorder %s441, 15
      %s445 = scalar_select %p444, %s441, 15
      %s446 = smul.addr %s445, 2
      %s447 = smul.addr %s443, 32
      %s448 = sadd.s32 %s446, %s447
      %s449 = smul.addr %s448, 8
      %s450 = scalar_lea.vmem %s0, %s449
      %s451 = smul.u32 8, %s25
      %s452 = smul.u32 %s25, 8
      %s453 = ssub.s32 %s452, 1
      %p454 = scmp.gt.s32.totalorder %s453, 0
      %s455 = scalar_select %p454, %s453, 0
      %p456 = scmp.lt.s32.totalorder %s24, 1
      %s457 = scalar_select %p456, %s24, 1
      %p458 = scmp.lt.s32.totalorder %s455, 15
      %s459 = scalar_select %p458, %s455, 15
      %s460 = smul.addr %s459, 2
      %s461 = smul.addr %s457, 32
      %s462 = sadd.s32 %s460, %s461
      %s463 = smul.addr %s462, 8
      %s464 = scalar_lea.vmem %s1, %s463
      %s465 = smul.u32 %s25, 8
      %s466 = ssub.s32 %s465, 1
      %p467 = scmp.gt.s32.totalorder %s466, 0
      %s468 = scalar_select %p467, %s466, 0
      %s469 = sadd.s32 %s25, 1
      %s470 = smul.u32 %s469, 8
      %p471 = scmp.lt.s32.totalorder %s470, 15
      %s472 = scalar_select %p471, %s470, 15
      %p473 = scmp.lt.s32.totalorder %s24, 1
      %s474 = scalar_select %p473, %s24, 1
      %p475 = scmp.lt.s32.totalorder %s472, 15
      %s476 = scalar_select %p475, %s472, 15
      %s477 = smul.addr %s476, 2
      %s478 = smul.addr %s474, 32
      %s479 = sadd.s32 %s477, %s478
      %s480 = smul.addr %s479, 8
      %s481 = scalar_lea.vmem %s2, %s480
      %s482 = sadd.s32 %s25, 1
      %s483 = smul.u32 %s482, 8
      %p484 = scmp.lt.s32.totalorder %s483, 15
      %s485 = scalar_select %p484, %s483, 15
      %s486 = smul.u32 8, %s25
      %p487 = scmp.lt.s32.totalorder %s24, 1
      %s488 = scalar_select %p487, %s24, 1
      %p489 = scmp.lt.s32.totalorder %s486, 15
      %s490 = scalar_select %p489, %s486, 15
      %s491 = smul.addr %s490, 2
      %s492 = smul.addr %s488, 32
      %s493 = sadd.s32 %s491, %s492
      %s494 = smul.addr %s493, 8
      %s495 = scalar_lea.vmem %s6, %s494
      %s496 = smul.u32 8, %s25
      %p497 = scmp.lt.s32.totalorder %s24, 1
      %s498 = scalar_select %p497, %s24, 1
      %p499 = scmp.lt.s32.totalorder %s25, 1
      %s500 = scalar_select %p499, %s25, 1
      %s501 = smul.addr %s498, 2
      %s502 = sadd.s32 %s500, %s501
      %s503 = scalar_lea.vmem %s7, %s502
      %p504 = scmp.lt.s32.totalorder %s24, 1
      %s505 = scalar_select %p504, %s24, 1
      %p506 = scmp.lt.s32.totalorder %s25, 1
      %s507 = scalar_select %p506, %s25, 1
      %s508 = smul.addr %s505, 2
      %s509 = sadd.s32 %s507, %s508
      %s510 = scalar_lea.vmem %s8, %s509
      %p511 = scmp.gt.s32.totalorder %s25, 0
      %s512 = scalar_select %p511, 1, 0
      %s513 = scvt.s32.f32 %s512
      %p514 = scmp.lt.s32.totalorder %s25, 1
      %s515 = scalar_select %p514, 1, 0
      %s516 = scvt.s32.f32 %s515
      %v517 = vld [vmem:[%s3] sm:$0x1]
      %v518 = vld [vmem:[%s4] sm:$0x1]
      %519 = vst [vmem:[#allocation2] sm:$0x1] 0.0
      %520 = vst [vmem:[#allocation2 + $0x18] sm:$0x1] 0.0
      %521 = vst [vmem:[#allocation2 + $0x30] sm:$0x1] 0.0
      %522 = vst [vmem:[#allocation2 + $0x48] sm:$0x1] 0.0
      %523 = vst [vmem:[#allocation2 + $0x60] sm:$0x1] 0.0
      %524 = vst [vmem:[#allocation2 + $0x78] sm:$0x1] 0.0
      %525 = vst [vmem:[#allocation2 + $0x90] sm:$0x1] 0.0
      %526 = vst [vmem:[#allocation2 + $0xa8] sm:$0x1] 0.0
      %527 = vst [vmem:[#allocation2 + $0xc0] sm:$0x1] 0.0
      %528 = vst [vmem:[#allocation2 + $0xd8] sm:$0x1] 0.0
      %529 = vst [vmem:[#allocation2 + $0x11] sm:$0x1] 0.0
      %530 = vst [vmem:[#allocation2 + $0x29] sm:$0x1] 0.0
      %531 = vst [vmem:[#allocation2 + $0x41] sm:$0x1] 0.0
      %532 = vst [vmem:[#allocation2 + $0x59] sm:$0x1] 0.0
      %533 = vst [vmem:[#allocation2 + $0x71] sm:$0x1] 0.0
      %534 = vst [vmem:[#allocation2 + $0x89] sm:$0x1] 0.0
      %535 = vst [vmem:[#allocation2 + $0xa1] sm:$0x1] 0.0
      %536 = vst [vmem:[#allocation2 + $0xb9] sm:$0x1] 0.0
      %537 = vst [vmem:[#allocation2 + $0xd1] sm:$0x1] 0.0
      %538 = vst [vmem:[#allocation2 + $0xe9] sm:$0x1] 0.0
      %v539 = vld [vmem:[%s464] sm:$0xff]
      %v540 = vld [vmem:[%s464 + $0x8] sm:$0xff]
      %v542 = vperm.slane %v517, 0
      %v544 = vmul.f32 %v539, %v542
      %v545 = vmul.f32 %v540, %v542
      %v547 = vperm.slane %v518, 0
      %v549 = vadd.f32 %v544, %v547
      %v550 = vadd.f32 %v545, %v547
      %v551 = vmax.f32 %v549, 0.0
      %v552 = vmax.f32 %v550, 0.0
      %v553 = vstv %s513
      %v554 = vmul.f32 %v551, %v553
      %v555 = vmul.f32 %v552, %v553
      %556 = vst [vmem:[#allocation2 + $0x1] sm:$0xff] %v554
      %557 = vst [vmem:[#allocation2 + $0x9] sm:$0xff] %v555
      %v558 = vld [vmem:[%s450] sm:$0xff]
      %v559 = vld [vmem:[%s450 + $0x8] sm:$0xff]
      %v560 = vld [vmem:[%s450 + $0x10] sm:$0xff]
      %v561 = vld [vmem:[%s450 + $0x18] sm:$0xff]
      %v562 = vld [vmem:[%s450 + $0x20] sm:$0xff]
      %v563 = vld [vmem:[%s450 + $0x28] sm:$0xff]
      %v564 = vld [vmem:[%s450 + $0x30] sm:$0xff]
      %v565 = vld [vmem:[%s450 + $0x38] sm:$0xff]
      %v566 = vld [vmem:[%s450 + $0x40] sm:$0xff]
      %v567 = vld [vmem:[%s450 + $0x48] sm:$0xff]
      %v568 = vld [vmem:[%s450 + $0x50] sm:$0xff]
      %v569 = vld [vmem:[%s450 + $0x58] sm:$0xff]
      %v570 = vld [vmem:[%s450 + $0x60] sm:$0xff]
      %v571 = vld [vmem:[%s450 + $0x68] sm:$0xff]
      %v572 = vld [vmem:[%s450 + $0x70] sm:$0xff]
      %v573 = vld [vmem:[%s450 + $0x78] sm:$0xff]
      %v574 = vmul.f32 %v558, %v542
      %v575 = vmul.f32 %v559, %v542
      %v576 = vmul.f32 %v560, %v542
      %v577 = vmul.f32 %v561, %v542
      %v578 = vmul.f32 %v562, %v542
      %v579 = vmul.f32 %v563, %v542
      %v580 = vmul.f32 %v564, %v542
      %v581 = vmul.f32 %v565, %v542
      %v582 = vmul.f32 %v566, %v542
      %v583 = vmul.f32 %v567, %v542
      %v584 = vmul.f32 %v568, %v542
      %v585 = vmul.f32 %v569, %v542
      %v586 = vmul.f32 %v570, %v542
      %v587 = vmul.f32 %v571, %v542
      %v588 = vmul.f32 %v572, %v542
      %v589 = vmul.f32 %v573, %v542
      %v590 = vadd.f32 %v574, %v547
      %v591 = vadd.f32 %v575, %v547
      %v592 = vadd.f32 %v576, %v547
      %v593 = vadd.f32 %v577, %v547
      %v594 = vadd.f32 %v578, %v547
      %v595 = vadd.f32 %v579, %v547
      %v596 = vadd.f32 %v580, %v547
      %v597 = vadd.f32 %v581, %v547
      %v598 = vadd.f32 %v582, %v547
      %v599 = vadd.f32 %v583, %v547
      %v600 = vadd.f32 %v584, %v547
      %v601 = vadd.f32 %v585, %v547
      %v602 = vadd.f32 %v586, %v547
      %v603 = vadd.f32 %v587, %v547
      %v604 = vadd.f32 %v588, %v547
      %v605 = vadd.f32 %v589, %v547
      %v606 = vmax.f32 %v590, 0.0
      %v607 = vmax.f32 %v591, 0.0
      %v608 = vmax.f32 %v592, 0.0
      %v609 = vmax.f32 %v593, 0.0
      %v610 = vmax.f32 %v594, 0.0
      %v611 = vmax.f32 %v595, 0.0
      %v612 = vmax.f32 %v596, 0.0
      %v613 = vmax.f32 %v597, 0.0
      %v614 = vmax.f32 %v598, 0.0
      %v615 = vmax.f32 %v599, 0.0
      %v616 = vmax.f32 %v600, 0.0
      %v617 = vmax.f32 %v601, 0.0
      %v618 = vmax.f32 %v602, 0.0
      %v619 = vmax.f32 %v603, 0.0
      %v620 = vmax.f32 %v604, 0.0
      %v621 = vmax.f32 %v605, 0.0
      %s622 = scalar_lea.vmem [#allocation2], 24
      %623 = vst [vmem:[%s622 + $0x1] sm:$0xff] %v606
      %624 = vst [vmem:[%s622 + $0x9] sm:$0xff] %v607
      %625 = vst [vmem:[%s622 + $0x19] sm:$0xff] %v608
      %626 = vst [vmem:[%s622 + $0x21] sm:$0xff] %v609
      %627 = vst [vmem:[%s622 + $0x31] sm:$0xff] %v610
      %628 = vst [vmem:[%s622 + $0x39] sm:$0xff] %v611
      %629 = vst [vmem:[%s622 + $0x49] sm:$0xff] %v612
      %630 = vst [vmem:[%s622 + $0x51] sm:$0xff] %v613
      %631 = vst [vmem:[%s622 + $0x61] sm:$0xff] %v614
      %632 = vst [vmem:[%s622 + $0x69] sm:$0xff] %v615
      %633 = vst [vmem:[%s622 + $0x79] sm:$0xff] %v616
      %634 = vst [vmem:[%s622 + $0x81] sm:$0xff] %v617
      %635 = vst [vmem:[%s622 + $0x91] sm:$0xff] %v618
      %636 = vst [vmem:[%s622 + $0x99] sm:$0xff] %v619
      %637 = vst [vmem:[%s622 + $0xa9] sm:$0xff] %v620
      %638 = vst [vmem:[%s622 + $0xb1] sm:$0xff] %v621
      %v639 = vld [vmem:[%s481] sm:$0xff]
      %v640 = vld [vmem:[%s481 + $0x8] sm:$0xff]
      %v641 = vmul.f32 %v639, %v542
      %v642 = vmul.f32 %v640, %v542
      %v643 = vadd.f32 %v641, %v547
      %v644 = vadd.f32 %v642, %v547
      %v645 = vmax.f32 %v643, 0.0
      %v646 = vmax.f32 %v644, 0.0
      %v647 = vstv %s516
      %v648 = vmul.f32 %v645, %v647
      %v649 = vmul.f32 %v646, %v647
      %s650 = scalar_lea.vmem [#allocation2], 216
      %651 = vst [vmem:[%s650 + $0x1] sm:$0xff] %v648
      %652 = vst [vmem:[%s650 + $0x9] sm:$0xff] %v649
      %v653 = vld [vmem:[#allocation2] sm:$0xff]
      %v654 = vld [vmem:[#allocation2 + $0x8] sm:$0xff]
      %v655 = vld [vmem:[#allocation2 + $0x18] sm:$0xff]
      %v656 = vld [vmem:[#allocation2 + $0x20] sm:$0xff]
      %v657 = vld [vmem:[#allocation2 + $0x30] sm:$0xff]
      %v658 = vld [vmem:[#allocation2 + $0x38] sm:$0xff]
      %v659 = vld [vmem:[#allocation2 + $0x48] sm:$0xff]
      %v660 = vld [vmem:[#allocation2 + $0x50] sm:$0xff]
      %v661 = vld [vmem:[#allocation2 + $0x60] sm:$0xff]
      %v662 = vld [vmem:[#allocation2 + $0x68] sm:$0xff]
      %v663 = vld [vmem:[#allocation2 + $0x78] sm:$0xff]
      %v664 = vld [vmem:[#allocation2 + $0x80] sm:$0xff]
      %v665 = vld [vmem:[#allocation2 + $0x90] sm:$0xff]
      %v666 = vld [vmem:[#allocation2 + $0x98] sm:$0xff]
      %v667 = vld [vmem:[#allocation2 + $0xa8] sm:$0xff]
      %v668 = vld [vmem:[#allocation2 + $0xb0] sm:$0xff]
      %669 = vst [vmem:[#allocation3] sm:$0xff] %v653
      %670 = vst [vmem:[#allocation3 + $0x48] sm:$0xff] %v654
      %671 = vst [vmem:[#allocation3 + $0x90] sm:$0xff] %v655
      %672 = vst [vmem:[#allocation3 + $0xd8] sm:$0xff] %v656
      %673 = vst [vmem:[#allocation3 + $0x120] sm:$0xff] %v657
      %674 = vst [vmem:[#allocation3 + $0x168] sm:$0xff] %v658
      %675 = vst [vmem:[#allocation3 + $0x1b0] sm:$0xff] %v659
      %676 = vst [vmem:[#allocation3 + $0x1f8] sm:$0xff] %v660
      %677 = vst [vmem:[#allocation3 + $0x240] sm:$0xff] %v661
      %678 = vst [vmem:[#allocation3 + $0x288] sm:$0xff] %v662
      %679 = vst [vmem:[#allocation3 + $0x2d0] sm:$0xff] %v663
      %680 = vst [vmem:[#allocation3 + $0x318] sm:$0xff] %v664
      %681 = vst [vmem:[#allocation3 + $0x360] sm:$0xff] %v665
      %682 = vst [vmem:[#allocation3 + $0x3a8] sm:$0xff] %v666
      %683 = vst [vmem:[#allocation3 + $0x3f0] sm:$0xff] %v667
      %684 = vst [vmem:[#allocation3 + $0x438] sm:$0xff] %v668
      %v685 = vld [vmem:[#allocation2 + $0x1] sm:$0xff]
      %v686 = vld [vmem:[#allocation2 + $0x9] sm:$0xff]
      %v687 = vld [vmem:[#allocation2 + $0x19] sm:$0xff]
      %v688 = vld [vmem:[#allocation2 + $0x21] sm:$0xff]
      %v689 = vld [vmem:[#allocation2 + $0x31] sm:$0xff]
      %v690 = vld [vmem:[#allocation2 + $0x39] sm:$0xff]
      %v691 = vld [vmem:[#allocation2 + $0x49] sm:$0xff]
      %v692 = vld [vmem:[#allocation2 + $0x51] sm:$0xff]
      %v693 = vld [vmem:[#allocation2 + $0x61] sm:$0xff]
      %v694 = vld [vmem:[#allocation2 + $0x69] sm:$0xff]
      %v695 = vld [vmem:[#allocation2 + $0x79] sm:$0xff]
      %v696 = vld [vmem:[#allocation2 + $0x81] sm:$0xff]
      %v697 = vld [vmem:[#allocation2 + $0x91] sm:$0xff]
      %v698 = vld [vmem:[#allocation2 + $0x99] sm:$0xff]
      %v699 = vld [vmem:[#allocation2 + $0xa9] sm:$0xff]
      %v700 = vld [vmem:[#allocation2 + $0xb1] sm:$0xff]
      %701 = vst [vmem:[#allocation3 + $0x8] sm:$0xff] %v685
      %702 = vst [vmem:[#allocation3 + $0x50] sm:$0xff] %v686
      %703 = vst [vmem:[#allocation3 + $0x98] sm:$0xff] %v687
      %704 = vst [vmem:[#allocation3 + $0xe0] sm:$0xff] %v688
      %705 = vst [vmem:[#allocation3 + $0x128] sm:$0xff] %v689
      %706 = vst [vmem:[#allocation3 + $0x170] sm:$0xff] %v690
      %707 = vst [vmem:[#allocation3 + $0x1b8] sm:$0xff] %v691
      %708 = vst [vmem:[#allocation3 + $0x200] sm:$0xff] %v692
      %709 = vst [vmem:[#allocation3 + $0x248] sm:$0xff] %v693
      %710 = vst [vmem:[#allocation3 + $0x290] sm:$0xff] %v694
      %711 = vst [vmem:[#allocation3 + $0x2d8] sm:$0xff] %v695
      %712 = vst [vmem:[#allocation3 + $0x320] sm:$0xff] %v696
      %713 = vst [vmem:[#allocation3 + $0x368] sm:$0xff] %v697
      %714 = vst [vmem:[#allocation3 + $0x3b0] sm:$0xff] %v698
      %715 = vst [vmem:[#allocation3 + $0x3f8] sm:$0xff] %v699
      %716 = vst [vmem:[#allocation3 + $0x440] sm:$0xff] %v700
      %v717 = vld [vmem:[#allocation2 + $0x2] sm:$0xff]
      %v718 = vld [vmem:[#allocation2 + $0xa] sm:$0xff]
      %v719 = vld [vmem:[#allocation2 + $0x1a] sm:$0xff]
      %v720 = vld [vmem:[#allocation2 + $0x22] sm:$0xff]
      %v721 = vld [vmem:[#allocation2 + $0x32] sm:$0xff]
      %v722 = vld [vmem:[#allocation2 + $0x3a] sm:$0xff]
      %v723 = vld [vmem:[#allocation2 + $0x4a] sm:$0xff]
      %v724 = vld [vmem:[#allocation2 + $0x52] sm:$0xff]
      %v725 = vld [vmem:[#allocation2 + $0x62] sm:$0xff]
      %v726 = vld [vmem:[#allocation2 + $0x6a] sm:$0xff]
      %v727 = vld [vmem:[#allocation2 + $0x7a] sm:$0xff]
      %v728 = vld [vmem:[#allocation2 + $0x82] sm:$0xff]
      %v729 = vld [vmem:[#allocation2 + $0x92] sm:$0xff]
      %v730 = vld [vmem:[#allocation2 + $0x9a] sm:$0xff]
      %v731 = vld [vmem:[#allocation2 + $0xaa] sm:$0xff]
      %v732 = vld [vmem:[#allocation2 + $0xb2] sm:$0xff]
      %733 = vst [vmem:[#allocation3 + $0x10] sm:$0xff] %v717
      %734 = vst [vmem:[#allocation3 + $0x58] sm:$0xff] %v718
      %735 = vst [vmem:[#allocation3 + $0xa0] sm:$0xff] %v719
      %736 = vst [vmem:[#allocation3 + $0xe8] sm:$0xff] %v720
      %737 = vst [vmem:[#allocation3 + $0x130] sm:$0xff] %v721
      %738 = vst [vmem:[#allocation3 + $0x178] sm:$0xff] %v722
      %739 = vst [vmem:[#allocation3 + $0x1c0] sm:$0xff] %v723
      %740 = vst [vmem:[#allocation3 + $0x208] sm:$0xff] %v724
      %741 = vst [vmem:[#allocation3 + $0x250] sm:$0xff] %v725
      %742 = vst [vmem:[#allocation3 + $0x298] sm:$0xff] %v726
      %743 = vst [vmem:[#allocation3 + $0x2e0] sm:$0xff] %v727
      %744 = vst [vmem:[#allocation3 + $0x328] sm:$0xff] %v728
      %745 = vst [vmem:[#allocation3 + $0x370] sm:$0xff] %v729
      %746 = vst [vmem:[#allocation3 + $0x3b8] sm:$0xff] %v730
      %747 = vst [vmem:[#allocation3 + $0x400] sm:$0xff] %v731
      %748 = vst [vmem:[#allocation3 + $0x448] sm:$0xff] %v732
      %v749 = vld [vmem:[%s622] sm:$0xff]
      %v750 = vld [vmem:[%s622 + $0x8] sm:$0xff]
      %v751 = vld [vmem:[%s622 + $0x18] sm:$0xff]
      %v752 = vld [vmem:[%s622 + $0x20] sm:$0xff]
      %v753 = vld [vmem:[%s622 + $0x30] sm:$0xff]
      %v754 = vld [vmem:[%s622 + $0x38] sm:$0xff]
      %v755 = vld [vmem:[%s622 + $0x48] sm:$0xff]
      %v756 = vld [vmem:[%s622 + $0x50] sm:$0xff]
      %v757 = vld [vmem:[%s622 + $0x60] sm:$0xff]
      %v758 = vld [vmem:[%s622 + $0x68] sm:$0xff]
      %v759 = vld [vmem:[%s622 + $0x78] sm:$0xff]
      %v760 = vld [vmem:[%s622 + $0x80] sm:$0xff]
      %v761 = vld [vmem:[%s622 + $0x90] sm:$0xff]
      %v762 = vld [vmem:[%s622 + $0x98] sm:$0xff]
      %v763 = vld [vmem:[%s622 + $0xa8] sm:$0xff]
      %v764 = vld [vmem:[%s622 + $0xb0] sm:$0xff]
      %765 = vst [vmem:[#allocation3 + $0x18] sm:$0xff] %v749
      %766 = vst [vmem:[#allocation3 + $0x60] sm:$0xff] %v750
      %767 = vst [vmem:[#allocation3 + $0xa8] sm:$0xff] %v751
      %768 = vst [vmem:[#allocation3 + $0xf0] sm:$0xff] %v752
      %769 = vst [vmem:[#allocation3 + $0x138] sm:$0xff] %v753
      %770 = vst [vmem:[#allocation3 + $0x180] sm:$0xff] %v754
      %771 = vst [vmem:[#allocation3 + $0x1c8] sm:$0xff] %v755
      %772 = vst [vmem:[#allocation3 + $0x210] sm:$0xff] %v756
      %773 = vst [vmem:[#allocation3 + $0x258] sm:$0xff] %v757
      %774 = vst [vmem:[#allocation3 + $0x2a0] sm:$0xff] %v758
      %775 = vst [vmem:[#allocation3 + $0x2e8] sm:$0xff] %v759
      %776 = vst [vmem:[#allocation3 + $0x330] sm:$0xff] %v760
      %777 = vst [vmem:[#allocation3 + $0x378] sm:$0xff] %v761
      %778 = vst [vmem:[#allocation3 + $0x3c0] sm:$0xff] %v762
      %779 = vst [vmem:[#allocation3 + $0x408] sm:$0xff] %v763
      %780 = vst [vmem:[#allocation3 + $0x450] sm:$0xff] %v764
      %v781 = vld [vmem:[%s622 + $0x1] sm:$0xff]
      %v782 = vld [vmem:[%s622 + $0x9] sm:$0xff]
      %v783 = vld [vmem:[%s622 + $0x19] sm:$0xff]
      %v784 = vld [vmem:[%s622 + $0x21] sm:$0xff]
      %v785 = vld [vmem:[%s622 + $0x31] sm:$0xff]
      %v786 = vld [vmem:[%s622 + $0x39] sm:$0xff]
      %v787 = vld [vmem:[%s622 + $0x49] sm:$0xff]
      %v788 = vld [vmem:[%s622 + $0x51] sm:$0xff]
      %v789 = vld [vmem:[%s622 + $0x61] sm:$0xff]
      %v790 = vld [vmem:[%s622 + $0x69] sm:$0xff]
      %v791 = vld [vmem:[%s622 + $0x79] sm:$0xff]
      %v792 = vld [vmem:[%s622 + $0x81] sm:$0xff]
      %v793 = vld [vmem:[%s622 + $0x91] sm:$0xff]
      %v794 = vld [vmem:[%s622 + $0x99] sm:$0xff]
      %v795 = vld [vmem:[%s622 + $0xa9] sm:$0xff]
      %v796 = vld [vmem:[%s622 + $0xb1] sm:$0xff]
      %797 = vst [vmem:[#allocation3 + $0x20] sm:$0xff] %v781
      %798 = vst [vmem:[#allocation3 + $0x68] sm:$0xff] %v782
      %799 = vst [vmem:[#allocation3 + $0xb0] sm:$0xff] %v783
      %800 = vst [vmem:[#allocation3 + $0xf8] sm:$0xff] %v784
      %801 = vst [vmem:[#allocation3 + $0x140] sm:$0xff] %v785
      %802 = vst [vmem:[#allocation3 + $0x188] sm:$0xff] %v786
      %803 = vst [vmem:[#allocation3 + $0x1d0] sm:$0xff] %v787
      %804 = vst [vmem:[#allocation3 + $0x218] sm:$0xff] %v788
      %805 = vst [vmem:[#allocation3 + $0x260] sm:$0xff] %v789
      %806 = vst [vmem:[#allocation3 + $0x2a8] sm:$0xff] %v790
      %807 = vst [vmem:[#allocation3 + $0x2f0] sm:$0xff] %v791
      %808 = vst [vmem:[#allocation3 + $0x338] sm:$0xff] %v792
      %809 = vst [vmem:[#allocation3 + $0x380] sm:$0xff] %v793
      %810 = vst [vmem:[#allocation3 + $0x3c8] sm:$0xff] %v794
      %811 = vst [vmem:[#allocation3 + $0x410] sm:$0xff] %v795
      %812 = vst [vmem:[#allocation3 + $0x458] sm:$0xff] %v796
      %v813 = vld [vmem:[%s622 + $0x2] sm:$0xff]
      %v814 = vld [vmem:[%s622 + $0xa] sm:$0xff]
      %v815 = vld [vmem:[%s622 + $0x1a] sm:$0xff]
      %v816 = vld [vmem:[%s622 + $0x22] sm:$0xff]
      %v817 = vld [vmem:[%s622 + $0x32] sm:$0xff]
      %v818 = vld [vmem:[%s622 + $0x3a] sm:$0xff]
      %v819 = vld [vmem:[%s622 + $0x4a] sm:$0xff]
      %v820 = vld [vmem:[%s622 + $0x52] sm:$0xff]
      %v821 = vld [vmem:[%s622 + $0x62] sm:$0xff]
      %v822 = vld [vmem:[%s622 + $0x6a] sm:$0xff]
      %v823 = vld [vmem:[%s622 + $0x7a] sm:$0xff]
      %v824 = vld [vmem:[%s622 + $0x82] sm:$0xff]
      %v825 = vld [vmem:[%s622 + $0x92] sm:$0xff]
      %v826 = vld [vmem:[%s622 + $0x9a] sm:$0xff]
      %v827 = vld [vmem:[%s622 + $0xaa] sm:$0xff]
      %v828 = vld [vmem:[%s622 + $0xb2] sm:$0xff]
      %829 = vst [vmem:[#allocation3 + $0x28] sm:$0xff] %v813
      %830 = vst [vmem:[#allocation3 + $0x70] sm:$0xff] %v814
      %831 = vst [vmem:[#allocation3 + $0xb8] sm:$0xff] %v815
      %832 = vst [vmem:[#allocation3 + $0x100] sm:$0xff] %v816
      %833 = vst [vmem:[#allocation3 + $0x148] sm:$0xff] %v817
      %834 = vst [vmem:[#allocation3 + $0x190] sm:$0xff] %v818
      %835 = vst [vmem:[#allocation3 + $0x1d8] sm:$0xff] %v819
      %836 = vst [vmem:[#allocation3 + $0x220] sm:$0xff] %v820
      %837 = vst [vmem:[#allocation3 + $0x268] sm:$0xff] %v821
      %838 = vst [vmem:[#allocation3 + $0x2b0] sm:$0xff] %v822
      %839 = vst [vmem:[#allocation3 + $0x2f8] sm:$0xff] %v823
      %840 = vst [vmem:[#allocation3 + $0x340] sm:$0xff] %v824
      %841 = vst [vmem:[#allocation3 + $0x388] sm:$0xff] %v825
      %842 = vst [vmem:[#allocation3 + $0x3d0] sm:$0xff] %v826
      %843 = vst [vmem:[#allocation3 + $0x418] sm:$0xff] %v827
      %844 = vst [vmem:[#allocation3 + $0x460] sm:$0xff] %v828
      %s845 = scalar_lea.vmem [#allocation2], 48
      %v846 = vld [vmem:[%s845] sm:$0xff]
      %v847 = vld [vmem:[%s845 + $0x8] sm:$0xff]
      %v848 = vld [vmem:[%s845 + $0x18] sm:$0xff]
      %v849 = vld [vmem:[%s845 + $0x20] sm:$0xff]
      %v850 = vld [vmem:[%s845 + $0x30] sm:$0xff]
      %v851 = vld [vmem:[%s845 + $0x38] sm:$0xff]
      %v852 = vld [vmem:[%s845 + $0x48] sm:$0xff]
      %v853 = vld [vmem:[%s845 + $0x50] sm:$0xff]
      %v854 = vld [vmem:[%s845 + $0x60] sm:$0xff]
      %v855 = vld [vmem:[%s845 + $0x68] sm:$0xff]
      %v856 = vld [vmem:[%s845 + $0x78] sm:$0xff]
      %v857 = vld [vmem:[%s845 + $0x80] sm:$0xff]
      %v858 = vld [vmem:[%s845 + $0x90] sm:$0xff]
      %v859 = vld [vmem:[%s845 + $0x98] sm:$0xff]
      %v860 = vld [vmem:[%s845 + $0xa8] sm:$0xff]
      %v861 = vld [vmem:[%s845 + $0xb0] sm:$0xff]
      %862 = vst [vmem:[#allocation3 + $0x30] sm:$0xff] %v846
      %863 = vst [vmem:[#allocation3 + $0x78] sm:$0xff] %v847
      %864 = vst [vmem:[#allocation3 + $0xc0] sm:$0xff] %v848
      %865 = vst [vmem:[#allocation3 + $0x108] sm:$0xff] %v849
      %866 = vst [vmem:[#allocation3 + $0x150] sm:$0xff] %v850
      %867 = vst [vmem:[#allocation3 + $0x198] sm:$0xff] %v851
      %868 = vst [vmem:[#allocation3 + $0x1e0] sm:$0xff] %v852
      %869 = vst [vmem:[#allocation3 + $0x228] sm:$0xff] %v853
      %870 = vst [vmem:[#allocation3 + $0x270] sm:$0xff] %v854
      %871 = vst [vmem:[#allocation3 + $0x2b8] sm:$0xff] %v855
      %872 = vst [vmem:[#allocation3 + $0x300] sm:$0xff] %v856
      %873 = vst [vmem:[#allocation3 + $0x348] sm:$0xff] %v857
      %874 = vst [vmem:[#allocation3 + $0x390] sm:$0xff] %v858
      %875 = vst [vmem:[#allocation3 + $0x3d8] sm:$0xff] %v859
      %876 = vst [vmem:[#allocation3 + $0x420] sm:$0xff] %v860
      %877 = vst [vmem:[#allocation3 + $0x468] sm:$0xff] %v861
      %v878 = vld [vmem:[%s845 + $0x1] sm:$0xff]
      %v879 = vld [vmem:[%s845 + $0x9] sm:$0xff]
      %v880 = vld [vmem:[%s845 + $0x19] sm:$0xff]
      %v881 = vld [vmem:[%s845 + $0x21] sm:$0xff]
      %v882 = vld [vmem:[%s845 + $0x31] sm:$0xff]
      %v883 = vld [vmem:[%s845 + $0x39] sm:$0xff]
      %v884 = vld [vmem:[%s845 + $0x49] sm:$0xff]
      %v885 = vld [vmem:[%s845 + $0x51] sm:$0xff]
      %v886 = vld [vmem:[%s845 + $0x61] sm:$0xff]
      %v887 = vld [vmem:[%s845 + $0x69] sm:$0xff]
      %v888 = vld [vmem:[%s845 + $0x79] sm:$0xff]
      %v889 = vld [vmem:[%s845 + $0x81] sm:$0xff]
      %v890 = vld [vmem:[%s845 + $0x91] sm:$0xff]
      %v891 = vld [vmem:[%s845 + $0x99] sm:$0xff]
      %v892 = vld [vmem:[%s845 + $0xa9] sm:$0xff]
      %v893 = vld [vmem:[%s845 + $0xb1] sm:$0xff]
      %894 = vst [vmem:[#allocation3 + $0x38] sm:$0xff] %v878
      %895 = vst [vmem:[#allocation3 + $0x80] sm:$0xff] %v879
      %896 = vst [vmem:[#allocation3 + $0xc8] sm:$0xff] %v880
      %897 = vst [vmem:[#allocation3 + $0x110] sm:$0xff] %v881
      %898 = vst [vmem:[#allocation3 + $0x158] sm:$0xff] %v882
      %899 = vst [vmem:[#allocation3 + $0x1a0] sm:$0xff] %v883
      %900 = vst [vmem:[#allocation3 + $0x1e8] sm:$0xff] %v884
      %901 = vst [vmem:[#allocation3 + $0x230] sm:$0xff] %v885
      %902 = vst [vmem:[#allocation3 + $0x278] sm:$0xff] %v886
      %903 = vst [vmem:[#allocation3 + $0x2c0] sm:$0xff] %v887
      %904 = vst [vmem:[#allocation3 + $0x308] sm:$0xff] %v888
      %905 = vst [vmem:[#allocation3 + $0x350] sm:$0xff] %v889
      %906 = vst [vmem:[#allocation3 + $0x398] sm:$0xff] %v890
      %907 = vst [vmem:[#allocation3 + $0x3e0] sm:$0xff] %v891
      %908 = vst [vmem:[#allocation3 + $0x428] sm:$0xff] %v892
      %909 = vst [vmem:[#allocation3 + $0x470] sm:$0xff] %v893
      %v910 = vld [vmem:[%s845 + $0x2] sm:$0xff]
      %v911 = vld [vmem:[%s845 + $0xa] sm:$0xff]
      %v912 = vld [vmem:[%s845 + $0x1a] sm:$0xff]
      %v913 = vld [vmem:[%s845 + $0x22] sm:$0xff]
      %v914 = vld [vmem:[%s845 + $0x32] sm:$0xff]
      %v915 = vld [vmem:[%s845 + $0x3a] sm:$0xff]
      %v916 = vld [vmem:[%s845 + $0x4a] sm:$0xff]
      %v917 = vld [vmem:[%s845 + $0x52] sm:$0xff]
      %v918 = vld [vmem:[%s845 + $0x62] sm:$0xff]
      %v919 = vld [vmem:[%s845 + $0x6a] sm:$0xff]
      %v920 = vld [vmem:[%s845 + $0x7a] sm:$0xff]
      %v921 = vld [vmem:[%s845 + $0x82] sm:$0xff]
      %v922 = vld [vmem:[%s845 + $0x92] sm:$0xff]
      %v923 = vld [vmem:[%s845 + $0x9a] sm:$0xff]
      %v924 = vld [vmem:[%s845 + $0xaa] sm:$0xff]
      %v925 = vld [vmem:[%s845 + $0xb2] sm:$0xff]
      %926 = vst [vmem:[#allocation3 + $0x40] sm:$0xff] %v910
      %927 = vst [vmem:[#allocation3 + $0x88] sm:$0xff] %v911
      %928 = vst [vmem:[#allocation3 + $0xd0] sm:$0xff] %v912
      %929 = vst [vmem:[#allocation3 + $0x118] sm:$0xff] %v913
      %930 = vst [vmem:[#allocation3 + $0x160] sm:$0xff] %v914
      %931 = vst [vmem:[#allocation3 + $0x1a8] sm:$0xff] %v915
      %932 = vst [vmem:[#allocation3 + $0x1f0] sm:$0xff] %v916
      %933 = vst [vmem:[#allocation3 + $0x238] sm:$0xff] %v917
      %934 = vst [vmem:[#allocation3 + $0x280] sm:$0xff] %v918
      %935 = vst [vmem:[#allocation3 + $0x2c8] sm:$0xff] %v919
      %936 = vst [vmem:[#allocation3 + $0x310] sm:$0xff] %v920
      %937 = vst [vmem:[#allocation3 + $0x358] sm:$0xff] %v921
      %938 = vst [vmem:[#allocation3 + $0x3a0] sm:$0xff] %v922
      %939 = vst [vmem:[#allocation3 + $0x3e8] sm:$0xff] %v923
      %940 = vst [vmem:[#allocation3 + $0x430] sm:$0xff] %v924
      %941 = vst [vmem:[#allocation3 + $0x478] sm:$0xff] %v925
      %v942 = vld [vmem:[#allocation3] sm:$0xff]
      %v943 = vld [vmem:[#allocation3 + $0x8] sm:$0xff]
      %v944 = vld [vmem:[#allocation3 + $0x10] sm:$0xff]
      %v945 = vld [vmem:[#allocation3 + $0x18] sm:$0xff]
      %v946 = vld [vmem:[#allocation3 + $0x20] sm:$0xff]
      %v947 = vld [vmem:[#allocation3 + $0x28] sm:$0xff]
      %v948 = vld [vmem:[#allocation3 + $0x30] sm:$0xff]
      %v949 = vld [vmem:[#allocation3 + $0x38] sm:$0xff]
      %v950 = vld [vmem:[#allocation3 + $0x40] sm:$0xff]
      %v951 = vld [vmem:[#allocation3 + $0x48] sm:$0xff]
      %v952 = vld [vmem:[#allocation3 + $0x50] sm:$0xff]
      %v953 = vld [vmem:[#allocation3 + $0x58] sm:$0xff]
      %v954 = vld [vmem:[#allocation3 + $0x60] sm:$0xff]
      %v955 = vld [vmem:[#allocation3 + $0x68] sm:$0xff]
      %v956 = vld [vmem:[#allocation3 + $0x70] sm:$0xff]
      %v957 = vld [vmem:[#allocation3 + $0x78] sm:$0xff]
      %v958 = vld [vmem:[#allocation3 + $0x80] sm:$0xff]
      %v959 = vld [vmem:[#allocation3 + $0x88] sm:$0xff]
      %v960 = vld [vmem:[#allocation3 + $0x90] sm:$0xff]
      %v961 = vld [vmem:[#allocation3 + $0x98] sm:$0xff]
      %v962 = vld [vmem:[#allocation3 + $0xa0] sm:$0xff]
      %v963 = vld [vmem:[#allocation3 + $0xa8] sm:$0xff]
      %v964 = vld [vmem:[#allocation3 + $0xb0] sm:$0xff]
      %v965 = vld [vmem:[#allocation3 + $0xb8] sm:$0xff]
      %v966 = vld [vmem:[#allocation3 + $0xc0] sm:$0xff]
      %v967 = vld [vmem:[#allocation3 + $0xc8] sm:$0xff]
      %v968 = vld [vmem:[#allocation3 + $0xd0] sm:$0xff]
      %v969 = vld [vmem:[#allocation3 + $0xd8] sm:$0xff]
      %v970 = vld [vmem:[#allocation3 + $0xe0] sm:$0xff]
      %v971 = vld [vmem:[#allocation3 + $0xe8] sm:$0xff]
      %v972 = vld [vmem:[#allocation3 + $0xf0] sm:$0xff]
      %v973 = vld [vmem:[#allocation3 + $0xf8] sm:$0xff]
      %v974 = vld [vmem:[#allocation3 + $0x100] sm:$0xff]
      %v975 = vld [vmem:[#allocation3 + $0x108] sm:$0xff]
      %v976 = vld [vmem:[#allocation3 + $0x110] sm:$0xff]
      %v977 = vld [vmem:[#allocation3 + $0x118] sm:$0xff]
      %v978 = vld [vmem:[#allocation3 + $0x120] sm:$0xff]
      %v979 = vld [vmem:[#allocation3 + $0x128] sm:$0xff]
      %v980 = vld [vmem:[#allocation3 + $0x130] sm:$0xff]
      %v981 = vld [vmem:[#allocation3 + $0x138] sm:$0xff]
      %v982 = vld [vmem:[#allocation3 + $0x140] sm:$0xff]
      %v983 = vld [vmem:[#allocation3 + $0x148] sm:$0xff]
      %v984 = vld [vmem:[#allocation3 + $0x150] sm:$0xff]
      %v985 = vld [vmem:[#allocation3 + $0x158] sm:$0xff]
      %v986 = vld [vmem:[#allocation3 + $0x160] sm:$0xff]
      %v987 = vld [vmem:[#allocation3 + $0x168] sm:$0xff]
      %v988 = vld [vmem:[#allocation3 + $0x170] sm:$0xff]
      %v989 = vld [vmem:[#allocation3 + $0x178] sm:$0xff]
      %v990 = vld [vmem:[#allocation3 + $0x180] sm:$0xff]
      %v991 = vld [vmem:[#allocation3 + $0x188] sm:$0xff]
      %v992 = vld [vmem:[#allocation3 + $0x190] sm:$0xff]
      %v993 = vld [vmem:[#allocation3 + $0x198] sm:$0xff]
      %v994 = vld [vmem:[#allocation3 + $0x1a0] sm:$0xff]
      %v995 = vld [vmem:[#allocation3 + $0x1a8] sm:$0xff]
      %v996 = vld [vmem:[#allocation3 + $0x1b0] sm:$0xff]
      %v997 = vld [vmem:[#allocation3 + $0x1b8] sm:$0xff]
      %v998 = vld [vmem:[#allocation3 + $0x1c0] sm:$0xff]
      %v999 = vld [vmem:[#allocation3 + $0x1c8] sm:$0xff]
      %v1000 = vld [vmem:[#allocation3 + $0x1d0] sm:$0xff]
      %v1001 = vld [vmem:[#allocation3 + $0x1d8] sm:$0xff]
      %v1002 = vld [vmem:[#allocation3 + $0x1e0] sm:$0xff]
      %v1003 = vld [vmem:[#allocation3 + $0x1e8] sm:$0xff]
      %v1004 = vld [vmem:[#allocation3 + $0x1f0] sm:$0xff]
      %v1005 = vld [vmem:[#allocation3 + $0x1f8] sm:$0xff]
      %v1006 = vld [vmem:[#allocation3 + $0x200] sm:$0xff]
      %v1007 = vld [vmem:[#allocation3 + $0x208] sm:$0xff]
      %v1008 = vld [vmem:[#allocation3 + $0x210] sm:$0xff]
      %v1009 = vld [vmem:[#allocation3 + $0x218] sm:$0xff]
      %v1010 = vld [vmem:[#allocation3 + $0x220] sm:$0xff]
      %v1011 = vld [vmem:[#allocation3 + $0x228] sm:$0xff]
      %v1012 = vld [vmem:[#allocation3 + $0x230] sm:$0xff]
      %v1013 = vld [vmem:[#allocation3 + $0x238] sm:$0xff]
      %v1014 = vld [vmem:[#allocation3 + $0x240] sm:$0xff]
      %v1015 = vld [vmem:[#allocation3 + $0x248] sm:$0xff]
      %v1016 = vld [vmem:[#allocation3 + $0x250] sm:$0xff]
      %v1017 = vld [vmem:[#allocation3 + $0x258] sm:$0xff]
      %v1018 = vld [vmem:[#allocation3 + $0x260] sm:$0xff]
      %v1019 = vld [vmem:[#allocation3 + $0x268] sm:$0xff]
      %v1020 = vld [vmem:[#allocation3 + $0x270] sm:$0xff]
      %v1021 = vld [vmem:[#allocation3 + $0x278] sm:$0xff]
      %v1022 = vld [vmem:[#allocation3 + $0x280] sm:$0xff]
      %v1023 = vld [vmem:[#allocation3 + $0x288] sm:$0xff]
      %v1024 = vld [vmem:[#allocation3 + $0x290] sm:$0xff]
      %v1025 = vld [vmem:[#allocation3 + $0x298] sm:$0xff]
      %v1026 = vld [vmem:[#allocation3 + $0x2a0] sm:$0xff]
      %v1027 = vld [vmem:[#allocation3 + $0x2a8] sm:$0xff]
      %v1028 = vld [vmem:[#allocation3 + $0x2b0] sm:$0xff]
      %v1029 = vld [vmem:[#allocation3 + $0x2b8] sm:$0xff]
      %v1030 = vld [vmem:[#allocation3 + $0x2c0] sm:$0xff]
      %v1031 = vld [vmem:[#allocation3 + $0x2c8] sm:$0xff]
      %v1032 = vld [vmem:[#allocation3 + $0x2d0] sm:$0xff]
      %v1033 = vld [vmem:[#allocation3 + $0x2d8] sm:$0xff]
      %v1034 = vld [vmem:[#allocation3 + $0x2e0] sm:$0xff]
      %v1035 = vld [vmem:[#allocation3 + $0x2e8] sm:$0xff]
      %v1036 = vld [vmem:[#allocation3 + $0x2f0] sm:$0xff]
      %v1037 = vld [vmem:[#allocation3 + $0x2f8] sm:$0xff]
      %v1038 = vld [vmem:[#allocation3 + $0x300] sm:$0xff]
      %v1039 = vld [vmem:[#allocation3 + $0x308] sm:$0xff]
      %v1040 = vld [vmem:[#allocation3 + $0x310] sm:$0xff]
      %v1041 = vld [vmem:[#allocation3 + $0x318] sm:$0xff]
      %v1042 = vld [vmem:[#allocation3 + $0x320] sm:$0xff]
      %v1043 = vld [vmem:[#allocation3 + $0x328] sm:$0xff]
      %v1044 = vld [vmem:[#allocation3 + $0x330] sm:$0xff]
      %v1045 = vld [vmem:[#allocation3 + $0x338] sm:$0xff]
      %v1046 = vld [vmem:[#allocation3 + $0x340] sm:$0xff]
      %v1047 = vld [vmem:[#allocation3 + $0x348] sm:$0xff]
      %v1048 = vld [vmem:[#allocation3 + $0x350] sm:$0xff]
      %v1049 = vld [vmem:[#allocation3 + $0x358] sm:$0xff]
      %v1050 = vld [vmem:[#allocation3 + $0x360] sm:$0xff]
      %v1051 = vld [vmem:[#allocation3 + $0x368] sm:$0xff]
      %v1052 = vld [vmem:[#allocation3 + $0x370] sm:$0xff]
      %v1053 = vld [vmem:[#allocation3 + $0x378] sm:$0xff]
      %v1054 = vld [vmem:[#allocation3 + $0x380] sm:$0xff]
      %v1055 = vld [vmem:[#allocation3 + $0x388] sm:$0xff]
      %v1056 = vld [vmem:[#allocation3 + $0x390] sm:$0xff]
      %v1057 = vld [vmem:[#allocation3 + $0x398] sm:$0xff]
      %v1058 = vld [vmem:[#allocation3 + $0x3a0] sm:$0xff]
      %v1059 = vld [vmem:[#allocation3 + $0x3a8] sm:$0xff]
      %v1060 = vld [vmem:[#allocation3 + $0x3b0] sm:$0xff]
      %v1061 = vld [vmem:[#allocation3 + $0x3b8] sm:$0xff]
      %v1062 = vld [vmem:[#allocation3 + $0x3c0] sm:$0xff]
      %v1063 = vld [vmem:[#allocation3 + $0x3c8] sm:$0xff]
      %v1064 = vld [vmem:[#allocation3 + $0x3d0] sm:$0xff]
      %v1065 = vld [vmem:[#allocation3 + $0x3d8] sm:$0xff]
      %v1066 = vld [vmem:[#allocation3 + $0x3e0] sm:$0xff]
      %v1067 = vld [vmem:[#allocation3 + $0x3e8] sm:$0xff]
      %v1068 = vld [vmem:[#allocation3 + $0x3f0] sm:$0xff]
      %v1069 = vld [vmem:[#allocation3 + $0x3f8] sm:$0xff]
      %v1070 = vld [vmem:[#allocation3 + $0x400] sm:$0xff]
      %v1071 = vld [vmem:[#allocation3 + $0x408] sm:$0xff]
      %v1072 = vld [vmem:[#allocation3 + $0x410] sm:$0xff]
      %v1073 = vld [vmem:[#allocation3 + $0x418] sm:$0xff]
      %v1074 = vld [vmem:[#allocation3 + $0x420] sm:$0xff]
      %v1075 = vld [vmem:[#allocation3 + $0x428] sm:$0xff]
      %v1076 = vld [vmem:[#allocation3 + $0x430] sm:$0xff]
      %v1077 = vld [vmem:[#allocation3 + $0x438] sm:$0xff]
      %v1078 = vld [vmem:[#allocation3 + $0x440] sm:$0xff]
      %v1079 = vld [vmem:[#allocation3 + $0x448] sm:$0xff]
      %v1080 = vld [vmem:[#allocation3 + $0x450] sm:$0xff]
      %v1081 = vld [vmem:[#allocation3 + $0x458] sm:$0xff]
      %v1082 = vld [vmem:[#allocation3 + $0x460] sm:$0xff]
      %v1083 = vld [vmem:[#allocation3 + $0x468] sm:$0xff]
      %v1084 = vld [vmem:[#allocation3 + $0x470] sm:$0xff]
      %v1085 = vld [vmem:[#allocation3 + $0x478] sm:$0xff]
      %v1086 = vld [vmem:[%s5] sm:$0xff]
      %v1087 = vld [vmem:[%s5 + $0x8] sm:$0xff]
      %v1088 = vld [vmem:[%s5 + $0x10] sm:$0xff]
      %v1089 = vld [vmem:[%s5 + $0x18] sm:$0xff]
      %v1090 = vld [vmem:[%s5 + $0x20] sm:$0xff]
      %v1091 = vld [vmem:[%s5 + $0x28] sm:$0xff]
      %v1092 = vld [vmem:[%s5 + $0x30] sm:$0xff]
      %v1093 = vld [vmem:[%s5 + $0x38] sm:$0xff]
      %v1094 = vld [vmem:[%s5 + $0x40] sm:$0xff]
      %v1095 = vld [vmem:[%s5 + $0x48] sm:$0xff]
      %v1096 = vld [vmem:[%s5 + $0x50] sm:$0xff]
      %v1097 = vld [vmem:[%s5 + $0x58] sm:$0xff]
      %v1098 = vld [vmem:[%s5 + $0x60] sm:$0xff]
      %v1099 = vld [vmem:[%s5 + $0x68] sm:$0xff]
      %v1100 = vld [vmem:[%s5 + $0x70] sm:$0xff]
      %v1101 = vld [vmem:[%s5 + $0x78] sm:$0xff]
      %v1102 = vld [vmem:[%s5 + $0x80] sm:$0xff]
      %v1103 = vld [vmem:[%s5 + $0x88] sm:$0xff]
      %v1104 = vld [vmem:[%s5 + $0x90] sm:$0xff]
      %v1105 = vld [vmem:[%s5 + $0x98] sm:$0xff]
      %v1106 = vld [vmem:[%s5 + $0xa0] sm:$0xff]
      %v1107 = vld [vmem:[%s5 + $0xa8] sm:$0xff]
      %v1108 = vld [vmem:[%s5 + $0xb0] sm:$0xff]
      %v1109 = vld [vmem:[%s5 + $0xb8] sm:$0xff]
      %v1110 = vld [vmem:[%s5 + $0xc0] sm:$0xff]
      %v1111 = vld [vmem:[%s5 + $0xc8] sm:$0xff]
      %v1112 = vld [vmem:[%s5 + $0xd0] sm:$0xff]
      %v1113 = vld [vmem:[%s5 + $0xd8] sm:$0xff]
      %v1114 = vld [vmem:[%s5 + $0xe0] sm:$0xff]
      %v1115 = vld [vmem:[%s5 + $0xe8] sm:$0xff]
      %v1116 = vld [vmem:[%s5 + $0xf0] sm:$0xff]
      %v1117 = vld [vmem:[%s5 + $0xf8] sm:$0xff]
      %v1118 = vld [vmem:[%s5 + $0x100] sm:$0xff]
      %v1119 = vld [vmem:[%s5 + $0x108] sm:$0xff]
      %v1120 = vld [vmem:[%s5 + $0x110] sm:$0xff]
      %v1121 = vld [vmem:[%s5 + $0x118] sm:$0xff]
      %v1122 = vld [vmem:[%s5 + $0x120] sm:$0xff]
      %v1123 = vld [vmem:[%s5 + $0x128] sm:$0xff]
      %v1124 = vld [vmem:[%s5 + $0x130] sm:$0xff]
      %v1125 = vld [vmem:[%s5 + $0x138] sm:$0xff]
      %v1126 = vld [vmem:[%s5 + $0x140] sm:$0xff]
      %v1127 = vld [vmem:[%s5 + $0x148] sm:$0xff]
      %v1128 = vld [vmem:[%s5 + $0x150] sm:$0xff]
      %v1129 = vld [vmem:[%s5 + $0x158] sm:$0xff]
      %v1130 = vld [vmem:[%s5 + $0x160] sm:$0xff]
      %v1131 = vld [vmem:[%s5 + $0x168] sm:$0xff]
      %v1132 = vld [vmem:[%s5 + $0x170] sm:$0xff]
      %v1133 = vld [vmem:[%s5 + $0x178] sm:$0xff]
      %v1134 = vld [vmem:[%s5 + $0x180] sm:$0xff]
      %v1135 = vld [vmem:[%s5 + $0x188] sm:$0xff]
      %v1136 = vld [vmem:[%s5 + $0x190] sm:$0xff]
      %v1137 = vld [vmem:[%s5 + $0x198] sm:$0xff]
      %v1138 = vld [vmem:[%s5 + $0x1a0] sm:$0xff]
      %v1139 = vld [vmem:[%s5 + $0x1a8] sm:$0xff]
      %v1140 = vld [vmem:[%s5 + $0x1b0] sm:$0xff]
      %v1141 = vld [vmem:[%s5 + $0x1b8] sm:$0xff]
      %v1142 = vld [vmem:[%s5 + $0x1c0] sm:$0xff]
      %v1143 = vld [vmem:[%s5 + $0x1c8] sm:$0xff]
      %v1144 = vld [vmem:[%s5 + $0x1d0] sm:$0xff]
      %v1145 = vld [vmem:[%s5 + $0x1d8] sm:$0xff]
      %v1146 = vld [vmem:[%s5 + $0x1e0] sm:$0xff]
      %v1147 = vld [vmem:[%s5 + $0x1e8] sm:$0xff]
      %v1148 = vld [vmem:[%s5 + $0x1f0] sm:$0xff]
      %v1149 = vld [vmem:[%s5 + $0x1f8] sm:$0xff]
      %v1150 = vld [vmem:[%s5 + $0x200] sm:$0xff]
      %v1151 = vld [vmem:[%s5 + $0x208] sm:$0xff]
      %v1152 = vld [vmem:[%s5 + $0x210] sm:$0xff]
      %v1153 = vld [vmem:[%s5 + $0x218] sm:$0xff]
      %v1154 = vld [vmem:[%s5 + $0x220] sm:$0xff]
      %v1155 = vld [vmem:[%s5 + $0x228] sm:$0xff]
      %v1156 = vld [vmem:[%s5 + $0x230] sm:$0xff]
      %v1157 = vld [vmem:[%s5 + $0x238] sm:$0xff]
      %v1158 = vld [vmem:[%s5 + $0x240] sm:$0xff]
      %v1159 = vld [vmem:[%s5 + $0x248] sm:$0xff]
      %v1160 = vld [vmem:[%s5 + $0x250] sm:$0xff]
      %v1161 = vld [vmem:[%s5 + $0x258] sm:$0xff]
      %v1162 = vld [vmem:[%s5 + $0x260] sm:$0xff]
      %v1163 = vld [vmem:[%s5 + $0x268] sm:$0xff]
      %v1164 = vld [vmem:[%s5 + $0x270] sm:$0xff]
      %v1165 = vld [vmem:[%s5 + $0x278] sm:$0xff]
      %v1166 = vld [vmem:[%s5 + $0x280] sm:$0xff]
      %v1167 = vld [vmem:[%s5 + $0x288] sm:$0xff]
      %v1168 = vld [vmem:[%s5 + $0x290] sm:$0xff]
      %v1169 = vld [vmem:[%s5 + $0x298] sm:$0xff]
      %v1170 = vld [vmem:[%s5 + $0x2a0] sm:$0xff]
      %v1171 = vld [vmem:[%s5 + $0x2a8] sm:$0xff]
      %v1172 = vld [vmem:[%s5 + $0x2b0] sm:$0xff]
      %v1173 = vld [vmem:[%s5 + $0x2b8] sm:$0xff]
      %v1174 = vld [vmem:[%s5 + $0x2c0] sm:$0xff]
      %v1175 = vld [vmem:[%s5 + $0x2c8] sm:$0xff]
      %v1176 = vld [vmem:[%s5 + $0x2d0] sm:$0xff]
      %v1177 = vld [vmem:[%s5 + $0x2d8] sm:$0xff]
      %v1178 = vld [vmem:[%s5 + $0x2e0] sm:$0xff]
      %v1179 = vld [vmem:[%s5 + $0x2e8] sm:$0xff]
      %v1180 = vld [vmem:[%s5 + $0x2f0] sm:$0xff]
      %v1181 = vld [vmem:[%s5 + $0x2f8] sm:$0xff]
      %v1182 = vld [vmem:[%s5 + $0x300] sm:$0xff]
      %v1183 = vld [vmem:[%s5 + $0x308] sm:$0xff]
      %v1184 = vld [vmem:[%s5 + $0x310] sm:$0xff]
      %v1185 = vld [vmem:[%s5 + $0x318] sm:$0xff]
      %v1186 = vld [vmem:[%s5 + $0x320] sm:$0xff]
      %v1187 = vld [vmem:[%s5 + $0x328] sm:$0xff]
      %v1188 = vld [vmem:[%s5 + $0x330] sm:$0xff]
      %v1189 = vld [vmem:[%s5 + $0x338] sm:$0xff]
      %v1190 = vld [vmem:[%s5 + $0x340] sm:$0xff]
      %v1191 = vld [vmem:[%s5 + $0x348] sm:$0xff]
      %v1192 = vld [vmem:[%s5 + $0x350] sm:$0xff]
      %v1193 = vld [vmem:[%s5 + $0x358] sm:$0xff]
      %v1194 = vld [vmem:[%s5 + $0x360] sm:$0xff]
      %v1195 = vld [vmem:[%s5 + $0x368] sm:$0xff]
      %v1196 = vld [vmem:[%s5 + $0x370] sm:$0xff]
      %v1197 = vld [vmem:[%s5 + $0x378] sm:$0xff]
      %v1198 = vld [vmem:[%s5 + $0x380] sm:$0xff]
      %v1199 = vld [vmem:[%s5 + $0x388] sm:$0xff]
      %v1200 = vld [vmem:[%s5 + $0x390] sm:$0xff]
      %v1201 = vld [vmem:[%s5 + $0x398] sm:$0xff]
      %v1202 = vld [vmem:[%s5 + $0x3a0] sm:$0xff]
      %v1203 = vld [vmem:[%s5 + $0x3a8] sm:$0xff]
      %v1204 = vld [vmem:[%s5 + $0x3b0] sm:$0xff]
      %v1205 = vld [vmem:[%s5 + $0x3b8] sm:$0xff]
      %v1206 = vld [vmem:[%s5 + $0x3c0] sm:$0xff]
      %v1207 = vld [vmem:[%s5 + $0x3c8] sm:$0xff]
      %v1208 = vld [vmem:[%s5 + $0x3d0] sm:$0xff]
      %v1209 = vld [vmem:[%s5 + $0x3d8] sm:$0xff]
      %v1210 = vld [vmem:[%s5 + $0x3e0] sm:$0xff]
      %v1211 = vld [vmem:[%s5 + $0x3e8] sm:$0xff]
      %v1212 = vld [vmem:[%s5 + $0x3f0] sm:$0xff]
      %v1213 = vld [vmem:[%s5 + $0x3f8] sm:$0xff]
      %v1214 = vld [vmem:[%s5 + $0x400] sm:$0xff]
      %v1215 = vld [vmem:[%s5 + $0x408] sm:$0xff]
      %v1216 = vld [vmem:[%s5 + $0x410] sm:$0xff]
      %v1217 = vld [vmem:[%s5 + $0x418] sm:$0xff]
      %v1218 = vld [vmem:[%s5 + $0x420] sm:$0xff]
      %v1219 = vld [vmem:[%s5 + $0x428] sm:$0xff]
      %v1220 = vld [vmem:[%s5 + $0x430] sm:$0xff]
      %v1221 = vld [vmem:[%s5 + $0x438] sm:$0xff]
      %v1222 = vld [vmem:[%s5 + $0x440] sm:$0xff]
      %v1223 = vld [vmem:[%s5 + $0x448] sm:$0xff]
      %v1224 = vld [vmem:[%s5 + $0x450] sm:$0xff]
      %v1225 = vld [vmem:[%s5 + $0x458] sm:$0xff]
      %v1226 = vld [vmem:[%s5 + $0x460] sm:$0xff]
      %v1227 = vld [vmem:[%s5 + $0x468] sm:$0xff]
      %v1228 = vld [vmem:[%s5 + $0x470] sm:$0xff]
      %v1229 = vld [vmem:[%s5 + $0x478] sm:$0xff]
      %1230 = vmatpush.msra.mxu0 %v1101
      %1231 = vmatpush.msra.mxu0 %v1100
      %1232 = vmatpush.msra.mxu0 %v1099
      %1233 = vmatpush.msra.mxu0 %v1098
      %1234 = vmatpush.msra.mxu0 %v1097
      %1235 = vmatpush.msra.mxu0 %v1096
      %1236 = vmatpush.msra.mxu0 %v1095
      %1237 = vmatpush.msra.mxu0 %v1094
      %1238 = vmatpush.msra.mxu0 %v1093
      %1239 = vmatpush.msra.mxu0 %v1092
      %1240 = vmatpush.msra.mxu0 %v1091
      %1241 = vmatpush.msra.mxu0 %v1090
      %1242 = vmatpush.msra.mxu0 %v1089
      %1243 = vmatpush.msra.mxu0 %v1088
      %1244 = vmatpush.msra.mxu0 %v1087
      %1245 = vmatpush.msra.mxu0 %v1086
      %1246 = vmatmul.f32.gmra.mxu0 %v942
      %v1247 = vpop.f32.mrf.mxu0
      %v1248 = vadd.f32 0.0, %v1247
      %1249 = vmatmul.f32.gmra.mxu0 %v951
      %v1250 = vpop.f32.mrf.mxu0
      %v1251 = vadd.f32 0.0, %v1250
      %1252 = vmatmul.f32.gmra.mxu0 %v960
      %v1253 = vpop.f32.mrf.mxu0
      %v1254 = vadd.f32 0.0, %v1253
      %1255 = vmatmul.f32.gmra.mxu0 %v969
      %v1256 = vpop.f32.mrf.mxu0
      %v1257 = vadd.f32 0.0, %v1256
      %1258 = vmatmul.f32.gmra.mxu0 %v978
      %v1259 = vpop.f32.mrf.mxu0
      %v1260 = vadd.f32 0.0, %v1259
      %1261 = vmatmul.f32.gmra.mxu0 %v987
      %v1262 = vpop.f32.mrf.mxu0
      %v1263 = vadd.f32 0.0, %v1262
      %1264 = vmatmul.f32.gmra.mxu0 %v996
      %v1265 = vpop.f32.mrf.mxu0
      %v1266 = vadd.f32 0.0, %v1265
      %1267 = vmatmul.f32.gmra.mxu0 %v1005
      %v1268 = vpop.f32.mrf.mxu0
      %v1269 = vadd.f32 0.0, %v1268
      %1270 = vmatmul.f32.gmra.mxu0 %v1014
      %v1271 = vpop.f32.mrf.mxu0
      %v1272 = vadd.f32 0.0, %v1271
      %1273 = vmatmul.f32.gmra.mxu0 %v1023
      %v1274 = vpop.f32.mrf.mxu0
      %v1275 = vadd.f32 0.0, %v1274
      %1276 = vmatmul.f32.gmra.mxu0 %v1032
      %v1277 = vpop.f32.mrf.mxu0
      %v1278 = vadd.f32 0.0, %v1277
      %1279 = vmatmul.f32.gmra.mxu0 %v1041
      %v1280 = vpop.f32.mrf.mxu0
      %v1281 = vadd.f32 0.0, %v1280
      %1282 = vmatmul.f32.gmra.mxu0 %v1050
      %v1283 = vpop.f32.mrf.mxu0
      %v1284 = vadd.f32 0.0, %v1283
      %1285 = vmatmul.f32.gmra.mxu0 %v1059
      %v1286 = vpop.f32.mrf.mxu0
      %v1287 = vadd.f32 0.0, %v1286
      %1288 = vmatmul.f32.gmra.mxu0 %v1068
      %v1289 = vpop.f32.mrf.mxu0
      %v1290 = vadd.f32 0.0, %v1289
      %1291 = vmatmul.f32.gmra.mxu0 %v1077
      %v1292 = vpop.f32.mrf.mxu0
      %v1293 = vadd.f32 0.0, %v1292
      %1294 = vdwg.mxu0
      %1295 = vmatpush.msra.mxu0 %v1117
      %1296 = vmatpush.msra.mxu0 %v1116
      %1297 = vmatpush.msra.mxu0 %v1115
      %1298 = vmatpush.msra.mxu0 %v1114
      %1299 = vmatpush.msra.mxu0 %v1113
      %1300 = vmatpush.msra.mxu0 %v1112
      %1301 = vmatpush.msra.mxu0 %v1111
      %1302 = vmatpush.msra.mxu0 %v1110
      %1303 = vmatpush.msra.mxu0 %v1109
      %1304 = vmatpush.msra.mxu0 %v1108
      %1305 = vmatpush.msra.mxu0 %v1107
      %1306 = vmatpush.msra.mxu0 %v1106
      %1307 = vmatpush.msra.mxu0 %v1105
      %1308 = vmatpush.msra.mxu0 %v1104
      %1309 = vmatpush.msra.mxu0 %v1103
      %1310 = vmatpush.msra.mxu0 %v1102
      %1311 = vmatmul.f32.gmra.mxu0 %v943
      %v1312 = vpop.f32.mrf.mxu0
      %v1313 = vadd.f32 %v1248, %v1312
      %1314 = vmatmul.f32.gmra.mxu0 %v952
      %v1315 = vpop.f32.mrf.mxu0
      %v1316 = vadd.f32 %v1251, %v1315
      %1317 = vmatmul.f32.gmra.mxu0 %v961
      %v1318 = vpop.f32.mrf.mxu0
      %v1319 = vadd.f32 %v1254, %v1318
      %1320 = vmatmul.f32.gmra.mxu0 %v970
      %v1321 = vpop.f32.mrf.mxu0
      %v1322 = vadd.f32 %v1257, %v1321
      %1323 = vmatmul.f32.gmra.mxu0 %v979
      %v1324 = vpop.f32.mrf.mxu0
      %v1325 = vadd.f32 %v1260, %v1324
      %1326 = vmatmul.f32.gmra.mxu0 %v988
      %v1327 = vpop.f32.mrf.mxu0
      %v1328 = vadd.f32 %v1263, %v1327
      %1329 = vmatmul.f32.gmra.mxu0 %v997
      %v1330 = vpop.f32.mrf.mxu0
      %v1331 = vadd.f32 %v1266, %v1330
      %1332 = vmatmul.f32.gmra.mxu0 %v1006
      %v1333 = vpop.f32.mrf.mxu0
      %v1334 = vadd.f32 %v1269, %v1333
      %1335 = vmatmul.f32.gmra.mxu0 %v1015
      %v1336 = vpop.f32.mrf.mxu0
      %v1337 = vadd.f32 %v1272, %v1336
      %1338 = vmatmul.f32.gmra.mxu0 %v1024
      %v1339 = vpop.f32.mrf.mxu0
      %v1340 = vadd.f32 %v1275, %v1339
      %1341 = vmatmul.f32.gmra.mxu0 %v1033
      %v1342 = vpop.f32.mrf.mxu0
      %v1343 = vadd.f32 %v1278, %v1342
      %1344 = vmatmul.f32.gmra.mxu0 %v1042
      %v1345 = vpop.f32.mrf.mxu0
      %v1346 = vadd.f32 %v1281, %v1345
      %1347 = vmatmul.f32.gmra.mxu0 %v1051
      %v1348 = vpop.f32.mrf.mxu0
      %v1349 = vadd.f32 %v1284, %v1348
      %1350 = vmatmul.f32.gmra.mxu0 %v1060
      %v1351 = vpop.f32.mrf.mxu0
      %v1352 = vadd.f32 %v1287, %v1351
      %1353 = vmatmul.f32.gmra.mxu0 %v1069
      %v1354 = vpop.f32.mrf.mxu0
      %v1355 = vadd.f32 %v1290, %v1354
      %1356 = vmatmul.f32.gmra.mxu0 %v1078
      %v1357 = vpop.f32.mrf.mxu0
      %v1358 = vadd.f32 %v1293, %v1357
      %1359 = vdwg.mxu0
      %1360 = vmatpush.msra.mxu0 %v1133
      %1361 = vmatpush.msra.mxu0 %v1132
      %1362 = vmatpush.msra.mxu0 %v1131
      %1363 = vmatpush.msra.mxu0 %v1130
      %1364 = vmatpush.msra.mxu0 %v1129
      %1365 = vmatpush.msra.mxu0 %v1128
      %1366 = vmatpush.msra.mxu0 %v1127
      %1367 = vmatpush.msra.mxu0 %v1126
      %1368 = vmatpush.msra.mxu0 %v1125
      %1369 = vmatpush.msra.mxu0 %v1124
      %1370 = vmatpush.msra.mxu0 %v1123
      %1371 = vmatpush.msra.mxu0 %v1122
      %1372 = vmatpush.msra.mxu0 %v1121
      %1373 = vmatpush.msra.mxu0 %v1120
      %1374 = vmatpush.msra.mxu0 %v1119
      %1375 = vmatpush.msra.mxu0 %v1118
      %1376 = vmatmul.f32.gmra.mxu0 %v944
      %v1377 = vpop.f32.mrf.mxu0
      %v1378 = vadd.f32 %v1313, %v1377
      %1379 = vmatmul.f32.gmra.mxu0 %v953
      %v1380 = vpop.f32.mrf.mxu0
      %v1381 = vadd.f32 %v1316, %v1380
      %1382 = vmatmul.f32.gmra.mxu0 %v962
      %v1383 = vpop.f32.mrf.mxu0
      %v1384 = vadd.f32 %v1319, %v1383
      %1385 = vmatmul.f32.gmra.mxu0 %v971
      %v1386 = vpop.f32.mrf.mxu0
      %v1387 = vadd.f32 %v1322, %v1386
      %1388 = vmatmul.f32.gmra.mxu0 %v980
      %v1389 = vpop.f32.mrf.mxu0
      %v1390 = vadd.f32 %v1325, %v1389
      %1391 = vmatmul.f32.gmra.mxu0 %v989
      %v1392 = vpop.f32.mrf.mxu0
      %v1393 = vadd.f32 %v1328, %v1392
      %1394 = vmatmul.f32.gmra.mxu0 %v998
      %v1395 = vpop.f32.mrf.mxu0
      %v1396 = vadd.f32 %v1331, %v1395
      %1397 = vmatmul.f32.gmra.mxu0 %v1007
      %v1398 = vpop.f32.mrf.mxu0
      %v1399 = vadd.f32 %v1334, %v1398
      %1400 = vmatmul.f32.gmra.mxu0 %v1016
      %v1401 = vpop.f32.mrf.mxu0
      %v1402 = vadd.f32 %v1337, %v1401
      %1403 = vmatmul.f32.gmra.mxu0 %v1025
      %v1404 = vpop.f32.mrf.mxu0
      %v1405 = vadd.f32 %v1340, %v1404
      %1406 = vmatmul.f32.gmra.mxu0 %v1034
      %v1407 = vpop.f32.mrf.mxu0
      %v1408 = vadd.f32 %v1343, %v1407
      %1409 = vmatmul.f32.gmra.mxu0 %v1043
      %v1410 = vpop.f32.mrf.mxu0
      %v1411 = vadd.f32 %v1346, %v1410
      %1412 = vmatmul.f32.gmra.mxu0 %v1052
      %v1413 = vpop.f32.mrf.mxu0
      %v1414 = vadd.f32 %v1349, %v1413
      %1415 = vmatmul.f32.gmra.mxu0 %v1061
      %v1416 = vpop.f32.mrf.mxu0
      %v1417 = vadd.f32 %v1352, %v1416
      %1418 = vmatmul.f32.gmra.mxu0 %v1070
      %v1419 = vpop.f32.mrf.mxu0
      %v1420 = vadd.f32 %v1355, %v1419
      %1421 = vmatmul.f32.gmra.mxu0 %v1079
      %v1422 = vpop.f32.mrf.mxu0
      %v1423 = vadd.f32 %v1358, %v1422
      %1424 = vdwg.mxu0
      %1425 = vmatpush.msra.mxu0 %v1149
      %1426 = vmatpush.msra.mxu0 %v1148
      %1427 = vmatpush.msra.mxu0 %v1147
      %1428 = vmatpush.msra.mxu0 %v1146
      %1429 = vmatpush.msra.mxu0 %v1145
      %1430 = vmatpush.msra.mxu0 %v1144
      %1431 = vmatpush.msra.mxu0 %v1143
      %1432 = vmatpush.msra.mxu0 %v1142
      %1433 = vmatpush.msra.mxu0 %v1141
      %1434 = vmatpush.msra.mxu0 %v1140
      %1435 = vmatpush.msra.mxu0 %v1139
      %1436 = vmatpush.msra.mxu0 %v1138
      %1437 = vmatpush.msra.mxu0 %v1137
      %1438 = vmatpush.msra.mxu0 %v1136
      %1439 = vmatpush.msra.mxu0 %v1135
      %1440 = vmatpush.msra.mxu0 %v1134
      %1441 = vmatmul.f32.gmra.mxu0 %v945
      %v1442 = vpop.f32.mrf.mxu0
      %v1443 = vadd.f32 %v1378, %v1442
      %1444 = vmatmul.f32.gmra.mxu0 %v954
      %v1445 = vpop.f32.mrf.mxu0
      %v1446 = vadd.f32 %v1381, %v1445
      %1447 = vmatmul.f32.gmra.mxu0 %v963
      %v1448 = vpop.f32.mrf.mxu0
      %v1449 = vadd.f32 %v1384, %v1448
      %1450 = vmatmul.f32.gmra.mxu0 %v972
      %v1451 = vpop.f32.mrf.mxu0
      %v1452 = vadd.f32 %v1387, %v1451
      %1453 = vmatmul.f32.gmra.mxu0 %v981
      %v1454 = vpop.f32.mrf.mxu0
      %v1455 = vadd.f32 %v1390, %v1454
      %1456 = vmatmul.f32.gmra.mxu0 %v990
      %v1457 = vpop.f32.mrf.mxu0
      %v1458 = vadd.f32 %v1393, %v1457
      %1459 = vmatmul.f32.gmra.mxu0 %v999
      %v1460 = vpop.f32.mrf.mxu0
      %v1461 = vadd.f32 %v1396, %v1460
      %1462 = vmatmul.f32.gmra.mxu0 %v1008
      %v1463 = vpop.f32.mrf.mxu0
      %v1464 = vadd.f32 %v1399, %v1463
      %1465 = vmatmul.f32.gmra.mxu0 %v1017
      %v1466 = vpop.f32.mrf.mxu0
      %v1467 = vadd.f32 %v1402, %v1466
      %1468 = vmatmul.f32.gmra.mxu0 %v1026
      %v1469 = vpop.f32.mrf.mxu0
      %v1470 = vadd.f32 %v1405, %v1469
      %1471 = vmatmul.f32.gmra.mxu0 %v1035
      %v1472 = vpop.f32.mrf.mxu0
      %v1473 = vadd.f32 %v1408, %v1472
      %1474 = vmatmul.f32.gmra.mxu0 %v1044
      %v1475 = vpop.f32.mrf.mxu0
      %v1476 = vadd.f32 %v1411, %v1475
      %1477 = vmatmul.f32.gmra.mxu0 %v1053
      %v1478 = vpop.f32.mrf.mxu0
      %v1479 = vadd.f32 %v1414, %v1478
      %1480 = vmatmul.f32.gmra.mxu0 %v1062
      %v1481 = vpop.f32.mrf.mxu0
      %v1482 = vadd.f32 %v1417, %v1481
      %1483 = vmatmul.f32.gmra.mxu0 %v1071
      %v1484 = vpop.f32.mrf.mxu0
      %v1485 = vadd.f32 %v1420, %v1484
      %1486 = vmatmul.f32.gmra.mxu0 %v1080
      %v1487 = vpop.f32.mrf.mxu0
      %v1488 = vadd.f32 %v1423, %v1487
      %1489 = vdwg.mxu0
      %1490 = vmatpush.msra.mxu0 %v1165
      %1491 = vmatpush.msra.mxu0 %v1164
      %1492 = vmatpush.msra.mxu0 %v1163
      %1493 = vmatpush.msra.mxu0 %v1162
      %1494 = vmatpush.msra.mxu0 %v1161
      %1495 = vmatpush.msra.mxu0 %v1160
      %1496 = vmatpush.msra.mxu0 %v1159
      %1497 = vmatpush.msra.mxu0 %v1158
      %1498 = vmatpush.msra.mxu0 %v1157
      %1499 = vmatpush.msra.mxu0 %v1156
      %1500 = vmatpush.msra.mxu0 %v1155
      %1501 = vmatpush.msra.mxu0 %v1154
      %1502 = vmatpush.msra.mxu0 %v1153
      %1503 = vmatpush.msra.mxu0 %v1152
      %1504 = vmatpush.msra.mxu0 %v1151
      %1505 = vmatpush.msra.mxu0 %v1150
      %1506 = vmatmul.f32.gmra.mxu0 %v946
      %v1507 = vpop.f32.mrf.mxu0
      %v1508 = vadd.f32 %v1443, %v1507
      %1509 = vmatmul.f32.gmra.mxu0 %v955
      %v1510 = vpop.f32.mrf.mxu0
      %v1511 = vadd.f32 %v1446, %v1510
      %1512 = vmatmul.f32.gmra.mxu0 %v964
      %v1513 = vpop.f32.mrf.mxu0
      %v1514 = vadd.f32 %v1449, %v1513
      %1515 = vmatmul.f32.gmra.mxu0 %v973
      %v1516 = vpop.f32.mrf.mxu0
      %v1517 = vadd.f32 %v1452, %v1516
      %1518 = vmatmul.f32.gmra.mxu0 %v982
      %v1519 = vpop.f32.mrf.mxu0
      %v1520 = vadd.f32 %v1455, %v1519
      %1521 = vmatmul.f32.gmra.mxu0 %v991
      %v1522 = vpop.f32.mrf.mxu0
      %v1523 = vadd.f32 %v1458, %v1522
      %1524 = vmatmul.f32.gmra.mxu0 %v1000
      %v1525 = vpop.f32.mrf.mxu0
      %v1526 = vadd.f32 %v1461, %v1525
      %1527 = vmatmul.f32.gmra.mxu0 %v1009
      %v1528 = vpop.f32.mrf.mxu0
      %v1529 = vadd.f32 %v1464, %v1528
      %1530 = vmatmul.f32.gmra.mxu0 %v1018
      %v1531 = vpop.f32.mrf.mxu0
      %v1532 = vadd.f32 %v1467, %v1531
      %1533 = vmatmul.f32.gmra.mxu0 %v1027
      %v1534 = vpop.f32.mrf.mxu0
      %v1535 = vadd.f32 %v1470, %v1534
      %1536 = vmatmul.f32.gmra.mxu0 %v1036
      %v1537 = vpop.f32.mrf.mxu0
      %v1538 = vadd.f32 %v1473, %v1537
      %1539 = vmatmul.f32.gmra.mxu0 %v1045
      %v1540 = vpop.f32.mrf.mxu0
      %v1541 = vadd.f32 %v1476, %v1540
      %1542 = vmatmul.f32.gmra.mxu0 %v1054
      %v1543 = vpop.f32.mrf.mxu0
      %v1544 = vadd.f32 %v1479, %v1543
      %1545 = vmatmul.f32.gmra.mxu0 %v1063
      %v1546 = vpop.f32.mrf.mxu0
      %v1547 = vadd.f32 %v1482, %v1546
      %1548 = vmatmul.f32.gmra.mxu0 %v1072
      %v1549 = vpop.f32.mrf.mxu0
      %v1550 = vadd.f32 %v1485, %v1549
      %1551 = vmatmul.f32.gmra.mxu0 %v1081
      %v1552 = vpop.f32.mrf.mxu0
      %v1553 = vadd.f32 %v1488, %v1552
      %1554 = vdwg.mxu0
      %1555 = vmatpush.msra.mxu0 %v1181
      %1556 = vmatpush.msra.mxu0 %v1180
      %1557 = vmatpush.msra.mxu0 %v1179
      %1558 = vmatpush.msra.mxu0 %v1178
      %1559 = vmatpush.msra.mxu0 %v1177
      %1560 = vmatpush.msra.mxu0 %v1176
      %1561 = vmatpush.msra.mxu0 %v1175
      %1562 = vmatpush.msra.mxu0 %v1174
      %1563 = vmatpush.msra.mxu0 %v1173
      %1564 = vmatpush.msra.mxu0 %v1172
      %1565 = vmatpush.msra.mxu0 %v1171
      %1566 = vmatpush.msra.mxu0 %v1170
      %1567 = vmatpush.msra.mxu0 %v1169
      %1568 = vmatpush.msra.mxu0 %v1168
      %1569 = vmatpush.msra.mxu0 %v1167
      %1570 = vmatpush.msra.mxu0 %v1166
      %1571 = vmatmul.f32.gmra.mxu0 %v947
      %v1572 = vpop.f32.mrf.mxu0
      %v1573 = vadd.f32 %v1508, %v1572
      %1574 = vmatmul.f32.gmra.mxu0 %v956
      %v1575 = vpop.f32.mrf.mxu0
      %v1576 = vadd.f32 %v1511, %v1575
      %1577 = vmatmul.f32.gmra.mxu0 %v965
      %v1578 = vpop.f32.mrf.mxu0
      %v1579 = vadd.f32 %v1514, %v1578
      %1580 = vmatmul.f32.gmra.mxu0 %v974
      %v1581 = vpop.f32.mrf.mxu0
      %v1582 = vadd.f32 %v1517, %v1581
      %1583 = vmatmul.f32.gmra.mxu0 %v983
      %v1584 = vpop.f32.mrf.mxu0
      %v1585 = vadd.f32 %v1520, %v1584
      %1586 = vmatmul.f32.gmra.mxu0 %v992
      %v1587 = vpop.f32.mrf.mxu0
      %v1588 = vadd.f32 %v1523, %v1587
      %1589 = vmatmul.f32.gmra.mxu0 %v1001
      %v1590 = vpop.f32.mrf.mxu0
      %v1591 = vadd.f32 %v1526, %v1590
      %1592 = vmatmul.f32.gmra.mxu0 %v1010
      %v1593 = vpop.f32.mrf.mxu0
      %v1594 = vadd.f32 %v1529, %v1593
      %1595 = vmatmul.f32.gmra.mxu0 %v1019
      %v1596 = vpop.f32.mrf.mxu0
      %v1597 = vadd.f32 %v1532, %v1596
      %1598 = vmatmul.f32.gmra.mxu0 %v1028
      %v1599 = vpop.f32.mrf.mxu0
      %v1600 = vadd.f32 %v1535, %v1599
      %1601 = vmatmul.f32.gmra.mxu0 %v1037
      %v1602 = vpop.f32.mrf.mxu0
      %v1603 = vadd.f32 %v1538, %v1602
      %1604 = vmatmul.f32.gmra.mxu0 %v1046
      %v1605 = vpop.f32.mrf.mxu0
      %v1606 = vadd.f32 %v1541, %v1605
      %1607 = vmatmul.f32.gmra.mxu0 %v1055
      %v1608 = vpop.f32.mrf.mxu0
      %v1609 = vadd.f32 %v1544, %v1608
      %1610 = vmatmul.f32.gmra.mxu0 %v1064
      %v1611 = vpop.f32.mrf.mxu0
      %v1612 = vadd.f32 %v1547, %v1611
      %1613 = vmatmul.f32.gmra.mxu0 %v1073
      %v1614 = vpop.f32.mrf.mxu0
      %v1615 = vadd.f32 %v1550, %v1614
      %1616 = vmatmul.f32.gmra.mxu0 %v1082
      %v1617 = vpop.f32.mrf.mxu0
      %v1618 = vadd.f32 %v1553, %v1617
      %1619 = vdwg.mxu0
      %1620 = vmatpush.msra.mxu0 %v1197
      %1621 = vmatpush.msra.mxu0 %v1196
      %1622 = vmatpush.msra.mxu0 %v1195
      %1623 = vmatpush.msra.mxu0 %v1194
      %1624 = vmatpush.msra.mxu0 %v1193
      %1625 = vmatpush.msra.mxu0 %v1192
      %1626 = vmatpush.msra.mxu0 %v1191
      %1627 = vmatpush.msra.mxu0 %v1190
      %1628 = vmatpush.msra.mxu0 %v1189
      %1629 = vmatpush.msra.mxu0 %v1188
      %1630 = vmatpush.msra.mxu0 %v1187
      %1631 = vmatpush.msra.mxu0 %v1186
      %1632 = vmatpush.msra.mxu0 %v1185
      %1633 = vmatpush.msra.mxu0 %v1184
      %1634 = vmatpush.msra.mxu0 %v1183
      %1635 = vmatpush.msra.mxu0 %v1182
      %1636 = vmatmul.f32.gmra.mxu0 %v948
      %v1637 = vpop.f32.mrf.mxu0
      %v1638 = vadd.f32 %v1573, %v1637
      %1639 = vmatmul.f32.gmra.mxu0 %v957
      %v1640 = vpop.f32.mrf.mxu0
      %v1641 = vadd.f32 %v1576, %v1640
      %1642 = vmatmul.f32.gmra.mxu0 %v966
      %v1643 = vpop.f32.mrf.mxu0
      %v1644 = vadd.f32 %v1579, %v1643
      %1645 = vmatmul.f32.gmra.mxu0 %v975
      %v1646 = vpop.f32.mrf.mxu0
      %v1647 = vadd.f32 %v1582, %v1646
      %1648 = vmatmul.f32.gmra.mxu0 %v984
      %v1649 = vpop.f32.mrf.mxu0
      %v1650 = vadd.f32 %v1585, %v1649
      %1651 = vmatmul.f32.gmra.mxu0 %v993
      %v1652 = vpop.f32.mrf.mxu0
      %v1653 = vadd.f32 %v1588, %v1652
      %1654 = vmatmul.f32.gmra.mxu0 %v1002
      %v1655 = vpop.f32.mrf.mxu0
      %v1656 = vadd.f32 %v1591, %v1655
      %1657 = vmatmul.f32.gmra.mxu0 %v1011
      %v1658 = vpop.f32.mrf.mxu0
      %v1659 = vadd.f32 %v1594, %v1658
      %1660 = vmatmul.f32.gmra.mxu0 %v1020
      %v1661 = vpop.f32.mrf.mxu0
      %v1662 = vadd.f32 %v1597, %v1661
      %1663 = vmatmul.f32.gmra.mxu0 %v1029
      %v1664 = vpop.f32.mrf.mxu0
      %v1665 = vadd.f32 %v1600, %v1664
      %1666 = vmatmul.f32.gmra.mxu0 %v1038
      %v1667 = vpop.f32.mrf.mxu0
      %v1668 = vadd.f32 %v1603, %v1667
      %1669 = vmatmul.f32.gmra.mxu0 %v1047
      %v1670 = vpop.f32.mrf.mxu0
      %v1671 = vadd.f32 %v1606, %v1670
      %1672 = vmatmul.f32.gmra.mxu0 %v1056
      %v1673 = vpop.f32.mrf.mxu0
      %v1674 = vadd.f32 %v1609, %v1673
      %1675 = vmatmul.f32.gmra.mxu0 %v1065
      %v1676 = vpop.f32.mrf.mxu0
      %v1677 = vadd.f32 %v1612, %v1676
      %1678 = vmatmul.f32.gmra.mxu0 %v1074
      %v1679 = vpop.f32.mrf.mxu0
      %v1680 = vadd.f32 %v1615, %v1679
      %1681 = vmatmul.f32.gmra.mxu0 %v1083
      %v1682 = vpop.f32.mrf.mxu0
      %v1683 = vadd.f32 %v1618, %v1682
      %1684 = vdwg.mxu0
      %1685 = vmatpush.msra.mxu0 %v1213
      %1686 = vmatpush.msra.mxu0 %v1212
      %1687 = vmatpush.msra.mxu0 %v1211
      %1688 = vmatpush.msra.mxu0 %v1210
      %1689 = vmatpush.msra.mxu0 %v1209
      %1690 = vmatpush.msra.mxu0 %v1208
      %1691 = vmatpush.msra.mxu0 %v1207
      %1692 = vmatpush.msra.mxu0 %v1206
      %1693 = vmatpush.msra.mxu0 %v1205
      %1694 = vmatpush.msra.mxu0 %v1204
      %1695 = vmatpush.msra.mxu0 %v1203
      %1696 = vmatpush.msra.mxu0 %v1202
      %1697 = vmatpush.msra.mxu0 %v1201
      %1698 = vmatpush.msra.mxu0 %v1200
      %1699 = vmatpush.msra.mxu0 %v1199
      %1700 = vmatpush.msra.mxu0 %v1198
      %1701 = vmatmul.f32.gmra.mxu0 %v949
      %v1702 = vpop.f32.mrf.mxu0
      %v1703 = vadd.f32 %v1638, %v1702
      %1704 = vmatmul.f32.gmra.mxu0 %v958
      %v1705 = vpop.f32.mrf.mxu0
      %v1706 = vadd.f32 %v1641, %v1705
      %1707 = vmatmul.f32.gmra.mxu0 %v967
      %v1708 = vpop.f32.mrf.mxu0
      %v1709 = vadd.f32 %v1644, %v1708
      %1710 = vmatmul.f32.gmra.mxu0 %v976
      %v1711 = vpop.f32.mrf.mxu0
      %v1712 = vadd.f32 %v1647, %v1711
      %1713 = vmatmul.f32.gmra.mxu0 %v985
      %v1714 = vpop.f32.mrf.mxu0
      %v1715 = vadd.f32 %v1650, %v1714
      %1716 = vmatmul.f32.gmra.mxu0 %v994
      %v1717 = vpop.f32.mrf.mxu0
      %v1718 = vadd.f32 %v1653, %v1717
      %1719 = vmatmul.f32.gmra.mxu0 %v1003
      %v1720 = vpop.f32.mrf.mxu0
      %v1721 = vadd.f32 %v1656, %v1720
      %1722 = vmatmul.f32.gmra.mxu0 %v1012
      %v1723 = vpop.f32.mrf.mxu0
      %v1724 = vadd.f32 %v1659, %v1723
      %1725 = vmatmul.f32.gmra.mxu0 %v1021
      %v1726 = vpop.f32.mrf.mxu0
      %v1727 = vadd.f32 %v1662, %v1726
      %1728 = vmatmul.f32.gmra.mxu0 %v1030
      %v1729 = vpop.f32.mrf.mxu0
      %v1730 = vadd.f32 %v1665, %v1729
      %1731 = vmatmul.f32.gmra.mxu0 %v1039
      %v1732 = vpop.f32.mrf.mxu0
      %v1733 = vadd.f32 %v1668, %v1732
      %1734 = vmatmul.f32.gmra.mxu0 %v1048
      %v1735 = vpop.f32.mrf.mxu0
      %v1736 = vadd.f32 %v1671, %v1735
      %1737 = vmatmul.f32.gmra.mxu0 %v1057
      %v1738 = vpop.f32.mrf.mxu0
      %v1739 = vadd.f32 %v1674, %v1738
      %1740 = vmatmul.f32.gmra.mxu0 %v1066
      %v1741 = vpop.f32.mrf.mxu0
      %v1742 = vadd.f32 %v1677, %v1741
      %1743 = vmatmul.f32.gmra.mxu0 %v1075
      %v1744 = vpop.f32.mrf.mxu0
      %v1745 = vadd.f32 %v1680, %v1744
      %1746 = vmatmul.f32.gmra.mxu0 %v1084
      %v1747 = vpop.f32.mrf.mxu0
      %v1748 = vadd.f32 %v1683, %v1747
      %1749 = vdwg.mxu0
      %1750 = vmatpush.msra.mxu0 %v1229
      %1751 = vmatpush.msra.mxu0 %v1228
      %1752 = vmatpush.msra.mxu0 %v1227
      %1753 = vmatpush.msra.mxu0 %v1226
      %1754 = vmatpush.msra.mxu0 %v1225
      %1755 = vmatpush.msra.mxu0 %v1224
      %1756 = vmatpush.msra.mxu0 %v1223
      %1757 = vmatpush.msra.mxu0 %v1222
      %1758 = vmatpush.msra.mxu0 %v1221
      %1759 = vmatpush.msra.mxu0 %v1220
      %1760 = vmatpush.msra.mxu0 %v1219
      %1761 = vmatpush.msra.mxu0 %v1218
      %1762 = vmatpush.msra.mxu0 %v1217
      %1763 = vmatpush.msra.mxu0 %v1216
      %1764 = vmatpush.msra.mxu0 %v1215
      %1765 = vmatpush.msra.mxu0 %v1214
      %1766 = vmatmul.f32.gmra.mxu0 %v950
      %v1767 = vpop.f32.mrf.mxu0
      %v1768 = vadd.f32 %v1703, %v1767
      %1769 = vmatmul.f32.gmra.mxu0 %v959
      %v1770 = vpop.f32.mrf.mxu0
      %v1771 = vadd.f32 %v1706, %v1770
      %1772 = vmatmul.f32.gmra.mxu0 %v968
      %v1773 = vpop.f32.mrf.mxu0
      %v1774 = vadd.f32 %v1709, %v1773
      %1775 = vmatmul.f32.gmra.mxu0 %v977
      %v1776 = vpop.f32.mrf.mxu0
      %v1777 = vadd.f32 %v1712, %v1776
      %1778 = vmatmul.f32.gmra.mxu0 %v986
      %v1779 = vpop.f32.mrf.mxu0
      %v1780 = vadd.f32 %v1715, %v1779
      %1781 = vmatmul.f32.gmra.mxu0 %v995
      %v1782 = vpop.f32.mrf.mxu0
      %v1783 = vadd.f32 %v1718, %v1782
      %1784 = vmatmul.f32.gmra.mxu0 %v1004
      %v1785 = vpop.f32.mrf.mxu0
      %v1786 = vadd.f32 %v1721, %v1785
      %1787 = vmatmul.f32.gmra.mxu0 %v1013
      %v1788 = vpop.f32.mrf.mxu0
      %v1789 = vadd.f32 %v1724, %v1788
      %1790 = vmatmul.f32.gmra.mxu0 %v1022
      %v1791 = vpop.f32.mrf.mxu0
      %v1792 = vadd.f32 %v1727, %v1791
      %1793 = vmatmul.f32.gmra.mxu0 %v1031
      %v1794 = vpop.f32.mrf.mxu0
      %v1795 = vadd.f32 %v1730, %v1794
      %1796 = vmatmul.f32.gmra.mxu0 %v1040
      %v1797 = vpop.f32.mrf.mxu0
      %v1798 = vadd.f32 %v1733, %v1797
      %1799 = vmatmul.f32.gmra.mxu0 %v1049
      %v1800 = vpop.f32.mrf.mxu0
      %v1801 = vadd.f32 %v1736, %v1800
      %1802 = vmatmul.f32.gmra.mxu0 %v1058
      %v1803 = vpop.f32.mrf.mxu0
      %v1804 = vadd.f32 %v1739, %v1803
      %1805 = vmatmul.f32.gmra.mxu0 %v1067
      %v1806 = vpop.f32.mrf.mxu0
      %v1807 = vadd.f32 %v1742, %v1806
      %1808 = vmatmul.f32.gmra.mxu0 %v1076
      %v1809 = vpop.f32.mrf.mxu0
      %v1810 = vadd.f32 %v1745, %v1809
      %1811 = vmatmul.f32.gmra.mxu0 %v1085
      %v1812 = vpop.f32.mrf.mxu0
      %v1813 = vadd.f32 %v1748, %v1812
      %1814 = vdwg.mxu0
      %1815 = vst [vmem:[%s495] sm:$0xff] %v1768
      %1816 = vst [vmem:[%s495 + $0x8] sm:$0xff] %v1771
      %1817 = vst [vmem:[%s495 + $0x10] sm:$0xff] %v1774
      %1818 = vst [vmem:[%s495 + $0x18] sm:$0xff] %v1777
      %1819 = vst [vmem:[%s495 + $0x20] sm:$0xff] %v1780
      %1820 = vst [vmem:[%s495 + $0x28] sm:$0xff] %v1783
      %1821 = vst [vmem:[%s495 + $0x30] sm:$0xff] %v1786
      %1822 = vst [vmem:[%s495 + $0x38] sm:$0xff] %v1789
      %1823 = vst [vmem:[%s495 + $0x40] sm:$0xff] %v1792
      %1824 = vst [vmem:[%s495 + $0x48] sm:$0xff] %v1795
      %1825 = vst [vmem:[%s495 + $0x50] sm:$0xff] %v1798
      %1826 = vst [vmem:[%s495 + $0x58] sm:$0xff] %v1801
      %1827 = vst [vmem:[%s495 + $0x60] sm:$0xff] %v1804
      %1828 = vst [vmem:[%s495 + $0x68] sm:$0xff] %v1807
      %1829 = vst [vmem:[%s495 + $0x70] sm:$0xff] %v1810
      %1830 = vst [vmem:[%s495 + $0x78] sm:$0xff] %v1813
      %v1831 = vadd.f32 %v1768, %v1771
      %v1832 = vadd.f32 %v1831, %v1774
      %v1833 = vadd.f32 %v1832, %v1777
      %v1834 = vadd.f32 %v1833, %v1780
      %v1835 = vadd.f32 %v1834, %v1783
      %v1836 = vadd.f32 %v1835, %v1786
      %v1837 = vadd.f32 %v1836, %v1789
      %v1838 = vadd.f32 %v1837, %v1792
      %v1839 = vadd.f32 %v1838, %v1795
      %v1840 = vadd.f32 %v1839, %v1798
      %v1841 = vadd.f32 %v1840, %v1801
      %v1842 = vadd.f32 %v1841, %v1804
      %v1843 = vadd.f32 %v1842, %v1807
      %v1844 = vadd.f32 %v1843, %v1810
      %v1845 = vadd.f32 %v1844, %v1813
      %v1846 = vrot.slane %v1845, 4
      %v1847 = vadd.f32 %v1845, %v1846
      %v1848 = vrot.slane %v1847, 2
      %v1849 = vadd.f32 %v1847, %v1848
      %v1850 = vrot.slane %v1849, 1
      %v1851 = vadd.f32 %v1849, %v1850
      %1852 = vst [vmem:[%s503] sm:$0x1] %v1851
      %v1853 = vmul.f32 %v1768, %v1768
      %v1854 = vmul.f32 %v1771, %v1771
      %v1855 = vmul.f32 %v1774, %v1774
      %v1856 = vmul.f32 %v1777, %v1777
      %v1857 = vmul.f32 %v1780, %v1780
      %v1858 = vmul.f32 %v1783, %v1783
      %v1859 = vmul.f32 %v1786, %v1786
      %v1860 = vmul.f32 %v1789, %v1789
      %v1861 = vmul.f32 %v1792, %v1792
      %v1862 = vmul.f32 %v1795, %v1795
      %v1863 = vmul.f32 %v1798, %v1798
      %v1864 = vmul.f32 %v1801, %v1801
      %v1865 = vmul.f32 %v1804, %v1804
      %v1866 = vmul.f32 %v1807, %v1807
      %v1867 = vmul.f32 %v1810, %v1810
      %v1868 = vmul.f32 %v1813, %v1813
      %v1869 = vadd.f32 %v1853, %v1854
      %v1870 = vadd.f32 %v1869, %v1855
      %v1871 = vadd.f32 %v1870, %v1856
      %v1872 = vadd.f32 %v1871, %v1857
      %v1873 = vadd.f32 %v1872, %v1858
      %v1874 = vadd.f32 %v1873, %v1859
      %v1875 = vadd.f32 %v1874, %v1860
      %v1876 = vadd.f32 %v1875, %v1861
      %v1877 = vadd.f32 %v1876, %v1862
      %v1878 = vadd.f32 %v1877, %v1863
      %v1879 = vadd.f32 %v1878, %v1864
      %v1880 = vadd.f32 %v1879, %v1865
      %v1881 = vadd.f32 %v1880, %v1866
      %v1882 = vadd.f32 %v1881, %v1867
      %v1883 = vadd.f32 %v1882, %v1868
      %v1884 = vrot.slane %v1883, 4
      %v1885 = vadd.f32 %v1883, %v1884
      %v1886 = vrot.slane %v1885, 2
      %v1887 = vadd.f32 %v1885, %v1886
      %v1888 = vrot.slane %v1887, 1
      %v1889 = vadd.f32 %v1887, %v1888
      %1890 = vst [vmem:[%s510] sm:$0x1] %v1889
      %s1891 = smul.u32 8, %s25
      %p1892 = scmp.lt.s32.totalorder %s24, 1
      %s1893 = scalar_select %p1892, %s24, 1
      %p1894 = scmp.lt.s32.totalorder %s1891, 15
      %s1895 = scalar_select %p1894, %s1891, 15
      %s1896 = smul.addr %s1895, 2
      %s1897 = smul.addr %s1893, 32
      %s1898 = sadd.s32 %s1896, %s1897
      %s1899 = smul.addr %s1898, 8
      %s1900 = scalar_lea.vmem %s6, %s1899
      %p1901 = scmp.lt.s32.totalorder %s24, 1
      %s1902 = scalar_select %p1901, %s24, 1
      %p1903 = scmp.lt.s32.totalorder %s25, 1
      %s1904 = scalar_select %p1903, %s25, 1
      %s1905 = smul.addr %s1902, 2
      %s1906 = sadd.s32 %s1904, %s1905
      %s1907 = scalar_lea.vmem %s7, %s1906
      %p1908 = scmp.lt.s32.totalorder %s24, 1
      %s1909 = scalar_select %p1908, %s24, 1
      %p1910 = scmp.lt.s32.totalorder %s25, 1
      %s1911 = scalar_select %p1910, %s25, 1
      %s1912 = smul.addr %s1909, 2
      %s1913 = sadd.s32 %s1911, %s1912
      %s1914 = scalar_lea.vmem %s8, %s1913
      // Predicated region
      $region45: #{double_conv.4} parent=43 // pred_check
        %p1915 = pneg %p215
      $region46: #{double_conv.4} parent=43 // pred_check_branch
        %1917 = sbr.rel (%p1915) target = $region48
      $region47: #{double_conv.4} parent=43 // pred_region
        %s1918 = smul.u32 8, %s25
      $region48: #{double_conv.4} parent=43 // pred_fallthru
        _
      // Predicated region
      $region49: #{double_conv.4} parent=43 // pred_check
        %p1919 = pneg %p243
      $region50: #{double_conv.4} parent=43 // pred_check_branch
        %1921 = sbr.rel (%p1919) target = $region52
      $region51: #{double_conv.4} parent=43 // pred_region
        _
      $region52: #{double_conv.4} parent=43 // pred_fallthru
        _
      // Predicated region
      $region53: #{double_conv.4} parent=43 // pred_check
        %p1922 = pneg %p271
      $region54: #{double_conv.4} parent=43 // pred_check_branch
        %1924 = sbr.rel (%p1922) target = $region56
      $region55: #{double_conv.4} parent=43 // pred_region
        _
      $region56: #{double_conv.4} parent=43 // pred_fallthru
        _
    $region44: #{double_conv.4} parent=5 // pred_fallthru
      _
    %p1925 = scmp.le.s32.totalorder 2, %s15
    // Predicated region
    $region57: #{double_conv.4} parent=5 // pred_check
      %p1926 = pneg %p1925
    $region58: #{double_conv.4} parent=5 // pred_check_branch
      %1928 = sbr.rel (%p1926) target = $region60
    $region59: #{double_conv.4} parent=5 // pred_region
      %s1929 = ssub.s32 %s15, 2
      // Predicated region
      $region61: #{double_conv.4} parent=59 // pred_check
        %p1930 = pneg %p221
      $region62: #{double_conv.4} parent=59 // pred_check_branch
        %1932 = sbr.rel (%p1930) target = $region64
      $region63: #{double_conv.4} parent=59 // pred_region
        %s1933 = smul.u32 8, %s27
        %p1934 = scmp.lt.s32.totalorder %s26, 1
        %s1935 = scalar_select %p1934, %s26, 1
        %p1936 = scmp.lt.s32.totalorder %s1933, 15
        %s1937 = scalar_select %p1936, %s1933, 15
        %s1938 = smul.addr %s1937, 2
        %s1939 = smul.addr %s1935, 32
        %s1940 = sadd.s32 %s1938, %s1939
        %s1941 = smul.addr %s1940, 8
        %s1942 = scalar_lea.vmem %s6, %s1941
      $region64: #{double_conv.4} parent=59 // pred_fallthru
        _
      // Predicated region
      $region65: #{double_conv.4} parent=59 // pred_check
        %p1943 = pneg %p249
      $region66: #{double_conv.4} parent=59 // pred_check_branch
        %1945 = sbr.rel (%p1943) target = $region68
      $region67: #{double_conv.4} parent=59 // pred_region
        %p1946 = scmp.lt.s32.totalorder %s26, 1
        %s1947 = scalar_select %p1946, %s26, 1
        %p1948 = scmp.lt.s32.totalorder %s27, 1
        %s1949 = scalar_select %p1948, %s27, 1
        %s1950 = smul.addr %s1947, 2
        %s1951 = sadd.s32 %s1949, %s1950
        %s1952 = scalar_lea.vmem %s7, %s1951
      $region68: #{double_conv.4} parent=59 // pred_fallthru
        _
      // Predicated region
      $region69: #{double_conv.4} parent=59 // pred_check
        %p1953 = pneg %p277
      $region70: #{double_conv.4} parent=59 // pred_check_branch
        %1955 = sbr.rel (%p1953) target = $region72
      $region71: #{double_conv.4} parent=59 // pred_region
        %p1956 = scmp.lt.s32.totalorder %s26, 1
        %s1957 = scalar_select %p1956, %s26, 1
        %p1958 = scmp.lt.s32.totalorder %s27, 1
        %s1959 = scalar_select %p1958, %s27, 1
        %s1960 = smul.addr %s1957, 2
        %s1961 = sadd.s32 %s1959, %s1960
        %s1962 = scalar_lea.vmem %s8, %s1961
      $region72: #{double_conv.4} parent=59 // pred_fallthru
        _
    $region60: #{double_conv.4} parent=5 // pred_fallthru
      _
  $region6: #{double_conv.4} parent=0 // loop_footer
    %s19 = sadd.s32 1, %s15
  $region7: #{double_conv.4} parent=0 // loop_footer_branch
    %14 = sbr.rel target = $region3
  $region8: #{double_conv.4} parent=0 // loop_exit
    _

</llo_original>
